<compile_context>
chip_gen: v7x
topology: tpu7x:2x2x1
jax: 0.10.0
libtpu: 0.0.40
codegen_flags: <defaults>
</compile_context>

<pallas_src>
import jax
import jax.numpy as jnp
from jax.experimental import pallas as pl
from jax.experimental.pallas import tpu as pltpu

EMBED = 300          # nn.LSTM(300, ...)
HIDDEN = 100         # nn.LSTM(..., 100, ...)
EMBED_PAD = 384      # 3 * 128 lanes
HIDDEN_PAD = 128     # each gate gets one 128-lane slot
NGATES = 4
GATE_COLS = NGATES * HIDDEN_PAD        # 512 per direction
PACKED_COLS = 2 * GATE_COLS            # 1024 = [fwd gates | bwd gates]


# --------------------------------------------------------------------------
# Kernel 1: hoisted input projection  P[t] = x[t] @ W_ih_packed + b_packed
# --------------------------------------------------------------------------
def _input_proj_kernel(x_ref, w_ref, b_ref, p_ref):
    Tc, Bp, Ep = x_ref.shape
    G = w_ref.shape[1]
    x2 = x_ref[...].reshape(Tc * Bp, Ep)                         # bf16
    acc = jnp.dot(x2, w_ref[...], preferred_element_type=jnp.float32)
    p_ref[...] = (acc + b_ref[...]).reshape(Tc, Bp, G)


# --------------------------------------------------------------------------
# Kernel 2: fused fwd/bwd recurrence + ReLU/max-pool + FC head.
# Streams time chunks: pf_ref walks chunks forward, pb_ref walks them reversed.
# h/c/running-max live in VMEM scratch across grid steps.
# --------------------------------------------------------------------------
def _bilstm_recurrence_kernel(pf_ref, pb_ref, whh_f_ref, whh_b_ref,
                              fcw_f_ref, fcw_b_ref, fcb_ref,
                              out_ref,
                              hf_ref, cf_ref, hb_ref, cb_ref, mf_ref, mb_ref):
    t = pl.program_id(0)
    Tc = pf_ref.shape[0]
    Hp = whh_f_ref.shape[0]

    @pl.when(t == 0)
    def _init():
        hf_ref[...] = jnp.zeros_like(hf_ref)
        cf_ref[...] = jnp.zeros_like(cf_ref)
        hb_ref[...] = jnp.zeros_like(hb_ref)
        cb_ref[...] = jnp.zeros_like(cb_ref)
        mf_ref[...] = jnp.zeros_like(mf_ref)
        mb_ref[...] = jnp.zeros_like(mb_ref)

    whh_f = whh_f_ref[...]            # bf16, resident (constant block index)
    whh_b = whh_b_ref[...]

    def cell(pre, h, c, whh):
        # pre already holds x@W_ih + b_ih + b_hh for this timestep/direction.
        # bf16 x bf16 -> f32 MXU dot keeps the serial chain on the fast path.
        gates = pre + jnp.dot(h.astype(jnp.bfloat16), whh,
                              preferred_element_type=jnp.float32)
        i = jax.nn.sigmoid(gates[:, 0 * Hp:1 * Hp])    # 128-aligned slices
        f = jax.nn.sigmoid(gates[:, 1 * Hp:2 * Hp])
        g = jnp.tanh(gates[:, 2 * Hp:3 * Hp])
        o = jax.nn.sigmoid(gates[:, 3 * Hp:4 * Hp])
        c_new = f * c + i * g
        h_new = o * jnp.tanh(c_new)
        return h_new, c_new

    def step(s, carry):
        h_f, c_f, h_b, c_b, m_f, m_b = carry
        h_f, c_f = cell(pf_ref[s], h_f, c_f, whh_f)              # time t*Tc+s
        h_b, c_b = cell(pb_ref[Tc - 1 - s], h_b, c_b, whh_b)     # reversed
        # ReLU + max-pool over time: m starts at 0, so max(m, h)==max(m, relu(h)).
        m_f = jnp.maximum(m_f, h_f)
        m_b = jnp.maximum(m_b, h_b)
        return h_f, c_f, h_b, c_b, m_f, m_b

    carry = (hf_ref[...], cf_ref[...], hb_ref[...], cb_ref[...],
             mf_ref[...], mb_ref[...])
    h_f, c_f, h_b, c_b, m_f, m_b = jax.lax.fori_loop(
        0, Tc, step, carry, unroll=True)

    hf_ref[...] = h_f
    cf_ref[...] = c_f
    hb_ref[...] = h_b
    cb_ref[...] = c_b
    mf_ref[...] = m_f
    mb_ref[...] = m_b

    @pl.when(t == pl.num_programs(0) - 1)
    def _finalize():
        # fc1(concat(m_f, m_b)) without the concat (avoids a lane relayout);
        # N=1 output so VPU multiply + lane reduce instead of an MXU dot.
        y = (jnp.sum(m_f * fcw_f_ref[...], axis=1, keepdims=True)
             + jnp.sum(m_b * fcw_b_ref[...], axis=1, keepdims=True)
             + fcb_ref[...])
        out_ref[...] = y


# --------------------------------------------------------------------------
# Pallas wrapper
# --------------------------------------------------------------------------
def _bilstm_pallas(x_tbe, wih_packed, bias_packed,
                   whh_f, whh_b, fcw_f, fcw_b, fcb, Tc):
    T, Bp, Ep = x_tbe.shape
    n_chunks = T // Tc
    G = wih_packed.shape[1]            # 1024
    Hp = whh_f.shape[0]                # 128
    GH = NGATES * Hp                   # 512

    # ---- input projection (pipelined over time chunks, megacore-parallel) ----
    proj_vmem = int(2 * (Tc * Bp * Ep * 2 + Tc * Bp * G * 4)
                    + Ep * G * 2 + G * 4 + (4 << 20))
    p = pl.pallas_call(
        _input_proj_kernel,
        out_shape=jax.ShapeDtypeStruct((T, Bp, G), jnp.float32),
        grid_spec=pltpu.PrefetchScalarGridSpec(
            num_scalar_prefetch=0,
            grid=(n_chunks,),
            in_specs=[
                pl.BlockSpec((Tc, Bp, Ep), lambda t: (t, 0, 0)),
                pl.BlockSpec((Ep, G), lambda t: (0, 0)),
                pl.BlockSpec((1, G), lambda t: (0, 0)),
            ],
            out_specs=pl.BlockSpec((Tc, Bp, G), lambda t: (t, 0, 0)),
        ),
        compiler_params=pltpu.CompilerParams(
            dimension_semantics=("parallel",),
            vmem_limit_bytes=proj_vmem,
        ),
        cost_estimate=pl.CostEstimate(
            flops=int(2 * T * Bp * Ep * G),
            transcendentals=0,
            bytes_accessed=int(T * Bp * Ep * 2 + Ep * G * 2 + T * Bp * G * 4),
        ),
    )(x_tbe, wih_packed, bias_packed)

    # ---- fused recurrence + pooling + FC (serial over time chunks) ----
    rec_vmem = int(2 * (2 * Tc * Bp * GH * 4)      # fwd+bwd streams, dbl-buffered
                   + 2 * (2 * Hp * GH * 2)          # bf16 hidden weights
                   + 6 * Bp * Hp * 4                # h/c/max scratch
                   + (4 << 20))
    y = pl.pallas_call(
        _bilstm_recurrence_kernel,
        out_shape=jax.ShapeDtypeStruct((Bp, 1), jnp.float32),
        grid_spec=pltpu.PrefetchScalarGridSpec(
            num_scalar_prefetch=0,
            grid=(n_chunks,),
            in_specs=[
                # forward gate projections, chunks in order, cols [0:512)
                pl.BlockSpec((Tc, Bp, GH), lambda t: (t, 0, 0)),
                # backward gate projections, chunks reversed, cols [512:1024)
                pl.BlockSpec((Tc, Bp, GH),
                             lambda t: (n_chunks - 1 - t, 0, 1)),
                pl.BlockSpec((Hp, GH), lambda t: (0, 0)),
                pl.BlockSpec((Hp, GH), lambda t: (0, 0)),
                pl.BlockSpec((1, Hp), lambda t: (0, 0)),
                pl.BlockSpec((1, Hp), lambda t: (0, 0)),
                pl.BlockSpec((1, 1), lambda t: (0, 0)),
            ],
            out_specs=pl.BlockSpec((Bp, 1), lambda t: (0, 0)),
            scratch_shapes=[pltpu.VMEM((Bp, Hp), jnp.float32)] * 6,
        ),
        compiler_params=pltpu.CompilerParams(
            dimension_semantics=("arbitrary",),
            vmem_limit_bytes=rec_vmem,
        ),
        cost_estimate=pl.CostEstimate(
            flops=int(2 * 2 * T * Bp * Hp * GH),
            transcendentals=int(2 * 5 * T * Bp * Hp),
            bytes_accessed=int(2 * T * Bp * GH * 4 + 2 * Hp * GH * 2 + Bp * 4),
        ),
    )(p, p, whh_f, whh_b, fcw_f, fcw_b, fcb)
    return y


# --------------------------------------------------------------------------
# Parameter construction (PyTorch layout) and packing to the kernel layout.
# --------------------------------------------------------------------------
def init_params(key, vocab_size):
    ks = jax.random.split(key, 11)
    s_lstm = 1.0 / jnp.sqrt(HIDDEN)
    s_fc = 1.0 / jnp.sqrt(2 * HIDDEN)

    def u(k, shape, s):
        return jax.random.uniform(k, shape, jnp.float32, -s, s)

    return {
        "embedding": jax.random.normal(ks[0], (vocab_size, EMBED), jnp.float32),
        # PyTorch layout: weight_ih (4H, E), weight_hh (4H, H); gate order i,f,g,o.
        "w_ih_f": u(ks[1], (4 * HIDDEN, EMBED), s_lstm),
        "w_hh_f": u(ks[2], (4 * HIDDEN, HIDDEN), s_lstm),
        "b_ih_f": u(ks[3], (4 * HIDDEN,), s_lstm),
        "b_hh_f": u(ks[4], (4 * HIDDEN,), s_lstm),
        "w_ih_b": u(ks[5], (4 * HIDDEN, EMBED), s_lstm),
        "w_hh_b": u(ks[6], (4 * HIDDEN, HIDDEN), s_lstm),
        "b_ih_b": u(ks[7], (4 * HIDDEN,), s_lstm),
        "b_hh_b": u(ks[8], (4 * HIDDEN,), s_lstm),
        "fc_w": u(ks[9], (1, 2 * HIDDEN), s_fc),     # fc1.weight
        "fc_b": u(ks[10], (1,), s_fc),               # fc1.bias
    }


def _pad_gate_cols(w_t, H, Hp):
    # w_t: (K, 4H) with gate blocks i|f|g|o along columns; pad each gate to Hp
    # so every gate sits in its own 128-lane-aligned slot. Pad weights are 0,
    # so padded hidden units stay exactly 0 through the whole recurrence.
    K = w_t.shape[0]
    w4 = jnp.pad(w_t.reshape(K, NGATES, H), ((0, 0), (0, 0), (0, Hp - H)))
    return w4.reshape(K, NGATES * Hp)


def pack_params(raw):
    H, E, Hp, Ep = HIDDEN, EMBED, HIDDEN_PAD, EMBED_PAD

    def direction(wih, whh, bih, bhh):
        wih_t = _pad_gate_cols(wih.T, H, Hp)                  # (E, 4Hp)
        wih_t = jnp.pad(wih_t, ((0, Ep - E), (0, 0)))         # (Ep, 4Hp)
        whh_t = _pad_gate_cols(whh.T, H, Hp)                  # (H, 4Hp)
        whh_t = jnp.pad(whh_t, ((0, Hp - H), (0, 0)))         # (Hp, 4Hp)
        b = _pad_gate_cols((bih + bhh)[None, :], H, Hp)[0]    # (4Hp,)  b_ih+b_hh
        return wih_t, whh_t, b

    wih_f, whh_f, b_f = direction(raw["w_ih_f"], raw["w_hh_f"],
                                  raw["b_ih_f"], raw["b_hh_f"])
    wih_b, whh_b, b_b = direction(raw["w_ih_b"], raw["w_hh_b"],
                                  raw["b_ih_b"], raw["b_hh_b"])

    return {
        "embedding": jnp.pad(raw["embedding"],
                             ((0, 0), (0, Ep - E))).astype(jnp.bfloat16),
        "w_ih_packed": jnp.concatenate([wih_f, wih_b],
                                       axis=1).astype(jnp.bfloat16),
        "bias_packed": jnp.concatenate([b_f, b_b])[None, :].astype(jnp.float32),
        # bf16 hidden-to-hidden weights: native single-pass MXU matmul on the
        # serial chain (accumulation stays f32 inside the kernel).
        "w_hh_f": whh_f.astype(jnp.bfloat16),
        "w_hh_b": whh_b.astype(jnp.bfloat16),
        "fc_w_f": jnp.pad(raw["fc_w"][:, :H], ((0, 0), (0, Hp - H))),
        "fc_w_b": jnp.pad(raw["fc_w"][:, H:], ((0, 0), (0, Hp - H))),
        "fc_b": raw["fc_b"].reshape(1, 1),
    }


def _pick_time_chunk(T, Bp, budget_bytes=4 << 20, max_unroll=32):
    # Padding T is unsafe (padded steps would feed the max-pool and the
    # backward recurrence), so pick the largest chunk size that divides T
    # exactly, fits the streamed-projection VMEM budget and keeps the
    # fully-unrolled inner loop a reasonable size.
    per_step = 4 * Bp * GATE_COLS * 4      # fwd+bwd streams, double-buffered, f32
    cap = max(1, min(T, max_unroll, budget_bytes // per_step))
    for tc in range(cap, 0, -1):
        if T % tc == 0:
            return tc
    return 1


def lstm_forward(params, batch_ids, training=False):
    # Embedding gather is glue; projection/recurrence/pool/FC run in Pallas.
    B, T = batch_ids.shape
    emb = jnp.take(params["embedding"], batch_ids, axis=0)     # (B, T, Ep) bf16
    x = jnp.transpose(emb, (1, 0, 2))                          # (T, B, Ep)
    Bp = ((B + 7) // 8) * 8
    if Bp != B:
        x = jnp.pad(x, ((0, 0), (0, Bp - B), (0, 0)))
    x = x.astype(jnp.bfloat16)
    Tc = _pick_time_chunk(T, Bp)

    y = _bilstm_pallas(x, params["w_ih_packed"], params["bias_packed"],
                       params["w_hh_f"], params["w_hh_b"],
                       params["fc_w_f"], params["fc_w_b"], params["fc_b"], Tc)

    # F.dropout(z, 0.5, training=False) is the identity at inference.
    # TODO(synk): training-mode dropout and the training loop are not implemented.
    return y[:B, 0]                                            # (B,)


if __name__ == "__main__":
    key = jax.random.PRNGKey(0)
    k_param, k_ids = jax.random.split(key)

    vocab_size = 50
    batch, seq = 2, 8

    raw = init_params(k_param, vocab_size)
    params = pack_params(raw)
    batch_ids = jax.random.randint(k_ids, (batch, seq), 0, vocab_size, jnp.int32)

    fwd = jax.jit(lstm_forward)
    logits = jax.block_until_ready(fwd(params, batch_ids))
    assert logits.shape == (batch,)
    print("KERNEL_OK")
</pallas_src>

<mosaic_0001>
module attributes {stable_mosaic.version = 11 : i64} {
  func.func @_input_proj_kernel(%arg0: i32, %arg1: memref<8x8x384xbf16, #tpu.memory_space<vmem>>, %arg2: memref<384x1024xbf16, #tpu.memory_space<vmem>>, %arg3: memref<1x1024xf32, #tpu.memory_space<vmem>>, %arg4: memref<8x8x1024xf32, #tpu.memory_space<vmem>>) attributes {dimension_semantics = [#tpu.dimension_semantics<parallel>], iteration_bounds = array<i64: 1>, scalar_prefetch = 0 : i64, scratch_operands = 0 : i64, tpu.core_type = #tpu.core_type<tc>, window_params = [{transform_indices = @transform_0, window_bounds = array<i64: 8, 8, 384>}, {pipeline_mode = #tpu.pipeline_mode<synchronous>, transform_indices = @transform_1, window_bounds = array<i64: 384, 1024>}, {pipeline_mode = #tpu.pipeline_mode<synchronous>, transform_indices = @transform_2, window_bounds = array<i64: 1, 1024>}, {transform_indices = @transform_3, window_bounds = array<i64: 8, 8, 1024>}]} {
    %c0 = arith.constant 0 : index
    %c0_0 = arith.constant 0 : index
    %c0_1 = arith.constant 0 : index
    %0 = vector.load %arg1[%c0, %c0_0, %c0_1] : memref<8x8x384xbf16, #tpu.memory_space<vmem>>, vector<8x8x384xbf16>
    %1 = vector.shape_cast %0 : vector<8x8x384xbf16> to vector<64x384xbf16>
    %c0_2 = arith.constant 0 : index
    %c0_3 = arith.constant 0 : index
    %2 = vector.load %arg2[%c0_2, %c0_3] : memref<384x1024xbf16, #tpu.memory_space<vmem>>, vector<384x1024xbf16>
    %cst = arith.constant dense<0.000000e+00> : vector<64x1024xf32>
    %3 = tpu.matmul %1, %2, %cst {dimension_numbers = #tpu.dot_dimension_numbers<[1], [0], [0], [1], [0, 0, 1, 1], [], []>} : vector<64x384xbf16>, vector<384x1024xbf16>, vector<64x1024xf32> -> vector<64x1024xf32>
    %c0_4 = arith.constant 0 : index
    %c0_5 = arith.constant 0 : index
    %4 = vector.load %arg3[%c0_4, %c0_5] : memref<1x1024xf32, #tpu.memory_space<vmem>>, vector<1x1024xf32>
    %5 = vector.broadcast %4 : vector<1x1024xf32> to vector<64x1024xf32>
    %6 = arith.addf %3, %5 : vector<64x1024xf32>
    %7 = vector.shape_cast %6 : vector<64x1024xf32> to vector<8x8x1024xf32>
    %c0_6 = arith.constant 0 : index
    %c0_7 = arith.constant 0 : index
    %c0_8 = arith.constant 0 : index
    %8 = vector.load %arg4[%c0_6, %c0_7, %c0_8] : memref<8x8x1024xf32, #tpu.memory_space<vmem>>, vector<8x8x1024xf32>
    tpu.vector_store %arg4[%c0_6, %c0_7, %c0_8], %7 {strides = array<i32>} : memref<8x8x1024xf32, #tpu.memory_space<vmem>>, vector<8x8x1024xf32>,
    return
  }
  func.func @transform_0(%arg0: i32) -> (i32, i32, i32) {
    %c0_i32 = arith.constant 0 : i32
    %c0_i32_0 = arith.constant 0 : i32
    %c0_i32_1 = arith.constant 0 : i32
    return %arg0, %c0_i32, %c0_i32_0 : i32, i32, i32
  }
  func.func @transform_1(%arg0: i32) -> (i32, i32) {
    %c0_i32 = arith.constant 0 : i32
    %c0_i32_0 = arith.constant 0 : i32
    %c0_i32_1 = arith.constant 0 : i32
    return %c0_i32, %c0_i32_0 : i32, i32
  }
  func.func @transform_2(%arg0: i32) -> (i32, i32) {
    %c0_i32 = arith.constant 0 : i32
    %c0_i32_0 = arith.constant 0 : i32
    %c0_i32_1 = arith.constant 0 : i32
    return %c0_i32, %c0_i32_0 : i32, i32
  }
  func.func @transform_3(%arg0: i32) -> (i32, i32, i32) {
    %c0_i32 = arith.constant 0 : i32
    %c0_i32_0 = arith.constant 0 : i32
    %c0_i32_1 = arith.constant 0 : i32
    return %arg0, %c0_i32, %c0_i32_0 : i32, i32, i32
  }
}

module attributes {stable_mosaic.version = 11 : i64} {
  func.func @_bilstm_recurrence_kernel(%arg0: i32, %arg1: memref<8x8x512xf32, #tpu.memory_space<vmem>>, %arg2: memref<8x8x512xf32, #tpu.memory_space<vmem>>, %arg3: memref<128x512xbf16, #tpu.memory_space<vmem>>, %arg4: memref<128x512xbf16, #tpu.memory_space<vmem>>, %arg5: memref<1x128xf32, #tpu.memory_space<vmem>>, %arg6: memref<1x128xf32, #tpu.memory_space<vmem>>, %arg7: memref<1x1xf32, #tpu.memory_space<vmem>>, %arg8: memref<8x1xf32, #tpu.memory_space<vmem>>, %arg9: memref<8x128xf32, #tpu.memory_space<vmem>>, %arg10: memref<8x128xf32, #tpu.memory_space<vmem>>, %arg11: memref<8x128xf32, #tpu.memory_space<vmem>>, %arg12: memref<8x128xf32, #tpu.memory_space<vmem>>, %arg13: memref<8x128xf32, #tpu.memory_space<vmem>>, %arg14: memref<8x128xf32, #tpu.memory_space<vmem>>) attributes {dimension_semantics = [#tpu.dimension_semantics<arbitrary>], iteration_bounds = array<i64: 1>, scalar_prefetch = 0 : i64, scratch_operands = 6 : i64, tpu.core_type = #tpu.core_type<tc>, window_params = [{transform_indices = @transform_0, window_bounds = array<i64: 8, 8, 512>}, {transform_indices = @transform_1, window_bounds = array<i64: 8, 8, 512>}, {pipeline_mode = #tpu.pipeline_mode<synchronous>, transform_indices = @transform_2, window_bounds = array<i64: 128, 512>}, {pipeline_mode = #tpu.pipeline_mode<synchronous>, transform_indices = @transform_3, window_bounds = array<i64: 128, 512>}, {pipeline_mode = #tpu.pipeline_mode<synchronous>, transform_indices = @transform_4, window_bounds = array<i64: 1, 128>}, {pipeline_mode = #tpu.pipeline_mode<synchronous>, transform_indices = @transform_5, window_bounds = array<i64: 1, 128>}, {pipeline_mode = #tpu.pipeline_mode<synchronous>, transform_indices = @transform_6, window_bounds = array<i64: 1, 1>}, {pipeline_mode = #tpu.pipeline_mode<synchronous>, transform_indices = @transform_7, window_bounds = array<i64: 8, 1>}]} {
    %c0_i32 = arith.constant 0 : i32
    %0 = arith.cmpi eq, %arg0, %c0_i32 : i32
    %1 = arith.extui %0 : i1 to i32
    %c0_i32_0 = arith.constant 0 : i32
    %2 = arith.cmpi ne, %1, %c0_i32_0 : i32
    scf.if %2 {
      %cst_134 = arith.constant 0.000000e+00 : f32
      %540 = vector.broadcast %cst_134 : f32 to vector<8x128xf32>
      %c0_135 = arith.constant 0 : index
      %c0_136 = arith.constant 0 : index
      %541 = vector.load %arg9[%c0_135, %c0_136] : memref<8x128xf32, #tpu.memory_space<vmem>>, vector<8x128xf32>
      tpu.vector_store %arg9[%c0_135, %c0_136], %540 {strides = array<i32>} : memref<8x128xf32, #tpu.memory_space<vmem>>, vector<8x128xf32>,
      %cst_137 = arith.constant 0.000000e+00 : f32
      %542 = vector.broadcast %cst_137 : f32 to vector<8x128xf32>
      %c0_138 = arith.constant 0 : index
      %c0_139 = arith.constant 0 : index
      %543 = vector.load %arg10[%c0_138, %c0_139] : memref<8x128xf32, #tpu.memory_space<vmem>>, vector<8x128xf32>
      tpu.vector_store %arg10[%c0_138, %c0_139], %542 {strides = array<i32>} : memref<8x128xf32, #tpu.memory_space<vmem>>, vector<8x128xf32>,
      %cst_140 = arith.constant 0.000000e+00 : f32
      %544 = vector.broadcast %cst_140 : f32 to vector<8x128xf32>
      %c0_141 = arith.constant 0 : index
      %c0_142 = arith.constant 0 : index
      %545 = vector.load %arg11[%c0_141, %c0_142] : memref<8x128xf32, #tpu.memory_space<vmem>>, vector<8x128xf32>
      tpu.vector_store %arg11[%c0_141, %c0_142], %544 {strides = array<i32>} : memref<8x128xf32, #tpu.memory_space<vmem>>, vector<8x128xf32>,
      %cst_143 = arith.constant 0.000000e+00 : f32
      %546 = vector.broadcast %cst_143 : f32 to vector<8x128xf32>
      %c0_144 = arith.constant 0 : index
      %c0_145 = arith.constant 0 : index
      %547 = vector.load %arg12[%c0_144, %c0_145] : memref<8x128xf32, #tpu.memory_space<vmem>>, vector<8x128xf32>
      tpu.vector_store %arg12[%c0_144, %c0_145], %546 {strides = array<i32>} : memref<8x128xf32, #tpu.memory_space<vmem>>, vector<8x128xf32>,
      %cst_146 = arith.constant 0.000000e+00 : f32
      %548 = vector.broadcast %cst_146 : f32 to vector<8x128xf32>
      %c0_147 = arith.constant 0 : index
      %c0_148 = arith.constant 0 : index
      %549 = vector.load %arg13[%c0_147, %c0_148] : memref<8x128xf32, #tpu.memory_space<vmem>>, vector<8x128xf32>
      tpu.vector_store %arg13[%c0_147, %c0_148], %548 {strides = array<i32>} : memref<8x128xf32, #tpu.memory_space<vmem>>, vector<8x128xf32>,
      %cst_149 = arith.constant 0.000000e+00 : f32
      %550 = vector.broadcast %cst_149 : f32 to vector<8x128xf32>
      %c0_150 = arith.constant 0 : index
      %c0_151 = arith.constant 0 : index
      %551 = vector.load %arg14[%c0_150, %c0_151] : memref<8x128xf32, #tpu.memory_space<vmem>>, vector<8x128xf32>
      tpu.vector_store %arg14[%c0_150, %c0_151], %550 {strides = array<i32>} : memref<8x128xf32, #tpu.memory_space<vmem>>, vector<8x128xf32>,
    } else {
    }
    %c0 = arith.constant 0 : index
    %c0_1 = arith.constant 0 : index
    %3 = vector.load %arg3[%c0, %c0_1] : memref<128x512xbf16, #tpu.memory_space<vmem>>, vector<128x512xbf16>
    %c0_2 = arith.constant 0 : index
    %c0_3 = arith.constant 0 : index
    %4 = vector.load %arg4[%c0_2, %c0_3] : memref<128x512xbf16, #tpu.memory_space<vmem>>, vector<128x512xbf16>
    %c0_4 = arith.constant 0 : index
    %c0_5 = arith.constant 0 : index
    %5 = vector.load %arg9[%c0_4, %c0_5] : memref<8x128xf32, #tpu.memory_space<vmem>>, vector<8x128xf32>
    %c0_6 = arith.constant 0 : index
    %c0_7 = arith.constant 0 : index
    %6 = vector.load %arg10[%c0_6, %c0_7] : memref<8x128xf32, #tpu.memory_space<vmem>>, vector<8x128xf32>
    %c0_8 = arith.constant 0 : index
    %c0_9 = arith.constant 0 : index
    %7 = vector.load %arg11[%c0_8, %c0_9] : memref<8x128xf32, #tpu.memory_space<vmem>>, vector<8x128xf32>
    %c0_10 = arith.constant 0 : index
    %c0_11 = arith.constant 0 : index
    %8 = vector.load %arg12[%c0_10, %c0_11] : memref<8x128xf32, #tpu.memory_space<vmem>>, vector<8x128xf32>
    %c0_12 = arith.constant 0 : index
    %c0_13 = arith.constant 0 : index
    %9 = vector.load %arg13[%c0_12, %c0_13] : memref<8x128xf32, #tpu.memory_space<vmem>>, vector<8x128xf32>
    %c0_14 = arith.constant 0 : index
    %c0_15 = arith.constant 0 : index
    %10 = vector.load %arg14[%c0_14, %c0_15] : memref<8x128xf32, #tpu.memory_space<vmem>>, vector<8x128xf32>
    %c0_i32_16 = arith.constant 0 : i32
    %11 = arith.index_cast %c0_i32_16 : i32 to index
    %c0_17 = arith.constant 0 : index
    %c0_18 = arith.constant 0 : index
    %12 = vector.load %arg1[%11, %c0_17, %c0_18] : memref<8x8x512xf32, #tpu.memory_space<vmem>>, vector<1x8x512xf32>
    %13 = vector.shape_cast %12 : vector<1x8x512xf32> to vector<8x512xf32>
    %14 = arith.truncf %5 : vector<8x128xf32> to vector<8x128xbf16>
    %cst = arith.constant dense<0.000000e+00> : vector<8x512xf32>
    %15 = tpu.matmul %14, %3, %cst {dimension_numbers = #tpu.dot_dimension_numbers<[1], [0], [0], [1], [0, 0, 1, 1], [], []>} : vector<8x128xbf16>, vector<128x512xbf16>, vector<8x512xf32> -> vector<8x512xf32>
    %16 = arith.addf %13, %15 : vector<8x512xf32>
    %17 = vector.extract_strided_slice %16 {offsets = [0, 0], sizes = [8, 128], strides = [1, 1]} : vector<8x512xf32> to vector<8x128xf32>
    %18 = arith.negf %17 : vector<8x128xf32>
    %19 = math.exp %18 : vector<8x128xf32>
    %cst_19 = arith.constant 1.000000e+00 : f32
    %20 = vector.broadcast %cst_19 : f32 to vector<8x128xf32>
    %21 = arith.addf %20, %19 : vector<8x128xf32>
    %22 = arith.divf %20, %21 : vector<8x128xf32>
    %23 = vector.extract_strided_slice %16 {offsets = [0, 128], sizes = [8, 128], strides = [1, 1]} : vector<8x512xf32> to vector<8x128xf32>
    %24 = arith.negf %23 : vector<8x128xf32>
    %25 = math.exp %24 : vector<8x128xf32>
    %cst_20 = arith.constant 1.000000e+00 : f32
    %26 = vector.broadcast %cst_20 : f32 to vector<8x128xf32>
    %27 = arith.addf %26, %25 : vector<8x128xf32>
    %28 = arith.divf %26, %27 : vector<8x128xf32>
    %29 = vector.extract_strided_slice %16 {offsets = [0, 256], sizes = [8, 128], strides = [1, 1]} : vector<8x512xf32> to vector<8x128xf32>
    %30 = math.tanh %29 : vector<8x128xf32>
    %31 = vector.extract_strided_slice %16 {offsets = [0, 384], sizes = [8, 128], strides = [1, 1]} : vector<8x512xf32> to vector<8x128xf32>
    %32 = arith.negf %31 : vector<8x128xf32>
    %33 = math.exp %32 : vector<8x128xf32>
    %cst_21 = arith.constant 1.000000e+00 : f32
    %34 = vector.broadcast %cst_21 : f32 to vector<8x128xf32>
    %35 = arith.addf %34, %33 : vector<8x128xf32>
    %36 = arith.divf %34, %35 : vector<8x128xf32>
    %37 = arith.mulf %28, %6 : vector<8x128xf32>
    %38 = arith.mulf %22, %30 : vector<8x128xf32>
    %39 = arith.addf %37, %38 : vector<8x128xf32>
    %40 = math.tanh %39 : vector<8x128xf32>
    %41 = arith.mulf %36, %40 : vector<8x128xf32>
    %c7_i32 = arith.constant 7 : i32
    %42 = arith.subi %c7_i32, %c0_i32_16 : i32
    %43 = arith.index_cast %42 : i32 to index
    %c0_22 = arith.constant 0 : index
    %c0_23 = arith.constant 0 : index
    %44 = vector.load %arg2[%43, %c0_22, %c0_23] : memref<8x8x512xf32, #tpu.memory_space<vmem>>, vector<1x8x512xf32>
    %45 = vector.shape_cast %44 : vector<1x8x512xf32> to vector<8x512xf32>
    %46 = arith.truncf %7 : vector<8x128xf32> to vector<8x128xbf16>
    %cst_24 = arith.constant dense<0.000000e+00> : vector<8x512xf32>
    %47 = tpu.matmul %46, %4, %cst_24 {dimension_numbers = #tpu.dot_dimension_numbers<[1], [0], [0], [1], [0, 0, 1, 1], [], []>} : vector<8x128xbf16>, vector<128x512xbf16>, vector<8x512xf32> -> vector<8x512xf32>
    %48 = arith.addf %45, %47 : vector<8x512xf32>
    %49 = vector.extract_strided_slice %48 {offsets = [0, 0], sizes = [8, 128], strides = [1, 1]} : vector<8x512xf32> to vector<8x128xf32>
    %50 = arith.negf %49 : vector<8x128xf32>
    %51 = math.exp %50 : vector<8x128xf32>
    %cst_25 = arith.constant 1.000000e+00 : f32
    %52 = vector.broadcast %cst_25 : f32 to vector<8x128xf32>
    %53 = arith.addf %52, %51 : vector<8x128xf32>
    %54 = arith.divf %52, %53 : vector<8x128xf32>
    %55 = vector.extract_strided_slice %48 {offsets = [0, 128], sizes = [8, 128], strides = [1, 1]} : vector<8x512xf32> to vector<8x128xf32>
    %56 = arith.negf %55 : vector<8x128xf32>
    %57 = math.exp %56 : vector<8x128xf32>
    %cst_26 = arith.constant 1.000000e+00 : f32
    %58 = vector.broadcast %cst_26 : f32 to vector<8x128xf32>
    %59 = arith.addf %58, %57 : vector<8x128xf32>
    %60 = arith.divf %58, %59 : vector<8x128xf32>
    %61 = vector.extract_strided_slice %48 {offsets = [0, 256], sizes = [8, 128], strides = [1, 1]} : vector<8x512xf32> to vector<8x128xf32>
    %62 = math.tanh %61 : vector<8x128xf32>
    %63 = vector.extract_strided_slice %48 {offsets = [0, 384], sizes = [8, 128], strides = [1, 1]} : vector<8x512xf32> to vector<8x128xf32>
    %64 = arith.negf %63 : vector<8x128xf32>
    %65 = math.exp %64 : vector<8x128xf32>
    %cst_27 = arith.constant 1.000000e+00 : f32
    %66 = vector.broadcast %cst_27 : f32 to vector<8x128xf32>
    %67 = arith.addf %66, %65 : vector<8x128xf32>
    %68 = arith.divf %66, %67 : vector<8x128xf32>
    %69 = arith.mulf %60, %8 : vector<8x128xf32>
    %70 = arith.mulf %54, %62 : vector<8x128xf32>
    %71 = arith.addf %69, %70 : vector<8x128xf32>
    %72 = math.tanh %71 : vector<8x128xf32>
    %73 = arith.mulf %68, %72 : vector<8x128xf32>
    %74 = arith.maximumf %9, %41 : vector<8x128xf32>
    %75 = arith.maximumf %10, %73 : vector<8x128xf32>
    %c1_i32 = arith.constant 1 : i32
    %76 = arith.index_cast %c1_i32 : i32 to index
    %c0_28 = arith.constant 0 : index
    %c0_29 = arith.constant 0 : index
    %77 = vector.load %arg1[%76, %c0_28, %c0_29] : memref<8x8x512xf32, #tpu.memory_space<vmem>>, vector<1x8x512xf32>
    %78 = vector.shape_cast %77 : vector<1x8x512xf32> to vector<8x512xf32>
    %79 = arith.truncf %41 : vector<8x128xf32> to vector<8x128xbf16>
    %cst_30 = arith.constant dense<0.000000e+00> : vector<8x512xf32>
    %80 = tpu.matmul %79, %3, %cst_30 {dimension_numbers = #tpu.dot_dimension_numbers<[1], [0], [0], [1], [0, 0, 1, 1], [], []>} : vector<8x128xbf16>, vector<128x512xbf16>, vector<8x512xf32> -> vector<8x512xf32>
    %81 = arith.addf %78, %80 : vector<8x512xf32>
    %82 = vector.extract_strided_slice %81 {offsets = [0, 0], sizes = [8, 128], strides = [1, 1]} : vector<8x512xf32> to vector<8x128xf32>
    %83 = arith.negf %82 : vector<8x128xf32>
    %84 = math.exp %83 : vector<8x128xf32>
    %cst_31 = arith.constant 1.000000e+00 : f32
    %85 = vector.broadcast %cst_31 : f32 to vector<8x128xf32>
    %86 = arith.addf %85, %84 : vector<8x128xf32>
    %87 = arith.divf %85, %86 : vector<8x128xf32>
    %88 = vector.extract_strided_slice %81 {offsets = [0, 128], sizes = [8, 128], strides = [1, 1]} : vector<8x512xf32> to vector<8x128xf32>
    %89 = arith.negf %88 : vector<8x128xf32>
    %90 = math.exp %89 : vector<8x128xf32>
    %cst_32 = arith.constant 1.000000e+00 : f32
    %91 = vector.broadcast %cst_32 : f32 to vector<8x128xf32>
    %92 = arith.addf %91, %90 : vector<8x128xf32>
    %93 = arith.divf %91, %92 : vector<8x128xf32>
    %94 = vector.extract_strided_slice %81 {offsets = [0, 256], sizes = [8, 128], strides = [1, 1]} : vector<8x512xf32> to vector<8x128xf32>
    %95 = math.tanh %94 : vector<8x128xf32>
    %96 = vector.extract_strided_slice %81 {offsets = [0, 384], sizes = [8, 128], strides = [1, 1]} : vector<8x512xf32> to vector<8x128xf32>
    %97 = arith.negf %96 : vector<8x128xf32>
    %98 = math.exp %97 : vector<8x128xf32>
    %cst_33 = arith.constant 1.000000e+00 : f32
    %99 = vector.broadcast %cst_33 : f32 to vector<8x128xf32>
    %100 = arith.addf %99, %98 : vector<8x128xf32>
    %101 = arith.divf %99, %100 : vector<8x128xf32>
    %102 = arith.mulf %93, %39 : vector<8x128xf32>
    %103 = arith.mulf %87, %95 : vector<8x128xf32>
    %104 = arith.addf %102, %103 : vector<8x128xf32>
    %105 = math.tanh %104 : vector<8x128xf32>
    %106 = arith.mulf %101, %105 : vector<8x128xf32>
    %c7_i32_34 = arith.constant 7 : i32
    %107 = arith.subi %c7_i32_34, %c1_i32 : i32
    %108 = arith.index_cast %107 : i32 to index
    %c0_35 = arith.constant 0 : index
    %c0_36 = arith.constant 0 : index
    %109 = vector.load %arg2[%108, %c0_35, %c0_36] : memref<8x8x512xf32, #tpu.memory_space<vmem>>, vector<1x8x512xf32>
    %110 = vector.shape_cast %109 : vector<1x8x512xf32> to vector<8x512xf32>
    %111 = arith.truncf %73 : vector<8x128xf32> to vector<8x128xbf16>
    %cst_37 = arith.constant dense<0.000000e+00> : vector<8x512xf32>
    %112 = tpu.matmul %111, %4, %cst_37 {dimension_numbers = #tpu.dot_dimension_numbers<[1], [0], [0], [1], [0, 0, 1, 1], [], []>} : vector<8x128xbf16>, vector<128x512xbf16>, vector<8x512xf32> -> vector<8x512xf32>
    %113 = arith.addf %110, %112 : vector<8x512xf32>
    %114 = vector.extract_strided_slice %113 {offsets = [0, 0], sizes = [8, 128], strides = [1, 1]} : vector<8x512xf32> to vector<8x128xf32>
    %115 = arith.negf %114 : vector<8x128xf32>
    %116 = math.exp %115 : vector<8x128xf32>
    %cst_38 = arith.constant 1.000000e+00 : f32
    %117 = vector.broadcast %cst_38 : f32 to vector<8x128xf32>
    %118 = arith.addf %117, %116 : vector<8x128xf32>
    %119 = arith.divf %117, %118 : vector<8x128xf32>
    %120 = vector.extract_strided_slice %113 {offsets = [0, 128], sizes = [8, 128], strides = [1, 1]} : vector<8x512xf32> to vector<8x128xf32>
    %121 = arith.negf %120 : vector<8x128xf32>
    %122 = math.exp %121 : vector<8x128xf32>
    %cst_39 = arith.constant 1.000000e+00 : f32
    %123 = vector.broadcast %cst_39 : f32 to vector<8x128xf32>
    %124 = arith.addf %123, %122 : vector<8x128xf32>
    %125 = arith.divf %123, %124 : vector<8x128xf32>
    %126 = vector.extract_strided_slice %113 {offsets = [0, 256], sizes = [8, 128], strides = [1, 1]} : vector<8x512xf32> to vector<8x128xf32>
    %127 = math.tanh %126 : vector<8x128xf32>
    %128 = vector.extract_strided_slice %113 {offsets = [0, 384], sizes = [8, 128], strides = [1, 1]} : vector<8x512xf32> to vector<8x128xf32>
    %129 = arith.negf %128 : vector<8x128xf32>
    %130 = math.exp %129 : vector<8x128xf32>
    %cst_40 = arith.constant 1.000000e+00 : f32
    %131 = vector.broadcast %cst_40 : f32 to vector<8x128xf32>
    %132 = arith.addf %131, %130 : vector<8x128xf32>
    %133 = arith.divf %131, %132 : vector<8x128xf32>
    %134 = arith.mulf %125, %71 : vector<8x128xf32>
    %135 = arith.mulf %119, %127 : vector<8x128xf32>
    %136 = arith.addf %134, %135 : vector<8x128xf32>
    %137 = math.tanh %136 : vector<8x128xf32>
    %138 = arith.mulf %133, %137 : vector<8x128xf32>
    %139 = arith.maximumf %74, %106 : vector<8x128xf32>
    %140 = arith.maximumf %75, %138 : vector<8x128xf32>
    %c2_i32 = arith.constant 2 : i32
    %141 = arith.index_cast %c2_i32 : i32 to index
    %c0_41 = arith.constant 0 : index
    %c0_42 = arith.constant 0 : index
    %142 = vector.load %arg1[%141, %c0_41, %c0_42] : memref<8x8x512xf32, #tpu.memory_space<vmem>>, vector<1x8x512xf32>
    %143 = vector.shape_cast %142 : vector<1x8x512xf32> to vector<8x512xf32>
    %144 = arith.truncf %106 : vector<8x128xf32> to vector<8x128xbf16>
    %cst_43 = arith.constant dense<0.000000e+00> : vector<8x512xf32>
    %145 = tpu.matmul %144, %3, %cst_43 {dimension_numbers = #tpu.dot_dimension_numbers<[1], [0], [0], [1], [0, 0, 1, 1], [], []>} : vector<8x128xbf16>, vector<128x512xbf16>, vector<8x512xf32> -> vector<8x512xf32>
    %146 = arith.addf %143, %145 : vector<8x512xf32>
    %147 = vector.extract_strided_slice %146 {offsets = [0, 0], sizes = [8, 128], strides = [1, 1]} : vector<8x512xf32> to vector<8x128xf32>
    %148 = arith.negf %147 : vector<8x128xf32>
    %149 = math.exp %148 : vector<8x128xf32>
    %cst_44 = arith.constant 1.000000e+00 : f32
    %150 = vector.broadcast %cst_44 : f32 to vector<8x128xf32>
    %151 = arith.addf %150, %149 : vector<8x128xf32>
    %152 = arith.divf %150, %151 : vector<8x128xf32>
    %153 = vector.extract_strided_slice %146 {offsets = [0, 128], sizes = [8, 128], strides = [1, 1]} : vector<8x512xf32> to vector<8x128xf32>
    %154 = arith.negf %153 : vector<8x128xf32>
    %155 = math.exp %154 : vector<8x128xf32>
    %cst_45 = arith.constant 1.000000e+00 : f32
    %156 = vector.broadcast %cst_45 : f32 to vector<8x128xf32>
    %157 = arith.addf %156, %155 : vector<8x128xf32>
    %158 = arith.divf %156, %157 : vector<8x128xf32>
    %159 = vector.extract_strided_slice %146 {offsets = [0, 256], sizes = [8, 128], strides = [1, 1]} : vector<8x512xf32> to vector<8x128xf32>
    %160 = math.tanh %159 : vector<8x128xf32>
    %161 = vector.extract_strided_slice %146 {offsets = [0, 384], sizes = [8, 128], strides = [1, 1]} : vector<8x512xf32> to vector<8x128xf32>
    %162 = arith.negf %161 : vector<8x128xf32>
    %163 = math.exp %162 : vector<8x128xf32>
    %cst_46 = arith.constant 1.000000e+00 : f32
    %164 = vector.broadcast %cst_46 : f32 to vector<8x128xf32>
    %165 = arith.addf %164, %163 : vector<8x128xf32>
    %166 = arith.divf %164, %165 : vector<8x128xf32>
    %167 = arith.mulf %158, %104 : vector<8x128xf32>
    %168 = arith.mulf %152, %160 : vector<8x128xf32>
    %169 = arith.addf %167, %168 : vector<8x128xf32>
    %170 = math.tanh %169 : vector<8x128xf32>
    %171 = arith.mulf %166, %170 : vector<8x128xf32>
    %c7_i32_47 = arith.constant 7 : i32
    %172 = arith.subi %c7_i32_47, %c2_i32 : i32
    %173 = arith.index_cast %172 : i32 to index
    %c0_48 = arith.constant 0 : index
    %c0_49 = arith.constant 0 : index
    %174 = vector.load %arg2[%173, %c0_48, %c0_49] : memref<8x8x512xf32, #tpu.memory_space<vmem>>, vector<1x8x512xf32>
    %175 = vector.shape_cast %174 : vector<1x8x512xf32> to vector<8x512xf32>
    %176 = arith.truncf %138 : vector<8x128xf32> to vector<8x128xbf16>
    %cst_50 = arith.constant dense<0.000000e+00> : vector<8x512xf32>
    %177 = tpu.matmul %176, %4, %cst_50 {dimension_numbers = #tpu.dot_dimension_numbers<[1], [0], [0], [1], [0, 0, 1, 1], [], []>} : vector<8x128xbf16>, vector<128x512xbf16>, vector<8x512xf32> -> vector<8x512xf32>
    %178 = arith.addf %175, %177 : vector<8x512xf32>
    %179 = vector.extract_strided_slice %178 {offsets = [0, 0], sizes = [8, 128], strides = [1, 1]} : vector<8x512xf32> to vector<8x128xf32>
    %180 = arith.negf %179 : vector<8x128xf32>
    %181 = math.exp %180 : vector<8x128xf32>
    %cst_51 = arith.constant 1.000000e+00 : f32
    %182 = vector.broadcast %cst_51 : f32 to vector<8x128xf32>
    %183 = arith.addf %182, %181 : vector<8x128xf32>
    %184 = arith.divf %182, %183 : vector<8x128xf32>
    %185 = vector.extract_strided_slice %178 {offsets = [0, 128], sizes = [8, 128], strides = [1, 1]} : vector<8x512xf32> to vector<8x128xf32>
    %186 = arith.negf %185 : vector<8x128xf32>
    %187 = math.exp %186 : vector<8x128xf32>
    %cst_52 = arith.constant 1.000000e+00 : f32
    %188 = vector.broadcast %cst_52 : f32 to vector<8x128xf32>
    %189 = arith.addf %188, %187 : vector<8x128xf32>
    %190 = arith.divf %188, %189 : vector<8x128xf32>
    %191 = vector.extract_strided_slice %178 {offsets = [0, 256], sizes = [8, 128], strides = [1, 1]} : vector<8x512xf32> to vector<8x128xf32>
    %192 = math.tanh %191 : vector<8x128xf32>
    %193 = vector.extract_strided_slice %178 {offsets = [0, 384], sizes = [8, 128], strides = [1, 1]} : vector<8x512xf32> to vector<8x128xf32>
    %194 = arith.negf %193 : vector<8x128xf32>
    %195 = math.exp %194 : vector<8x128xf32>
    %cst_53 = arith.constant 1.000000e+00 : f32
    %196 = vector.broadcast %cst_53 : f32 to vector<8x128xf32>
    %197 = arith.addf %196, %195 : vector<8x128xf32>
    %198 = arith.divf %196, %197 : vector<8x128xf32>
    %199 = arith.mulf %190, %136 : vector<8x128xf32>
    %200 = arith.mulf %184, %192 : vector<8x128xf32>
    %201 = arith.addf %199, %200 : vector<8x128xf32>
    %202 = math.tanh %201 : vector<8x128xf32>
    %203 = arith.mulf %198, %202 : vector<8x128xf32>
    %204 = arith.maximumf %139, %171 : vector<8x128xf32>
    %205 = arith.maximumf %140, %203 : vector<8x128xf32>
    %c3_i32 = arith.constant 3 : i32
    %206 = arith.index_cast %c3_i32 : i32 to index
    %c0_54 = arith.constant 0 : index
    %c0_55 = arith.constant 0 : index
    %207 = vector.load %arg1[%206, %c0_54, %c0_55] : memref<8x8x512xf32, #tpu.memory_space<vmem>>, vector<1x8x512xf32>
    %208 = vector.shape_cast %207 : vector<1x8x512xf32> to vector<8x512xf32>
    %209 = arith.truncf %171 : vector<8x128xf32> to vector<8x128xbf16>
    %cst_56 = arith.constant dense<0.000000e+00> : vector<8x512xf32>
    %210 = tpu.matmul %209, %3, %cst_56 {dimension_numbers = #tpu.dot_dimension_numbers<[1], [0], [0], [1], [0, 0, 1, 1], [], []>} : vector<8x128xbf16>, vector<128x512xbf16>, vector<8x512xf32> -> vector<8x512xf32>
    %211 = arith.addf %208, %210 : vector<8x512xf32>
    %212 = vector.extract_strided_slice %211 {offsets = [0, 0], sizes = [8, 128], strides = [1, 1]} : vector<8x512xf32> to vector<8x128xf32>
    %213 = arith.negf %212 : vector<8x128xf32>
    %214 = math.exp %213 : vector<8x128xf32>
    %cst_57 = arith.constant 1.000000e+00 : f32
    %215 = vector.broadcast %cst_57 : f32 to vector<8x128xf32>
    %216 = arith.addf %215, %214 : vector<8x128xf32>
    %217 = arith.divf %215, %216 : vector<8x128xf32>
    %218 = vector.extract_strided_slice %211 {offsets = [0, 128], sizes = [8, 128], strides = [1, 1]} : vector<8x512xf32> to vector<8x128xf32>
    %219 = arith.negf %218 : vector<8x128xf32>
    %220 = math.exp %219 : vector<8x128xf32>
    %cst_58 = arith.constant 1.000000e+00 : f32
    %221 = vector.broadcast %cst_58 : f32 to vector<8x128xf32>
    %222 = arith.addf %221, %220 : vector<8x128xf32>
    %223 = arith.divf %221, %222 : vector<8x128xf32>
    %224 = vector.extract_strided_slice %211 {offsets = [0, 256], sizes = [8, 128], strides = [1, 1]} : vector<8x512xf32> to vector<8x128xf32>
    %225 = math.tanh %224 : vector<8x128xf32>
    %226 = vector.extract_strided_slice %211 {offsets = [0, 384], sizes = [8, 128], strides = [1, 1]} : vector<8x512xf32> to vector<8x128xf32>
    %227 = arith.negf %226 : vector<8x128xf32>
    %228 = math.exp %227 : vector<8x128xf32>
    %cst_59 = arith.constant 1.000000e+00 : f32
    %229 = vector.broadcast %cst_59 : f32 to vector<8x128xf32>
    %230 = arith.addf %229, %228 : vector<8x128xf32>
    %231 = arith.divf %229, %230 : vector<8x128xf32>
    %232 = arith.mulf %223, %169 : vector<8x128xf32>
    %233 = arith.mulf %217, %225 : vector<8x128xf32>
    %234 = arith.addf %232, %233 : vector<8x128xf32>
    %235 = math.tanh %234 : vector<8x128xf32>
    %236 = arith.mulf %231, %235 : vector<8x128xf32>
    %c7_i32_60 = arith.constant 7 : i32
    %237 = arith.subi %c7_i32_60, %c3_i32 : i32
    %238 = arith.index_cast %237 : i32 to index
    %c0_61 = arith.constant 0 : index
    %c0_62 = arith.constant 0 : index
    %239 = vector.load %arg2[%238, %c0_61, %c0_62] : memref<8x8x512xf32, #tpu.memory_space<vmem>>, vector<1x8x512xf32>
    %240 = vector.shape_cast %239 : vector<1x8x512xf32> to vector<8x512xf32>
    %241 = arith.truncf %203 : vector<8x128xf32> to vector<8x128xbf16>
    %cst_63 = arith.constant dense<0.000000e+00> : vector<8x512xf32>
    %242 = tpu.matmul %241, %4, %cst_63 {dimension_numbers = #tpu.dot_dimension_numbers<[1], [0], [0], [1], [0, 0, 1, 1], [], []>} : vector<8x128xbf16>, vector<128x512xbf16>, vector<8x512xf32> -> vector<8x512xf32>
    %243 = arith.addf %240, %242 : vector<8x512xf32>
    %244 = vector.extract_strided_slice %243 {offsets = [0, 0], sizes = [8, 128], strides = [1, 1]} : vector<8x512xf32> to vector<8x128xf32>
    %245 = arith.negf %244 : vector<8x128xf32>
    %246 = math.exp %245 : vector<8x128xf32>
    %cst_64 = arith.constant 1.000000e+00 : f32
    %247 = vector.broadcast %cst_64 : f32 to vector<8x128xf32>
    %248 = arith.addf %247, %246 : vector<8x128xf32>
    %249 = arith.divf %247, %248 : vector<8x128xf32>
    %250 = vector.extract_strided_slice %243 {offsets = [0, 128], sizes = [8, 128], strides = [1, 1]} : vector<8x512xf32> to vector<8x128xf32>
    %251 = arith.negf %250 : vector<8x128xf32>
    %252 = math.exp %251 : vector<8x128xf32>
    %cst_65 = arith.constant 1.000000e+00 : f32
    %253 = vector.broadcast %cst_65 : f32 to vector<8x128xf32>
    %254 = arith.addf %253, %252 : vector<8x128xf32>
    %255 = arith.divf %253, %254 : vector<8x128xf32>
    %256 = vector.extract_strided_slice %243 {offsets = [0, 256], sizes = [8, 128], strides = [1, 1]} : vector<8x512xf32> to vector<8x128xf32>
    %257 = math.tanh %256 : vector<8x128xf32>
    %258 = vector.extract_strided_slice %243 {offsets = [0, 384], sizes = [8, 128], strides = [1, 1]} : vector<8x512xf32> to vector<8x128xf32>
    %259 = arith.negf %258 : vector<8x128xf32>
    %260 = math.exp %259 : vector<8x128xf32>
    %cst_66 = arith.constant 1.000000e+00 : f32
    %261 = vector.broadcast %cst_66 : f32 to vector<8x128xf32>
    %262 = arith.addf %261, %260 : vector<8x128xf32>
    %263 = arith.divf %261, %262 : vector<8x128xf32>
    %264 = arith.mulf %255, %201 : vector<8x128xf32>
    %265 = arith.mulf %249, %257 : vector<8x128xf32>
    %266 = arith.addf %264, %265 : vector<8x128xf32>
    %267 = math.tanh %266 : vector<8x128xf32>
    %268 = arith.mulf %263, %267 : vector<8x128xf32>
    %269 = arith.maximumf %204, %236 : vector<8x128xf32>
    %270 = arith.maximumf %205, %268 : vector<8x128xf32>
    %c4_i32 = arith.constant 4 : i32
    %271 = arith.index_cast %c4_i32 : i32 to index
    %c0_67 = arith.constant 0 : index
    %c0_68 = arith.constant 0 : index
    %272 = vector.load %arg1[%271, %c0_67, %c0_68] : memref<8x8x512xf32, #tpu.memory_space<vmem>>, vector<1x8x512xf32>
    %273 = vector.shape_cast %272 : vector<1x8x512xf32> to vector<8x512xf32>
    %274 = arith.truncf %236 : vector<8x128xf32> to vector<8x128xbf16>
    %cst_69 = arith.constant dense<0.000000e+00> : vector<8x512xf32>
    %275 = tpu.matmul %274, %3, %cst_69 {dimension_numbers = #tpu.dot_dimension_numbers<[1], [0], [0], [1], [0, 0, 1, 1], [], []>} : vector<8x128xbf16>, vector<128x512xbf16>, vector<8x512xf32> -> vector<8x512xf32>
    %276 = arith.addf %273, %275 : vector<8x512xf32>
    %277 = vector.extract_strided_slice %276 {offsets = [0, 0], sizes = [8, 128], strides = [1, 1]} : vector<8x512xf32> to vector<8x128xf32>
    %278 = arith.negf %277 : vector<8x128xf32>
    %279 = math.exp %278 : vector<8x128xf32>
    %cst_70 = arith.constant 1.000000e+00 : f32
    %280 = vector.broadcast %cst_70 : f32 to vector<8x128xf32>
    %281 = arith.addf %280, %279 : vector<8x128xf32>
    %282 = arith.divf %280, %281 : vector<8x128xf32>
    %283 = vector.extract_strided_slice %276 {offsets = [0, 128], sizes = [8, 128], strides = [1, 1]} : vector<8x512xf32> to vector<8x128xf32>
    %284 = arith.negf %283 : vector<8x128xf32>
    %285 = math.exp %284 : vector<8x128xf32>
    %cst_71 = arith.constant 1.000000e+00 : f32
    %286 = vector.broadcast %cst_71 : f32 to vector<8x128xf32>
    %287 = arith.addf %286, %285 : vector<8x128xf32>
    %288 = arith.divf %286, %287 : vector<8x128xf32>
    %289 = vector.extract_strided_slice %276 {offsets = [0, 256], sizes = [8, 128], strides = [1, 1]} : vector<8x512xf32> to vector<8x128xf32>
    %290 = math.tanh %289 : vector<8x128xf32>
    %291 = vector.extract_strided_slice %276 {offsets = [0, 384], sizes = [8, 128], strides = [1, 1]} : vector<8x512xf32> to vector<8x128xf32>
    %292 = arith.negf %291 : vector<8x128xf32>
    %293 = math.exp %292 : vector<8x128xf32>
    %cst_72 = arith.constant 1.000000e+00 : f32
    %294 = vector.broadcast %cst_72 : f32 to vector<8x128xf32>
    %295 = arith.addf %294, %293 : vector<8x128xf32>
    %296 = arith.divf %294, %295 : vector<8x128xf32>
    %297 = arith.mulf %288, %234 : vector<8x128xf32>
    %298 = arith.mulf %282, %290 : vector<8x128xf32>
    %299 = arith.addf %297, %298 : vector<8x128xf32>
    %300 = math.tanh %299 : vector<8x128xf32>
    %301 = arith.mulf %296, %300 : vector<8x128xf32>
    %c7_i32_73 = arith.constant 7 : i32
    %302 = arith.subi %c7_i32_73, %c4_i32 : i32
    %303 = arith.index_cast %302 : i32 to index
    %c0_74 = arith.constant 0 : index
    %c0_75 = arith.constant 0 : index
    %304 = vector.load %arg2[%303, %c0_74, %c0_75] : memref<8x8x512xf32, #tpu.memory_space<vmem>>, vector<1x8x512xf32>
    %305 = vector.shape_cast %304 : vector<1x8x512xf32> to vector<8x512xf32>
    %306 = arith.truncf %268 : vector<8x128xf32> to vector<8x128xbf16>
    %cst_76 = arith.constant dense<0.000000e+00> : vector<8x512xf32>
    %307 = tpu.matmul %306, %4, %cst_76 {dimension_numbers = #tpu.dot_dimension_numbers<[1], [0], [0], [1], [0, 0, 1, 1], [], []>} : vector<8x128xbf16>, vector<128x512xbf16>, vector<8x512xf32> -> vector<8x512xf32>
    %308 = arith.addf %305, %307 : vector<8x512xf32>
    %309 = vector.extract_strided_slice %308 {offsets = [0, 0], sizes = [8, 128], strides = [1, 1]} : vector<8x512xf32> to vector<8x128xf32>
    %310 = arith.negf %309 : vector<8x128xf32>
    %311 = math.exp %310 : vector<8x128xf32>
    %cst_77 = arith.constant 1.000000e+00 : f32
    %312 = vector.broadcast %cst_77 : f32 to vector<8x128xf32>
    %313 = arith.addf %312, %311 : vector<8x128xf32>
    %314 = arith.divf %312, %313 : vector<8x128xf32>
    %315 = vector.extract_strided_slice %308 {offsets = [0, 128], sizes = [8, 128], strides = [1, 1]} : vector<8x512xf32> to vector<8x128xf32>
    %316 = arith.negf %315 : vector<8x128xf32>
    %317 = math.exp %316 : vector<8x128xf32>
    %cst_78 = arith.constant 1.000000e+00 : f32
    %318 = vector.broadcast %cst_78 : f32 to vector<8x128xf32>
    %319 = arith.addf %318, %317 : vector<8x128xf32>
    %320 = arith.divf %318, %319 : vector<8x128xf32>
    %321 = vector.extract_strided_slice %308 {offsets = [0, 256], sizes = [8, 128], strides = [1, 1]} : vector<8x512xf32> to vector<8x128xf32>
    %322 = math.tanh %321 : vector<8x128xf32>
    %323 = vector.extract_strided_slice %308 {offsets = [0, 384], sizes = [8, 128], strides = [1, 1]} : vector<8x512xf32> to vector<8x128xf32>
    %324 = arith.negf %323 : vector<8x128xf32>
    %325 = math.exp %324 : vector<8x128xf32>
    %cst_79 = arith.constant 1.000000e+00 : f32
    %326 = vector.broadcast %cst_79 : f32 to vector<8x128xf32>
    %327 = arith.addf %326, %325 : vector<8x128xf32>
    %328 = arith.divf %326, %327 : vector<8x128xf32>
    %329 = arith.mulf %320, %266 : vector<8x128xf32>
    %330 = arith.mulf %314, %322 : vector<8x128xf32>
    %331 = arith.addf %329, %330 : vector<8x128xf32>
    %332 = math.tanh %331 : vector<8x128xf32>
    %333 = arith.mulf %328, %332 : vector<8x128xf32>
    %334 = arith.maximumf %269, %301 : vector<8x128xf32>
    %335 = arith.maximumf %270, %333 : vector<8x128xf32>
    %c5_i32 = arith.constant 5 : i32
    %336 = arith.index_cast %c5_i32 : i32 to index
    %c0_80 = arith.constant 0 : index
    %c0_81 = arith.constant 0 : index
    %337 = vector.load %arg1[%336, %c0_80, %c0_81] : memref<8x8x512xf32, #tpu.memory_space<vmem>>, vector<1x8x512xf32>
    %338 = vector.shape_cast %337 : vector<1x8x512xf32> to vector<8x512xf32>
    %339 = arith.truncf %301 : vector<8x128xf32> to vector<8x128xbf16>
    %cst_82 = arith.constant dense<0.000000e+00> : vector<8x512xf32>
    %340 = tpu.matmul %339, %3, %cst_82 {dimension_numbers = #tpu.dot_dimension_numbers<[1], [0], [0], [1], [0, 0, 1, 1], [], []>} : vector<8x128xbf16>, vector<128x512xbf16>, vector<8x512xf32> -> vector<8x512xf32>
    %341 = arith.addf %338, %340 : vector<8x512xf32>
    %342 = vector.extract_strided_slice %341 {offsets = [0, 0], sizes = [8, 128], strides = [1, 1]} : vector<8x512xf32> to vector<8x128xf32>
    %343 = arith.negf %342 : vector<8x128xf32>
    %344 = math.exp %343 : vector<8x128xf32>
    %cst_83 = arith.constant 1.000000e+00 : f32
    %345 = vector.broadcast %cst_83 : f32 to vector<8x128xf32>
    %346 = arith.addf %345, %344 : vector<8x128xf32>
    %347 = arith.divf %345, %346 : vector<8x128xf32>
    %348 = vector.extract_strided_slice %341 {offsets = [0, 128], sizes = [8, 128], strides = [1, 1]} : vector<8x512xf32> to vector<8x128xf32>
    %349 = arith.negf %348 : vector<8x128xf32>
    %350 = math.exp %349 : vector<8x128xf32>
    %cst_84 = arith.constant 1.000000e+00 : f32
    %351 = vector.broadcast %cst_84 : f32 to vector<8x128xf32>
    %352 = arith.addf %351, %350 : vector<8x128xf32>
    %353 = arith.divf %351, %352 : vector<8x128xf32>
    %354 = vector.extract_strided_slice %341 {offsets = [0, 256], sizes = [8, 128], strides = [1, 1]} : vector<8x512xf32> to vector<8x128xf32>
    %355 = math.tanh %354 : vector<8x128xf32>
    %356 = vector.extract_strided_slice %341 {offsets = [0, 384], sizes = [8, 128], strides = [1, 1]} : vector<8x512xf32> to vector<8x128xf32>
    %357 = arith.negf %356 : vector<8x128xf32>
    %358 = math.exp %357 : vector<8x128xf32>
    %cst_85 = arith.constant 1.000000e+00 : f32
    %359 = vector.broadcast %cst_85 : f32 to vector<8x128xf32>
    %360 = arith.addf %359, %358 : vector<8x128xf32>
    %361 = arith.divf %359, %360 : vector<8x128xf32>
    %362 = arith.mulf %353, %299 : vector<8x128xf32>
    %363 = arith.mulf %347, %355 : vector<8x128xf32>
    %364 = arith.addf %362, %363 : vector<8x128xf32>
    %365 = math.tanh %364 : vector<8x128xf32>
    %366 = arith.mulf %361, %365 : vector<8x128xf32>
    %c7_i32_86 = arith.constant 7 : i32
    %367 = arith.subi %c7_i32_86, %c5_i32 : i32
    %368 = arith.index_cast %367 : i32 to index
    %c0_87 = arith.constant 0 : index
    %c0_88 = arith.constant 0 : index
    %369 = vector.load %arg2[%368, %c0_87, %c0_88] : memref<8x8x512xf32, #tpu.memory_space<vmem>>, vector<1x8x512xf32>
    %370 = vector.shape_cast %369 : vector<1x8x512xf32> to vector<8x512xf32>
    %371 = arith.truncf %333 : vector<8x128xf32> to vector<8x128xbf16>
    %cst_89 = arith.constant dense<0.000000e+00> : vector<8x512xf32>
    %372 = tpu.matmul %371, %4, %cst_89 {dimension_numbers = #tpu.dot_dimension_numbers<[1], [0], [0], [1], [0, 0, 1, 1], [], []>} : vector<8x128xbf16>, vector<128x512xbf16>, vector<8x512xf32> -> vector<8x512xf32>
    %373 = arith.addf %370, %372 : vector<8x512xf32>
    %374 = vector.extract_strided_slice %373 {offsets = [0, 0], sizes = [8, 128], strides = [1, 1]} : vector<8x512xf32> to vector<8x128xf32>
    %375 = arith.negf %374 : vector<8x128xf32>
    %376 = math.exp %375 : vector<8x128xf32>
    %cst_90 = arith.constant 1.000000e+00 : f32
    %377 = vector.broadcast %cst_90 : f32 to vector<8x128xf32>
    %378 = arith.addf %377, %376 : vector<8x128xf32>
    %379 = arith.divf %377, %378 : vector<8x128xf32>
    %380 = vector.extract_strided_slice %373 {offsets = [0, 128], sizes = [8, 128], strides = [1, 1]} : vector<8x512xf32> to vector<8x128xf32>
    %381 = arith.negf %380 : vector<8x128xf32>
    %382 = math.exp %381 : vector<8x128xf32>
    %cst_91 = arith.constant 1.000000e+00 : f32
    %383 = vector.broadcast %cst_91 : f32 to vector<8x128xf32>
    %384 = arith.addf %383, %382 : vector<8x128xf32>
    %385 = arith.divf %383, %384 : vector<8x128xf32>
    %386 = vector.extract_strided_slice %373 {offsets = [0, 256], sizes = [8, 128], strides = [1, 1]} : vector<8x512xf32> to vector<8x128xf32>
    %387 = math.tanh %386 : vector<8x128xf32>
    %388 = vector.extract_strided_slice %373 {offsets = [0, 384], sizes = [8, 128], strides = [1, 1]} : vector<8x512xf32> to vector<8x128xf32>
    %389 = arith.negf %388 : vector<8x128xf32>
    %390 = math.exp %389 : vector<8x128xf32>
    %cst_92 = arith.constant 1.000000e+00 : f32
    %391 = vector.broadcast %cst_92 : f32 to vector<8x128xf32>
    %392 = arith.addf %391, %390 : vector<8x128xf32>
    %393 = arith.divf %391, %392 : vector<8x128xf32>
    %394 = arith.mulf %385, %331 : vector<8x128xf32>
    %395 = arith.mulf %379, %387 : vector<8x128xf32>
    %396 = arith.addf %394, %395 : vector<8x128xf32>
    %397 = math.tanh %396 : vector<8x128xf32>
    %398 = arith.mulf %393, %397 : vector<8x128xf32>
    %399 = arith.maximumf %334, %366 : vector<8x128xf32>
    %400 = arith.maximumf %335, %398 : vector<8x128xf32>
    %c6_i32 = arith.constant 6 : i32
    %401 = arith.index_cast %c6_i32 : i32 to index
    %c0_93 = arith.constant 0 : index
    %c0_94 = arith.constant 0 : index
    %402 = vector.load %arg1[%401, %c0_93, %c0_94] : memref<8x8x512xf32, #tpu.memory_space<vmem>>, vector<1x8x512xf32>
    %403 = vector.shape_cast %402 : vector<1x8x512xf32> to vector<8x512xf32>
    %404 = arith.truncf %366 : vector<8x128xf32> to vector<8x128xbf16>
    %cst_95 = arith.constant dense<0.000000e+00> : vector<8x512xf32>
    %405 = tpu.matmul %404, %3, %cst_95 {dimension_numbers = #tpu.dot_dimension_numbers<[1], [0], [0], [1], [0, 0, 1, 1], [], []>} : vector<8x128xbf16>, vector<128x512xbf16>, vector<8x512xf32> -> vector<8x512xf32>
    %406 = arith.addf %403, %405 : vector<8x512xf32>
    %407 = vector.extract_strided_slice %406 {offsets = [0, 0], sizes = [8, 128], strides = [1, 1]} : vector<8x512xf32> to vector<8x128xf32>
    %408 = arith.negf %407 : vector<8x128xf32>
    %409 = math.exp %408 : vector<8x128xf32>
    %cst_96 = arith.constant 1.000000e+00 : f32
    %410 = vector.broadcast %cst_96 : f32 to vector<8x128xf32>
    %411 = arith.addf %410, %409 : vector<8x128xf32>
    %412 = arith.divf %410, %411 : vector<8x128xf32>
    %413 = vector.extract_strided_slice %406 {offsets = [0, 128], sizes = [8, 128], strides = [1, 1]} : vector<8x512xf32> to vector<8x128xf32>
    %414 = arith.negf %413 : vector<8x128xf32>
    %415 = math.exp %414 : vector<8x128xf32>
    %cst_97 = arith.constant 1.000000e+00 : f32
    %416 = vector.broadcast %cst_97 : f32 to vector<8x128xf32>
    %417 = arith.addf %416, %415 : vector<8x128xf32>
    %418 = arith.divf %416, %417 : vector<8x128xf32>
    %419 = vector.extract_strided_slice %406 {offsets = [0, 256], sizes = [8, 128], strides = [1, 1]} : vector<8x512xf32> to vector<8x128xf32>
    %420 = math.tanh %419 : vector<8x128xf32>
    %421 = vector.extract_strided_slice %406 {offsets = [0, 384], sizes = [8, 128], strides = [1, 1]} : vector<8x512xf32> to vector<8x128xf32>
    %422 = arith.negf %421 : vector<8x128xf32>
    %423 = math.exp %422 : vector<8x128xf32>
    %cst_98 = arith.constant 1.000000e+00 : f32
    %424 = vector.broadcast %cst_98 : f32 to vector<8x128xf32>
    %425 = arith.addf %424, %423 : vector<8x128xf32>
    %426 = arith.divf %424, %425 : vector<8x128xf32>
    %427 = arith.mulf %418, %364 : vector<8x128xf32>
    %428 = arith.mulf %412, %420 : vector<8x128xf32>
    %429 = arith.addf %427, %428 : vector<8x128xf32>
    %430 = math.tanh %429 : vector<8x128xf32>
    %431 = arith.mulf %426, %430 : vector<8x128xf32>
    %c7_i32_99 = arith.constant 7 : i32
    %432 = arith.subi %c7_i32_99, %c6_i32 : i32
    %433 = arith.index_cast %432 : i32 to index
    %c0_100 = arith.constant 0 : index
    %c0_101 = arith.constant 0 : index
    %434 = vector.load %arg2[%433, %c0_100, %c0_101] : memref<8x8x512xf32, #tpu.memory_space<vmem>>, vector<1x8x512xf32>
    %435 = vector.shape_cast %434 : vector<1x8x512xf32> to vector<8x512xf32>
    %436 = arith.truncf %398 : vector<8x128xf32> to vector<8x128xbf16>
    %cst_102 = arith.constant dense<0.000000e+00> : vector<8x512xf32>
    %437 = tpu.matmul %436, %4, %cst_102 {dimension_numbers = #tpu.dot_dimension_numbers<[1], [0], [0], [1], [0, 0, 1, 1], [], []>} : vector<8x128xbf16>, vector<128x512xbf16>, vector<8x512xf32> -> vector<8x512xf32>
    %438 = arith.addf %435, %437 : vector<8x512xf32>
    %439 = vector.extract_strided_slice %438 {offsets = [0, 0], sizes = [8, 128], strides = [1, 1]} : vector<8x512xf32> to vector<8x128xf32>
    %440 = arith.negf %439 : vector<8x128xf32>
    %441 = math.exp %440 : vector<8x128xf32>
    %cst_103 = arith.constant 1.000000e+00 : f32
    %442 = vector.broadcast %cst_103 : f32 to vector<8x128xf32>
    %443 = arith.addf %442, %441 : vector<8x128xf32>
    %444 = arith.divf %442, %443 : vector<8x128xf32>
    %445 = vector.extract_strided_slice %438 {offsets = [0, 128], sizes = [8, 128], strides = [1, 1]} : vector<8x512xf32> to vector<8x128xf32>
    %446 = arith.negf %445 : vector<8x128xf32>
    %447 = math.exp %446 : vector<8x128xf32>
    %cst_104 = arith.constant 1.000000e+00 : f32
    %448 = vector.broadcast %cst_104 : f32 to vector<8x128xf32>
    %449 = arith.addf %448, %447 : vector<8x128xf32>
    %450 = arith.divf %448, %449 : vector<8x128xf32>
    %451 = vector.extract_strided_slice %438 {offsets = [0, 256], sizes = [8, 128], strides = [1, 1]} : vector<8x512xf32> to vector<8x128xf32>
    %452 = math.tanh %451 : vector<8x128xf32>
    %453 = vector.extract_strided_slice %438 {offsets = [0, 384], sizes = [8, 128], strides = [1, 1]} : vector<8x512xf32> to vector<8x128xf32>
    %454 = arith.negf %453 : vector<8x128xf32>
    %455 = math.exp %454 : vector<8x128xf32>
    %cst_105 = arith.constant 1.000000e+00 : f32
    %456 = vector.broadcast %cst_105 : f32 to vector<8x128xf32>
    %457 = arith.addf %456, %455 : vector<8x128xf32>
    %458 = arith.divf %456, %457 : vector<8x128xf32>
    %459 = arith.mulf %450, %396 : vector<8x128xf32>
    %460 = arith.mulf %444, %452 : vector<8x128xf32>
    %461 = arith.addf %459, %460 : vector<8x128xf32>
    %462 = math.tanh %461 : vector<8x128xf32>
    %463 = arith.mulf %458, %462 : vector<8x128xf32>
    %464 = arith.maximumf %399, %431 : vector<8x128xf32>
    %465 = arith.maximumf %400, %463 : vector<8x128xf32>
    %c7_i32_106 = arith.constant 7 : i32
    %466 = arith.index_cast %c7_i32_106 : i32 to index
    %c0_107 = arith.constant 0 : index
    %c0_108 = arith.constant 0 : index
    %467 = vector.load %arg1[%466, %c0_107, %c0_108] : memref<8x8x512xf32, #tpu.memory_space<vmem>>, vector<1x8x512xf32>
    %468 = vector.shape_cast %467 : vector<1x8x512xf32> to vector<8x512xf32>
    %469 = arith.truncf %431 : vector<8x128xf32> to vector<8x128xbf16>
    %cst_109 = arith.constant dense<0.000000e+00> : vector<8x512xf32>
    %470 = tpu.matmul %469, %3, %cst_109 {dimension_numbers = #tpu.dot_dimension_numbers<[1], [0], [0], [1], [0, 0, 1, 1], [], []>} : vector<8x128xbf16>, vector<128x512xbf16>, vector<8x512xf32> -> vector<8x512xf32>
    %471 = arith.addf %468, %470 : vector<8x512xf32>
    %472 = vector.extract_strided_slice %471 {offsets = [0, 0], sizes = [8, 128], strides = [1, 1]} : vector<8x512xf32> to vector<8x128xf32>
    %473 = arith.negf %472 : vector<8x128xf32>
    %474 = math.exp %473 : vector<8x128xf32>
    %cst_110 = arith.constant 1.000000e+00 : f32
    %475 = vector.broadcast %cst_110 : f32 to vector<8x128xf32>
    %476 = arith.addf %475, %474 : vector<8x128xf32>
    %477 = arith.divf %475, %476 : vector<8x128xf32>
    %478 = vector.extract_strided_slice %471 {offsets = [0, 128], sizes = [8, 128], strides = [1, 1]} : vector<8x512xf32> to vector<8x128xf32>
    %479 = arith.negf %478 : vector<8x128xf32>
    %480 = math.exp %479 : vector<8x128xf32>
    %cst_111 = arith.constant 1.000000e+00 : f32
    %481 = vector.broadcast %cst_111 : f32 to vector<8x128xf32>
    %482 = arith.addf %481, %480 : vector<8x128xf32>
    %483 = arith.divf %481, %482 : vector<8x128xf32>
    %484 = vector.extract_strided_slice %471 {offsets = [0, 256], sizes = [8, 128], strides = [1, 1]} : vector<8x512xf32> to vector<8x128xf32>
    %485 = math.tanh %484 : vector<8x128xf32>
    %486 = vector.extract_strided_slice %471 {offsets = [0, 384], sizes = [8, 128], strides = [1, 1]} : vector<8x512xf32> to vector<8x128xf32>
    %487 = arith.negf %486 : vector<8x128xf32>
    %488 = math.exp %487 : vector<8x128xf32>
    %cst_112 = arith.constant 1.000000e+00 : f32
    %489 = vector.broadcast %cst_112 : f32 to vector<8x128xf32>
    %490 = arith.addf %489, %488 : vector<8x128xf32>
    %491 = arith.divf %489, %490 : vector<8x128xf32>
    %492 = arith.mulf %483, %429 : vector<8x128xf32>
    %493 = arith.mulf %477, %485 : vector<8x128xf32>
    %494 = arith.addf %492, %493 : vector<8x128xf32>
    %495 = math.tanh %494 : vector<8x128xf32>
    %496 = arith.mulf %491, %495 : vector<8x128xf32>
    %c7_i32_113 = arith.constant 7 : i32
    %497 = arith.subi %c7_i32_113, %c7_i32_106 : i32
    %498 = arith.index_cast %497 : i32 to index
    %c0_114 = arith.constant 0 : index
    %c0_115 = arith.constant 0 : index
    %499 = vector.load %arg2[%498, %c0_114, %c0_115] : memref<8x8x512xf32, #tpu.memory_space<vmem>>, vector<1x8x512xf32>
    %500 = vector.shape_cast %499 : vector<1x8x512xf32> to vector<8x512xf32>
    %501 = arith.truncf %463 : vector<8x128xf32> to vector<8x128xbf16>
    %cst_116 = arith.constant dense<0.000000e+00> : vector<8x512xf32>
    %502 = tpu.matmul %501, %4, %cst_116 {dimension_numbers = #tpu.dot_dimension_numbers<[1], [0], [0], [1], [0, 0, 1, 1], [], []>} : vector<8x128xbf16>, vector<128x512xbf16>, vector<8x512xf32> -> vector<8x512xf32>
    %503 = arith.addf %500, %502 : vector<8x512xf32>
    %504 = vector.extract_strided_slice %503 {offsets = [0, 0], sizes = [8, 128], strides = [1, 1]} : vector<8x512xf32> to vector<8x128xf32>
    %505 = arith.negf %504 : vector<8x128xf32>
    %506 = math.exp %505 : vector<8x128xf32>
    %cst_117 = arith.constant 1.000000e+00 : f32
    %507 = vector.broadcast %cst_117 : f32 to vector<8x128xf32>
    %508 = arith.addf %507, %506 : vector<8x128xf32>
    %509 = arith.divf %507, %508 : vector<8x128xf32>
    %510 = vector.extract_strided_slice %503 {offsets = [0, 128], sizes = [8, 128], strides = [1, 1]} : vector<8x512xf32> to vector<8x128xf32>
    %511 = arith.negf %510 : vector<8x128xf32>
    %512 = math.exp %511 : vector<8x128xf32>
    %cst_118 = arith.constant 1.000000e+00 : f32
    %513 = vector.broadcast %cst_118 : f32 to vector<8x128xf32>
    %514 = arith.addf %513, %512 : vector<8x128xf32>
    %515 = arith.divf %513, %514 : vector<8x128xf32>
    %516 = vector.extract_strided_slice %503 {offsets = [0, 256], sizes = [8, 128], strides = [1, 1]} : vector<8x512xf32> to vector<8x128xf32>
    %517 = math.tanh %516 : vector<8x128xf32>
    %518 = vector.extract_strided_slice %503 {offsets = [0, 384], sizes = [8, 128], strides = [1, 1]} : vector<8x512xf32> to vector<8x128xf32>
    %519 = arith.negf %518 : vector<8x128xf32>
    %520 = math.exp %519 : vector<8x128xf32>
    %cst_119 = arith.constant 1.000000e+00 : f32
    %521 = vector.broadcast %cst_119 : f32 to vector<8x128xf32>
    %522 = arith.addf %521, %520 : vector<8x128xf32>
    %523 = arith.divf %521, %522 : vector<8x128xf32>
    %524 = arith.mulf %515, %461 : vector<8x128xf32>
    %525 = arith.mulf %509, %517 : vector<8x128xf32>
    %526 = arith.addf %524, %525 : vector<8x128xf32>
    %527 = math.tanh %526 : vector<8x128xf32>
    %528 = arith.mulf %523, %527 : vector<8x128xf32>
    %529 = arith.maximumf %464, %496 : vector<8x128xf32>
    %530 = arith.maximumf %465, %528 : vector<8x128xf32>
    %c8_i32 = arith.constant 8 : i32
    %c0_120 = arith.constant 0 : index
    %c0_121 = arith.constant 0 : index
    %531 = vector.load %arg9[%c0_120, %c0_121] : memref<8x128xf32, #tpu.memory_space<vmem>>, vector<8x128xf32>
    tpu.vector_store %arg9[%c0_120, %c0_121], %496 {strides = array<i32>} : memref<8x128xf32, #tpu.memory_space<vmem>>, vector<8x128xf32>,
    %c0_122 = arith.constant 0 : index
    %c0_123 = arith.constant 0 : index
    %532 = vector.load %arg10[%c0_122, %c0_123] : memref<8x128xf32, #tpu.memory_space<vmem>>, vector<8x128xf32>
    tpu.vector_store %arg10[%c0_122, %c0_123], %494 {strides = array<i32>} : memref<8x128xf32, #tpu.memory_space<vmem>>, vector<8x128xf32>,
    %c0_124 = arith.constant 0 : index
    %c0_125 = arith.constant 0 : index
    %533 = vector.load %arg11[%c0_124, %c0_125] : memref<8x128xf32, #tpu.memory_space<vmem>>, vector<8x128xf32>
    tpu.vector_store %arg11[%c0_124, %c0_125], %528 {strides = array<i32>} : memref<8x128xf32, #tpu.memory_space<vmem>>, vector<8x128xf32>,
    %c0_126 = arith.constant 0 : index
    %c0_127 = arith.constant 0 : index
    %534 = vector.load %arg12[%c0_126, %c0_127] : memref<8x128xf32, #tpu.memory_space<vmem>>, vector<8x128xf32>
    tpu.vector_store %arg12[%c0_126, %c0_127], %526 {strides = array<i32>} : memref<8x128xf32, #tpu.memory_space<vmem>>, vector<8x128xf32>,
    %c0_128 = arith.constant 0 : index
    %c0_129 = arith.constant 0 : index
    %535 = vector.load %arg13[%c0_128, %c0_129] : memref<8x128xf32, #tpu.memory_space<vmem>>, vector<8x128xf32>
    tpu.vector_store %arg13[%c0_128, %c0_129], %529 {strides = array<i32>} : memref<8x128xf32, #tpu.memory_space<vmem>>, vector<8x128xf32>,
    %c0_130 = arith.constant 0 : index
    %c0_131 = arith.constant 0 : index
    %536 = vector.load %arg14[%c0_130, %c0_131] : memref<8x128xf32, #tpu.memory_space<vmem>>, vector<8x128xf32>
    tpu.vector_store %arg14[%c0_130, %c0_131], %530 {strides = array<i32>} : memref<8x128xf32, #tpu.memory_space<vmem>>, vector<8x128xf32>,
    %c0_i32_132 = arith.constant 0 : i32
    %537 = arith.cmpi eq, %arg0, %c0_i32_132 : i32
    %538 = arith.extui %537 : i1 to i32
    %c0_i32_133 = arith.constant 0 : i32
    %539 = arith.cmpi ne, %538, %c0_i32_133 : i32
    scf.if %539 {
      %c0_134 = arith.constant 0 : index
      %c0_135 = arith.constant 0 : index
      %540 = vector.load %arg5[%c0_134, %c0_135] : memref<1x128xf32, #tpu.memory_space<vmem>>, vector<1x128xf32>
      %541 = vector.broadcast %540 : vector<1x128xf32> to vector<8x128xf32>
      %542 = arith.mulf %529, %541 : vector<8x128xf32>
      %cst_136 = arith.constant dense<0.000000e+00> : vector<8xf32>
      %543 = vector.multi_reduction <add>, %542, %cst_136 [1] : vector<8x128xf32> to vector<8xf32>
      %544 = vector.shape_cast %543 : vector<8xf32> to vector<8x1xf32>
      %c0_137 = arith.constant 0 : index
      %c0_138 = arith.constant 0 : index
      %545 = vector.load %arg6[%c0_137, %c0_138] : memref<1x128xf32, #tpu.memory_space<vmem>>, vector<1x128xf32>
      %546 = vector.broadcast %545 : vector<1x128xf32> to vector<8x128xf32>
      %547 = arith.mulf %530, %546 : vector<8x128xf32>
      %cst_139 = arith.constant dense<0.000000e+00> : vector<8xf32>
      %548 = vector.multi_reduction <add>, %547, %cst_139 [1] : vector<8x128xf32> to vector<8xf32>
      %549 = vector.shape_cast %548 : vector<8xf32> to vector<8x1xf32>
      %550 = arith.addf %544, %549 : vector<8x1xf32>
      %c0_140 = arith.constant 0 : index
      %c0_141 = arith.constant 0 : index
      %551 = vector.load %arg7[%c0_140, %c0_141] : memref<1x1xf32, #tpu.memory_space<vmem>>, vector<1x1xf32>
      %552 = vector.broadcast %551 : vector<1x1xf32> to vector<8x1xf32>
      %553 = arith.addf %550, %552 : vector<8x1xf32>
      %c0_142 = arith.constant 0 : index
      %c0_143 = arith.constant 0 : index
      %554 = vector.load %arg8[%c0_142, %c0_143] : memref<8x1xf32, #tpu.memory_space<vmem>>, vector<8x1xf32>
      tpu.vector_store %arg8[%c0_142, %c0_143], %553 {strides = array<i32>} : memref<8x1xf32, #tpu.memory_space<vmem>>, vector<8x1xf32>,
    } else {
    }
    return
  }
  func.func @transform_0(%arg0: i32) -> (i32, i32, i32) {
    %c0_i32 = arith.constant 0 : i32
    %c0_i32_0 = arith.constant 0 : i32
    %c0_i32_1 = arith.constant 0 : i32
    return %arg0, %c0_i32, %c0_i32_0 : i32, i32, i32
  }
  func.func @transform_1(%arg0: i32) -> (i32, i32, i32) {
    %c0_i32 = arith.constant 0 : i32
    %0 = arith.subi %c0_i32, %arg0 : i32
    %c0_i32_0 = arith.constant 0 : i32
    %c1_i32 = arith.constant 1 : i32
    %c0_i32_1 = arith.constant 0 : i32
    return %0, %c0_i32_0, %c1_i32 : i32, i32, i32
  }
  func.func @transform_2(%arg0: i32) -> (i32, i32) {
    %c0_i32 = arith.constant 0 : i32
    %c0_i32_0 = arith.constant 0 : i32
    %c0_i32_1 = arith.constant 0 : i32
    return %c0_i32, %c0_i32_0 : i32, i32
  }
  func.func @transform_3(%arg0: i32) -> (i32, i32) {
    %c0_i32 = arith.constant 0 : i32
    %c0_i32_0 = arith.constant 0 : i32
    %c0_i32_1 = arith.constant 0 : i32
    return %c0_i32, %c0_i32_0 : i32, i32
  }
  func.func @transform_4(%arg0: i32) -> (i32, i32) {
    %c0_i32 = arith.constant 0 : i32
    %c0_i32_0 = arith.constant 0 : i32
    %c0_i32_1 = arith.constant 0 : i32
    return %c0_i32, %c0_i32_0 : i32, i32
  }
  func.func @transform_5(%arg0: i32) -> (i32, i32) {
    %c0_i32 = arith.constant 0 : i32
    %c0_i32_0 = arith.constant 0 : i32
    %c0_i32_1 = arith.constant 0 : i32
    return %c0_i32, %c0_i32_0 : i32, i32
  }
  func.func @transform_6(%arg0: i32) -> (i32, i32) {
    %c0_i32 = arith.constant 0 : i32
    %c0_i32_0 = arith.constant 0 : i32
    %c0_i32_1 = arith.constant 0 : i32
    return %c0_i32, %c0_i32_0 : i32, i32
  }
  func.func @transform_7(%arg0: i32) -> (i32, i32) {
    %c0_i32 = arith.constant 0 : i32
    %c0_i32_0 = arith.constant 0 : i32
    %c0_i32_1 = arith.constant 0 : i32
    return %c0_i32, %c0_i32_0 : i32, i32
  }
}

</mosaic_0001>

<llo_original>
// kernel: lstm_forward.2
$region0: #{lstm_forward.2}
  #allocation0 [shape = 'u32[]', space=smem, size = 0x4, offset = 0x4, fixed_abs, tag = 'smem constant byte address 0x4 - core index']
  #allocation1 [shape = 'u32[144,128]{1,0:T(1,128)}', space=vmem, size = 0x12000, scoped, tag = 'internal scratch']
  %s0 = inlined_call_operand.vmem [shape: bf16[8,8,384], index: 0, kind: input, shape index: {}]
  %s1 = inlined_call_operand.hbm [shape: bf16[384,1024], index: 1, kind: input, shape index: {}]
  %s2 = inlined_call_operand.vmem [shape: f32[1,1024], index: 2, kind: input, shape index: {}]
  %s3 = inlined_call_operand.vmem [shape: f32[8,8,1024], index: 3, kind: output, shape index: {}]
  %s4 = sld [smem:[#allocation0]]
  $region26: #{lstm_forward.2} parent=0
    _
  %s6 = ssub.s32 1, %s4
  %s7 = scalar_select 0, %s6, %s4
  $region1: #{lstm_forward.2} parent=0
    #allocation2 [shape = 'u8[786432]{0}', space=vmem, size = 0xc0000, scoped, tag = 'input window, operand 1, single buffered']
    #allocation3 [shape = 's32[1]{0}', space=sflag, size = 0x4, scoped, tag = 'scoped memory for lstm_forward.2']
    %8 = vsyncpa [#allocation3], 0
    // Predicated region
    $region2: #{lstm_forward.2} parent=1 // pred_check
      _
    $region3: #{lstm_forward.2} parent=1 // pred_check_branch
      %10 = sbr.rel (0) target = $region5
    $region4: #{lstm_forward.2} parent=1 // pred_region
      _
    $region5: #{lstm_forward.2} parent=1 // pred_fallthru
      _
    // Predicated region
    $region6: #{lstm_forward.2} parent=1 // pred_check
      _
    $region7: #{lstm_forward.2} parent=1 // pred_check_branch
      %12 = sbr.rel (0) target = $region9
    $region8: #{lstm_forward.2} parent=1 // pred_region
      %s14 = ssub.s32 24576, 24576
      %15 = vsyncadd [#allocation3], %s14
      %s16 = sshll.u32 [#allocation2], 4
      %s17 = int_to_ptr.vmem [resolvable:$true] %s16
      %22 = dma.hbm_to_vmem [thread:$0]  %s1, 24576, %s17, [#allocation3], 512, 512, 32
    $region9: #{lstm_forward.2} parent=1 // pred_fallthru
      _
    // Predicated region
    $region10: #{lstm_forward.2} parent=1 // pred_check
      _
    $region11: #{lstm_forward.2} parent=1 // pred_check_branch
      %24 = sbr.rel (0) target = $region13
    $region12: #{lstm_forward.2} parent=1 // pred_region
      _
    $region13: #{lstm_forward.2} parent=1 // pred_fallthru
      _
    // Predicated region
    $region14: #{lstm_forward.2} parent=1 // pred_check
      _
    $region15: #{lstm_forward.2} parent=1 // pred_check_branch
      %26 = sbr.rel (0) target = $region17
    $region16: #{lstm_forward.2} parent=1 // pred_region
      %27 = dma.done [#allocation3], 24576
    $region17: #{lstm_forward.2} parent=1 // pred_fallthru
      _
    %v29 = vld [vmem:[%s0] sm:$0xff]
    %v30 = vld [vmem:[%s0 + $0x8] sm:$0xf]
    %v31 = vld [vmem:[%s0 + $0xc] sm:$0xff]
    %v32 = vld [vmem:[%s0 + $0x14] sm:$0xf]
    %v33 = vld [vmem:[%s0 + $0x18] sm:$0xff]
    %v34 = vld [vmem:[%s0 + $0x20] sm:$0xf]
    %v35 = vld [vmem:[%s0 + $0x24] sm:$0xff]
    %v36 = vld [vmem:[%s0 + $0x2c] sm:$0xf]
    %v37 = vld [vmem:[%s0 + $0x30] sm:$0xff]
    %v38 = vld [vmem:[%s0 + $0x38] sm:$0xf]
    %v39 = vld [vmem:[%s0 + $0x3c] sm:$0xff]
    %v40 = vld [vmem:[%s0 + $0x44] sm:$0xf]
    %v41 = vld [vmem:[%s0 + $0x48] sm:$0xff]
    %v42 = vld [vmem:[%s0 + $0x50] sm:$0xf]
    %v43 = vld [vmem:[%s0 + $0x54] sm:$0xff]
    %v44 = vld [vmem:[%s0 + $0x5c] sm:$0xf]
    %v45 = vld [vmem:[#allocation2] sm:$0xff]
    %v46 = vld [vmem:[#allocation2 + $0x8] sm:$0xff]
    %v47 = vld [vmem:[#allocation2 + $0x10] sm:$0xff]
    %v48 = vld [vmem:[#allocation2 + $0x18] sm:$0xff]
    %v49 = vld [vmem:[#allocation2 + $0x20] sm:$0xff]
    %v50 = vld [vmem:[#allocation2 + $0x28] sm:$0xff]
    %v51 = vld [vmem:[#allocation2 + $0x30] sm:$0xff]
    %v52 = vld [vmem:[#allocation2 + $0x38] sm:$0xff]
    %v53 = vld [vmem:[#allocation2 + $0x40] sm:$0xff]
    %v54 = vld [vmem:[#allocation2 + $0x48] sm:$0xff]
    %v55 = vld [vmem:[#allocation2 + $0x50] sm:$0xff]
    %v56 = vld [vmem:[#allocation2 + $0x58] sm:$0xff]
    %v57 = vld [vmem:[#allocation2 + $0x60] sm:$0xff]
    %v58 = vld [vmem:[#allocation2 + $0x68] sm:$0xff]
    %v59 = vld [vmem:[#allocation2 + $0x70] sm:$0xff]
    %v60 = vld [vmem:[#allocation2 + $0x78] sm:$0xff]
    %v61 = vld [vmem:[#allocation2 + $0x80] sm:$0xff]
    %v62 = vld [vmem:[#allocation2 + $0x88] sm:$0xff]
    %v63 = vld [vmem:[#allocation2 + $0x90] sm:$0xff]
    %v64 = vld [vmem:[#allocation2 + $0x98] sm:$0xff]
    %v65 = vld [vmem:[#allocation2 + $0xa0] sm:$0xff]
    %v66 = vld [vmem:[#allocation2 + $0xa8] sm:$0xff]
    %v67 = vld [vmem:[#allocation2 + $0xb0] sm:$0xff]
    %v68 = vld [vmem:[#allocation2 + $0xb8] sm:$0xff]
    %v69 = vld [vmem:[#allocation2 + $0xc0] sm:$0xff]
    %v70 = vld [vmem:[#allocation2 + $0xc8] sm:$0xff]
    %v71 = vld [vmem:[#allocation2 + $0xd0] sm:$0xff]
    %v72 = vld [vmem:[#allocation2 + $0xd8] sm:$0xff]
    %v73 = vld [vmem:[#allocation2 + $0xe0] sm:$0xff]
    %v74 = vld [vmem:[#allocation2 + $0xe8] sm:$0xff]
    %v75 = vld [vmem:[#allocation2 + $0xf0] sm:$0xff]
    %v76 = vld [vmem:[#allocation2 + $0xf8] sm:$0xff]
    %v77 = vld [vmem:[#allocation2 + $0x100] sm:$0xff]
    %v78 = vld [vmem:[#allocation2 + $0x108] sm:$0xff]
    %v79 = vld [vmem:[#allocation2 + $0x110] sm:$0xff]
    %v80 = vld [vmem:[#allocation2 + $0x118] sm:$0xff]
    %v81 = vld [vmem:[#allocation2 + $0x120] sm:$0xff]
    %v82 = vld [vmem:[#allocation2 + $0x128] sm:$0xff]
    %v83 = vld [vmem:[#allocation2 + $0x130] sm:$0xff]
    %v84 = vld [vmem:[#allocation2 + $0x138] sm:$0xff]
    %v85 = vld [vmem:[#allocation2 + $0x140] sm:$0xff]
    %v86 = vld [vmem:[#allocation2 + $0x148] sm:$0xff]
    %v87 = vld [vmem:[#allocation2 + $0x150] sm:$0xff]
    %v88 = vld [vmem:[#allocation2 + $0x158] sm:$0xff]
    %v89 = vld [vmem:[#allocation2 + $0x160] sm:$0xff]
    %v90 = vld [vmem:[#allocation2 + $0x168] sm:$0xff]
    %v91 = vld [vmem:[#allocation2 + $0x170] sm:$0xff]
    %v92 = vld [vmem:[#allocation2 + $0x178] sm:$0xff]
    %v93 = vld [vmem:[#allocation2 + $0x180] sm:$0xff]
    %v94 = vld [vmem:[#allocation2 + $0x188] sm:$0xff]
    %v95 = vld [vmem:[#allocation2 + $0x190] sm:$0xff]
    %v96 = vld [vmem:[#allocation2 + $0x198] sm:$0xff]
    %v97 = vld [vmem:[#allocation2 + $0x1a0] sm:$0xff]
    %v98 = vld [vmem:[#allocation2 + $0x1a8] sm:$0xff]
    %v99 = vld [vmem:[#allocation2 + $0x1b0] sm:$0xff]
    %v100 = vld [vmem:[#allocation2 + $0x1b8] sm:$0xff]
    %v101 = vld [vmem:[#allocation2 + $0x1c0] sm:$0xff]
    %v102 = vld [vmem:[#allocation2 + $0x1c8] sm:$0xff]
    %v103 = vld [vmem:[#allocation2 + $0x1d0] sm:$0xff]
    %v104 = vld [vmem:[#allocation2 + $0x1d8] sm:$0xff]
    %v105 = vld [vmem:[#allocation2 + $0x1e0] sm:$0xff]
    %v106 = vld [vmem:[#allocation2 + $0x1e8] sm:$0xff]
    %v107 = vld [vmem:[#allocation2 + $0x1f0] sm:$0xff]
    %v108 = vld [vmem:[#allocation2 + $0x1f8] sm:$0xff]
    %v109 = vld [vmem:[#allocation2 + $0x200] sm:$0xff]
    %v110 = vld [vmem:[#allocation2 + $0x208] sm:$0xff]
    %v111 = vld [vmem:[#allocation2 + $0x210] sm:$0xff]
    %v112 = vld [vmem:[#allocation2 + $0x218] sm:$0xff]
    %v113 = vld [vmem:[#allocation2 + $0x220] sm:$0xff]
    %v114 = vld [vmem:[#allocation2 + $0x228] sm:$0xff]
    %v115 = vld [vmem:[#allocation2 + $0x230] sm:$0xff]
    %v116 = vld [vmem:[#allocation2 + $0x238] sm:$0xff]
    %v117 = vld [vmem:[#allocation2 + $0x240] sm:$0xff]
    %v118 = vld [vmem:[#allocation2 + $0x248] sm:$0xff]
    %v119 = vld [vmem:[#allocation2 + $0x250] sm:$0xff]
    %v120 = vld [vmem:[#allocation2 + $0x258] sm:$0xff]
    %v121 = vld [vmem:[#allocation2 + $0x260] sm:$0xff]
    %v122 = vld [vmem:[#allocation2 + $0x268] sm:$0xff]
    %v123 = vld [vmem:[#allocation2 + $0x270] sm:$0xff]
    %v124 = vld [vmem:[#allocation2 + $0x278] sm:$0xff]
    %v125 = vld [vmem:[#allocation2 + $0x280] sm:$0xff]
    %v126 = vld [vmem:[#allocation2 + $0x288] sm:$0xff]
    %v127 = vld [vmem:[#allocation2 + $0x290] sm:$0xff]
    %v128 = vld [vmem:[#allocation2 + $0x298] sm:$0xff]
    %v129 = vld [vmem:[#allocation2 + $0x2a0] sm:$0xff]
    %v130 = vld [vmem:[#allocation2 + $0x2a8] sm:$0xff]
    %v131 = vld [vmem:[#allocation2 + $0x2b0] sm:$0xff]
    %v132 = vld [vmem:[#allocation2 + $0x2b8] sm:$0xff]
    %v133 = vld [vmem:[#allocation2 + $0x2c0] sm:$0xff]
    %v134 = vld [vmem:[#allocation2 + $0x2c8] sm:$0xff]
    %v135 = vld [vmem:[#allocation2 + $0x2d0] sm:$0xff]
    %v136 = vld [vmem:[#allocation2 + $0x2d8] sm:$0xff]
    %v137 = vld [vmem:[#allocation2 + $0x2e0] sm:$0xff]
    %v138 = vld [vmem:[#allocation2 + $0x2e8] sm:$0xff]
    %v139 = vld [vmem:[#allocation2 + $0x2f0] sm:$0xff]
    %v140 = vld [vmem:[#allocation2 + $0x2f8] sm:$0xff]
    %v141 = vld [vmem:[#allocation2 + $0x300] sm:$0xff]
    %v142 = vld [vmem:[#allocation2 + $0x308] sm:$0xff]
    %v143 = vld [vmem:[#allocation2 + $0x310] sm:$0xff]
    %v144 = vld [vmem:[#allocation2 + $0x318] sm:$0xff]
    %v145 = vld [vmem:[#allocation2 + $0x320] sm:$0xff]
    %v146 = vld [vmem:[#allocation2 + $0x328] sm:$0xff]
    %v147 = vld [vmem:[#allocation2 + $0x330] sm:$0xff]
    %v148 = vld [vmem:[#allocation2 + $0x338] sm:$0xff]
    %v149 = vld [vmem:[#allocation2 + $0x340] sm:$0xff]
    %v150 = vld [vmem:[#allocation2 + $0x348] sm:$0xff]
    %v151 = vld [vmem:[#allocation2 + $0x350] sm:$0xff]
    %v152 = vld [vmem:[#allocation2 + $0x358] sm:$0xff]
    %v153 = vld [vmem:[#allocation2 + $0x360] sm:$0xff]
    %v154 = vld [vmem:[#allocation2 + $0x368] sm:$0xff]
    %v155 = vld [vmem:[#allocation2 + $0x370] sm:$0xff]
    %v156 = vld [vmem:[#allocation2 + $0x378] sm:$0xff]
    %v157 = vld [vmem:[#allocation2 + $0x380] sm:$0xff]
    %v158 = vld [vmem:[#allocation2 + $0x388] sm:$0xff]
    %v159 = vld [vmem:[#allocation2 + $0x390] sm:$0xff]
    %v160 = vld [vmem:[#allocation2 + $0x398] sm:$0xff]
    %v161 = vld [vmem:[#allocation2 + $0x3a0] sm:$0xff]
    %v162 = vld [vmem:[#allocation2 + $0x3a8] sm:$0xff]
    %v163 = vld [vmem:[#allocation2 + $0x3b0] sm:$0xff]
    %v164 = vld [vmem:[#allocation2 + $0x3b8] sm:$0xff]
    %v165 = vld [vmem:[#allocation2 + $0x3c0] sm:$0xff]
    %v166 = vld [vmem:[#allocation2 + $0x3c8] sm:$0xff]
    %v167 = vld [vmem:[#allocation2 + $0x3d0] sm:$0xff]
    %v168 = vld [vmem:[#allocation2 + $0x3d8] sm:$0xff]
    %v169 = vld [vmem:[#allocation2 + $0x3e0] sm:$0xff]
    %v170 = vld [vmem:[#allocation2 + $0x3e8] sm:$0xff]
    %v171 = vld [vmem:[#allocation2 + $0x3f0] sm:$0xff]
    %v172 = vld [vmem:[#allocation2 + $0x3f8] sm:$0xff]
    %v173 = vld [vmem:[#allocation2 + $0x400] sm:$0xff]
    %v174 = vld [vmem:[#allocation2 + $0x408] sm:$0xff]
    %v175 = vld [vmem:[#allocation2 + $0x410] sm:$0xff]
    %v176 = vld [vmem:[#allocation2 + $0x418] sm:$0xff]
    %v177 = vld [vmem:[#allocation2 + $0x420] sm:$0xff]
    %v178 = vld [vmem:[#allocation2 + $0x428] sm:$0xff]
    %v179 = vld [vmem:[#allocation2 + $0x430] sm:$0xff]
    %v180 = vld [vmem:[#allocation2 + $0x438] sm:$0xff]
    %v181 = vld [vmem:[#allocation2 + $0x440] sm:$0xff]
    %v182 = vld [vmem:[#allocation2 + $0x448] sm:$0xff]
    %v183 = vld [vmem:[#allocation2 + $0x450] sm:$0xff]
    %v184 = vld [vmem:[#allocation2 + $0x458] sm:$0xff]
    %v185 = vld [vmem:[#allocation2 + $0x460] sm:$0xff]
    %v186 = vld [vmem:[#allocation2 + $0x468] sm:$0xff]
    %v187 = vld [vmem:[#allocation2 + $0x470] sm:$0xff]
    %v188 = vld [vmem:[#allocation2 + $0x478] sm:$0xff]
    %v189 = vld [vmem:[#allocation2 + $0x480] sm:$0xff]
    %v190 = vld [vmem:[#allocation2 + $0x488] sm:$0xff]
    %v191 = vld [vmem:[#allocation2 + $0x490] sm:$0xff]
    %v192 = vld [vmem:[#allocation2 + $0x498] sm:$0xff]
    %v193 = vld [vmem:[#allocation2 + $0x4a0] sm:$0xff]
    %v194 = vld [vmem:[#allocation2 + $0x4a8] sm:$0xff]
    %v195 = vld [vmem:[#allocation2 + $0x4b0] sm:$0xff]
    %v196 = vld [vmem:[#allocation2 + $0x4b8] sm:$0xff]
    %v197 = vld [vmem:[#allocation2 + $0x4c0] sm:$0xff]
    %v198 = vld [vmem:[#allocation2 + $0x4c8] sm:$0xff]
    %v199 = vld [vmem:[#allocation2 + $0x4d0] sm:$0xff]
    %v200 = vld [vmem:[#allocation2 + $0x4d8] sm:$0xff]
    %v201 = vld [vmem:[#allocation2 + $0x4e0] sm:$0xff]
    %v202 = vld [vmem:[#allocation2 + $0x4e8] sm:$0xff]
    %v203 = vld [vmem:[#allocation2 + $0x4f0] sm:$0xff]
    %v204 = vld [vmem:[#allocation2 + $0x4f8] sm:$0xff]
    %v205 = vld [vmem:[#allocation2 + $0x500] sm:$0xff]
    %v206 = vld [vmem:[#allocation2 + $0x508] sm:$0xff]
    %v207 = vld [vmem:[#allocation2 + $0x510] sm:$0xff]
    %v208 = vld [vmem:[#allocation2 + $0x518] sm:$0xff]
    %v209 = vld [vmem:[#allocation2 + $0x520] sm:$0xff]
    %v210 = vld [vmem:[#allocation2 + $0x528] sm:$0xff]
    %v211 = vld [vmem:[#allocation2 + $0x530] sm:$0xff]
    %v212 = vld [vmem:[#allocation2 + $0x538] sm:$0xff]
    %v213 = vld [vmem:[#allocation2 + $0x540] sm:$0xff]
    %v214 = vld [vmem:[#allocation2 + $0x548] sm:$0xff]
    %v215 = vld [vmem:[#allocation2 + $0x550] sm:$0xff]
    %v216 = vld [vmem:[#allocation2 + $0x558] sm:$0xff]
    %v217 = vld [vmem:[#allocation2 + $0x560] sm:$0xff]
    %v218 = vld [vmem:[#allocation2 + $0x568] sm:$0xff]
    %v219 = vld [vmem:[#allocation2 + $0x570] sm:$0xff]
    %v220 = vld [vmem:[#allocation2 + $0x578] sm:$0xff]
    %v221 = vld [vmem:[#allocation2 + $0x580] sm:$0xff]
    %v222 = vld [vmem:[#allocation2 + $0x588] sm:$0xff]
    %v223 = vld [vmem:[#allocation2 + $0x590] sm:$0xff]
    %v224 = vld [vmem:[#allocation2 + $0x598] sm:$0xff]
    %v225 = vld [vmem:[#allocation2 + $0x5a0] sm:$0xff]
    %v226 = vld [vmem:[#allocation2 + $0x5a8] sm:$0xff]
    %v227 = vld [vmem:[#allocation2 + $0x5b0] sm:$0xff]
    %v228 = vld [vmem:[#allocation2 + $0x5b8] sm:$0xff]
    %v229 = vld [vmem:[#allocation2 + $0x5c0] sm:$0xff]
    %v230 = vld [vmem:[#allocation2 + $0x5c8] sm:$0xff]
    %v231 = vld [vmem:[#allocation2 + $0x5d0] sm:$0xff]
    %v232 = vld [vmem:[#allocation2 + $0x5d8] sm:$0xff]
    %v233 = vld [vmem:[#allocation2 + $0x5e0] sm:$0xff]
    %v234 = vld [vmem:[#allocation2 + $0x5e8] sm:$0xff]
    %v235 = vld [vmem:[#allocation2 + $0x5f0] sm:$0xff]
    %v236 = vld [vmem:[#allocation2 + $0x5f8] sm:$0xff]
    %v237 = vld [vmem:[%s2] sm:$0xff]
    %v239 = vlaneseq
    %v240 = vshrl.u32 %v239, 7
    %v241 = vsub.s32 0, %v240
    %v242 = vrot.slane %v237, %v241
    %v243 = vlaneseq
    %v244 = vshrl.u32 %v243, 7
    %v245 = vsub.s32 1, %v244
    %v246 = vrot.slane %v237, %v245
    %v247 = vlaneseq
    %v248 = vshrl.u32 %v247, 7
    %v249 = vsub.s32 2, %v248
    %v250 = vrot.slane %v237, %v249
    %v251 = vlaneseq
    %v252 = vshrl.u32 %v251, 7
    %v253 = vsub.s32 3, %v252
    %v254 = vrot.slane %v237, %v253
    %v255 = vlaneseq
    %v256 = vshrl.u32 %v255, 7
    %v257 = vsub.s32 4, %v256
    %v258 = vrot.slane %v237, %v257
    %v259 = vlaneseq
    %v260 = vshrl.u32 %v259, 7
    %v261 = vsub.s32 5, %v260
    %v262 = vrot.slane %v237, %v261
    %v263 = vlaneseq
    %v264 = vshrl.u32 %v263, 7
    %v265 = vsub.s32 6, %v264
    %v266 = vrot.slane %v237, %v265
    %v267 = vlaneseq
    %v268 = vshrl.u32 %v267, 7
    %v269 = vsub.s32 7, %v268
    %v270 = vrot.slane %v237, %v269
    %v295 = vunpack.c.l.b16 %v29
    %v296 = vunpack.c.h.b16 %v29
    %v297 = vunpack.c.l.b16 %v30
    %v298 = vunpack.c.l.b16 %v31
    %v299 = vunpack.c.h.b16 %v31
    %v300 = vunpack.c.l.b16 %v32
    %v301 = vunpack.c.l.b16 %v33
    %v302 = vunpack.c.h.b16 %v33
    %v303 = vunpack.c.l.b16 %v34
    %v304 = vunpack.c.l.b16 %v35
    %v305 = vunpack.c.h.b16 %v35
    %v306 = vunpack.c.l.b16 %v36
    %v307 = vunpack.c.l.b16 %v37
    %v308 = vunpack.c.h.b16 %v37
    %v309 = vunpack.c.l.b16 %v38
    %v310 = vunpack.c.l.b16 %v39
    %v311 = vunpack.c.h.b16 %v39
    %v312 = vunpack.c.l.b16 %v40
    %v313 = vunpack.c.l.b16 %v41
    %v314 = vunpack.c.h.b16 %v41
    %v315 = vunpack.c.l.b16 %v42
    %v316 = vunpack.c.l.b16 %v43
    %v317 = vunpack.c.h.b16 %v43
    %v318 = vunpack.c.l.b16 %v44
    %v319 = vpack.c.b16 %v298, %v295
    %v320 = vpack.c.b16 %v299, %v296
    %v321 = vpack.c.b16 %v300, %v297
    %v322 = vpack.c.b16 %v304, %v301
    %v323 = vpack.c.b16 %v305, %v302
    %v324 = vpack.c.b16 %v306, %v303
    %v325 = vpack.c.b16 %v310, %v307
    %v326 = vpack.c.b16 %v311, %v308
    %v327 = vpack.c.b16 %v312, %v309
    %v328 = vpack.c.b16 %v316, %v313
    %v329 = vpack.c.b16 %v317, %v314
    %v330 = vpack.c.b16 %v318, %v315
    %v535 = vunpack.c.l.b16 %v45
    %v536 = vunpack.c.h.b16 %v45
    %v537 = vunpack.c.l.b16 %v46
    %v538 = vunpack.c.h.b16 %v46
    %v539 = vunpack.c.l.b16 %v47
    %v540 = vunpack.c.h.b16 %v47
    %v541 = vunpack.c.l.b16 %v48
    %v542 = vunpack.c.h.b16 %v48
    %v543 = vunpack.c.l.b16 %v49
    %v544 = vunpack.c.h.b16 %v49
    %v545 = vunpack.c.l.b16 %v50
    %v546 = vunpack.c.h.b16 %v50
    %v547 = vunpack.c.l.b16 %v51
    %v548 = vunpack.c.h.b16 %v51
    %v549 = vunpack.c.l.b16 %v52
    %v550 = vunpack.c.h.b16 %v52
    %v551 = vunpack.c.l.b16 %v53
    %v552 = vunpack.c.h.b16 %v53
    %v553 = vunpack.c.l.b16 %v54
    %v554 = vunpack.c.h.b16 %v54
    %v555 = vunpack.c.l.b16 %v55
    %v556 = vunpack.c.h.b16 %v55
    %v557 = vunpack.c.l.b16 %v56
    %v558 = vunpack.c.h.b16 %v56
    %v559 = vunpack.c.l.b16 %v57
    %v560 = vunpack.c.h.b16 %v57
    %v561 = vunpack.c.l.b16 %v58
    %v562 = vunpack.c.h.b16 %v58
    %v563 = vunpack.c.l.b16 %v59
    %v564 = vunpack.c.h.b16 %v59
    %v565 = vunpack.c.l.b16 %v60
    %v566 = vunpack.c.h.b16 %v60
    %v567 = vunpack.c.l.b16 %v61
    %v568 = vunpack.c.h.b16 %v61
    %v569 = vunpack.c.l.b16 %v62
    %v570 = vunpack.c.h.b16 %v62
    %v571 = vunpack.c.l.b16 %v63
    %v572 = vunpack.c.h.b16 %v63
    %v573 = vunpack.c.l.b16 %v64
    %v574 = vunpack.c.h.b16 %v64
    %v575 = vunpack.c.l.b16 %v65
    %v576 = vunpack.c.h.b16 %v65
    %v577 = vunpack.c.l.b16 %v66
    %v578 = vunpack.c.h.b16 %v66
    %v579 = vunpack.c.l.b16 %v67
    %v580 = vunpack.c.h.b16 %v67
    %v581 = vunpack.c.l.b16 %v68
    %v582 = vunpack.c.h.b16 %v68
    %v583 = vunpack.c.l.b16 %v69
    %v584 = vunpack.c.h.b16 %v69
    %v585 = vunpack.c.l.b16 %v70
    %v586 = vunpack.c.h.b16 %v70
    %v587 = vunpack.c.l.b16 %v71
    %v588 = vunpack.c.h.b16 %v71
    %v589 = vunpack.c.l.b16 %v72
    %v590 = vunpack.c.h.b16 %v72
    %v591 = vunpack.c.l.b16 %v73
    %v592 = vunpack.c.h.b16 %v73
    %v593 = vunpack.c.l.b16 %v74
    %v594 = vunpack.c.h.b16 %v74
    %v595 = vunpack.c.l.b16 %v75
    %v596 = vunpack.c.h.b16 %v75
    %v597 = vunpack.c.l.b16 %v76
    %v598 = vunpack.c.h.b16 %v76
    %v599 = vunpack.c.l.b16 %v77
    %v600 = vunpack.c.h.b16 %v77
    %v601 = vunpack.c.l.b16 %v78
    %v602 = vunpack.c.h.b16 %v78
    %v603 = vunpack.c.l.b16 %v79
    %v604 = vunpack.c.h.b16 %v79
    %v605 = vunpack.c.l.b16 %v80
    %v606 = vunpack.c.h.b16 %v80
    %v607 = vunpack.c.l.b16 %v81
    %v608 = vunpack.c.h.b16 %v81
    %v609 = vunpack.c.l.b16 %v82
    %v610 = vunpack.c.h.b16 %v82
    %v611 = vunpack.c.l.b16 %v83
    %v612 = vunpack.c.h.b16 %v83
    %v613 = vunpack.c.l.b16 %v84
    %v614 = vunpack.c.h.b16 %v84
    %v615 = vunpack.c.l.b16 %v85
    %v616 = vunpack.c.h.b16 %v85
    %v617 = vunpack.c.l.b16 %v86
    %v618 = vunpack.c.h.b16 %v86
    %v619 = vunpack.c.l.b16 %v87
    %v620 = vunpack.c.h.b16 %v87
    %v621 = vunpack.c.l.b16 %v88
    %v622 = vunpack.c.h.b16 %v88
    %v623 = vunpack.c.l.b16 %v89
    %v624 = vunpack.c.h.b16 %v89
    %v625 = vunpack.c.l.b16 %v90
    %v626 = vunpack.c.h.b16 %v90
    %v627 = vunpack.c.l.b16 %v91
    %v628 = vunpack.c.h.b16 %v91
    %v629 = vunpack.c.l.b16 %v92
    %v630 = vunpack.c.h.b16 %v92
    %v631 = vunpack.c.l.b16 %v93
    %v632 = vunpack.c.h.b16 %v93
    %v633 = vunpack.c.l.b16 %v94
    %v634 = vunpack.c.h.b16 %v94
    %v635 = vunpack.c.l.b16 %v95
    %v636 = vunpack.c.h.b16 %v95
    %v637 = vunpack.c.l.b16 %v96
    %v638 = vunpack.c.h.b16 %v96
    %v639 = vunpack.c.l.b16 %v97
    %v640 = vunpack.c.h.b16 %v97
    %v641 = vunpack.c.l.b16 %v98
    %v642 = vunpack.c.h.b16 %v98
    %v643 = vunpack.c.l.b16 %v99
    %v644 = vunpack.c.h.b16 %v99
    %v645 = vunpack.c.l.b16 %v100
    %v646 = vunpack.c.h.b16 %v100
    %v647 = vunpack.c.l.b16 %v101
    %v648 = vunpack.c.h.b16 %v101
    %v649 = vunpack.c.l.b16 %v102
    %v650 = vunpack.c.h.b16 %v102
    %v651 = vunpack.c.l.b16 %v103
    %v652 = vunpack.c.h.b16 %v103
    %v653 = vunpack.c.l.b16 %v104
    %v654 = vunpack.c.h.b16 %v104
    %v655 = vunpack.c.l.b16 %v105
    %v656 = vunpack.c.h.b16 %v105
    %v657 = vunpack.c.l.b16 %v106
    %v658 = vunpack.c.h.b16 %v106
    %v659 = vunpack.c.l.b16 %v107
    %v660 = vunpack.c.h.b16 %v107
    %v661 = vunpack.c.l.b16 %v108
    %v662 = vunpack.c.h.b16 %v108
    %v663 = vunpack.c.l.b16 %v109
    %v664 = vunpack.c.h.b16 %v109
    %v665 = vunpack.c.l.b16 %v110
    %v666 = vunpack.c.h.b16 %v110
    %v667 = vunpack.c.l.b16 %v111
    %v668 = vunpack.c.h.b16 %v111
    %v669 = vunpack.c.l.b16 %v112
    %v670 = vunpack.c.h.b16 %v112
    %v671 = vunpack.c.l.b16 %v113
    %v672 = vunpack.c.h.b16 %v113
    %v673 = vunpack.c.l.b16 %v114
    %v674 = vunpack.c.h.b16 %v114
    %v675 = vunpack.c.l.b16 %v115
    %v676 = vunpack.c.h.b16 %v115
    %v677 = vunpack.c.l.b16 %v116
    %v678 = vunpack.c.h.b16 %v116
    %v679 = vunpack.c.l.b16 %v117
    %v680 = vunpack.c.h.b16 %v117
    %v681 = vunpack.c.l.b16 %v118
    %v682 = vunpack.c.h.b16 %v118
    %v683 = vunpack.c.l.b16 %v119
    %v684 = vunpack.c.h.b16 %v119
    %v685 = vunpack.c.l.b16 %v120
    %v686 = vunpack.c.h.b16 %v120
    %v687 = vunpack.c.l.b16 %v121
    %v688 = vunpack.c.h.b16 %v121
    %v689 = vunpack.c.l.b16 %v122
    %v690 = vunpack.c.h.b16 %v122
    %v691 = vunpack.c.l.b16 %v123
    %v692 = vunpack.c.h.b16 %v123
    %v693 = vunpack.c.l.b16 %v124
    %v694 = vunpack.c.h.b16 %v124
    %v695 = vunpack.c.l.b16 %v125
    %v696 = vunpack.c.h.b16 %v125
    %v697 = vunpack.c.l.b16 %v126
    %v698 = vunpack.c.h.b16 %v126
    %v699 = vunpack.c.l.b16 %v127
    %v700 = vunpack.c.h.b16 %v127
    %v701 = vunpack.c.l.b16 %v128
    %v702 = vunpack.c.h.b16 %v128
    %v703 = vunpack.c.l.b16 %v129
    %v704 = vunpack.c.h.b16 %v129
    %v705 = vunpack.c.l.b16 %v130
    %v706 = vunpack.c.h.b16 %v130
    %v707 = vunpack.c.l.b16 %v131
    %v708 = vunpack.c.h.b16 %v131
    %v709 = vunpack.c.l.b16 %v132
    %v710 = vunpack.c.h.b16 %v132
    %v711 = vunpack.c.l.b16 %v133
    %v712 = vunpack.c.h.b16 %v133
    %v713 = vunpack.c.l.b16 %v134
    %v714 = vunpack.c.h.b16 %v134
    %v715 = vunpack.c.l.b16 %v135
    %v716 = vunpack.c.h.b16 %v135
    %v717 = vunpack.c.l.b16 %v136
    %v718 = vunpack.c.h.b16 %v136
    %v719 = vunpack.c.l.b16 %v137
    %v720 = vunpack.c.h.b16 %v137
    %v721 = vunpack.c.l.b16 %v138
    %v722 = vunpack.c.h.b16 %v138
    %v723 = vunpack.c.l.b16 %v139
    %v724 = vunpack.c.h.b16 %v139
    %v725 = vunpack.c.l.b16 %v140
    %v726 = vunpack.c.h.b16 %v140
    %v727 = vunpack.c.l.b16 %v141
    %v728 = vunpack.c.h.b16 %v141
    %v729 = vunpack.c.l.b16 %v142
    %v730 = vunpack.c.h.b16 %v142
    %v731 = vunpack.c.l.b16 %v143
    %v732 = vunpack.c.h.b16 %v143
    %v733 = vunpack.c.l.b16 %v144
    %v734 = vunpack.c.h.b16 %v144
    %v735 = vunpack.c.l.b16 %v145
    %v736 = vunpack.c.h.b16 %v145
    %v737 = vunpack.c.l.b16 %v146
    %v738 = vunpack.c.h.b16 %v146
    %v739 = vunpack.c.l.b16 %v147
    %v740 = vunpack.c.h.b16 %v147
    %v741 = vunpack.c.l.b16 %v148
    %v742 = vunpack.c.h.b16 %v148
    %v743 = vunpack.c.l.b16 %v149
    %v744 = vunpack.c.h.b16 %v149
    %v745 = vunpack.c.l.b16 %v150
    %v746 = vunpack.c.h.b16 %v150
    %v747 = vunpack.c.l.b16 %v151
    %v748 = vunpack.c.h.b16 %v151
    %v749 = vunpack.c.l.b16 %v152
    %v750 = vunpack.c.h.b16 %v152
    %v751 = vunpack.c.l.b16 %v153
    %v752 = vunpack.c.h.b16 %v153
    %v753 = vunpack.c.l.b16 %v154
    %v754 = vunpack.c.h.b16 %v154
    %v755 = vunpack.c.l.b16 %v155
    %v756 = vunpack.c.h.b16 %v155
    %v757 = vunpack.c.l.b16 %v156
    %v758 = vunpack.c.h.b16 %v156
    %v759 = vunpack.c.l.b16 %v157
    %v760 = vunpack.c.h.b16 %v157
    %v761 = vunpack.c.l.b16 %v158
    %v762 = vunpack.c.h.b16 %v158
    %v763 = vunpack.c.l.b16 %v159
    %v764 = vunpack.c.h.b16 %v159
    %v765 = vunpack.c.l.b16 %v160
    %v766 = vunpack.c.h.b16 %v160
    %v767 = vunpack.c.l.b16 %v161
    %v768 = vunpack.c.h.b16 %v161
    %v769 = vunpack.c.l.b16 %v162
    %v770 = vunpack.c.h.b16 %v162
    %v771 = vunpack.c.l.b16 %v163
    %v772 = vunpack.c.h.b16 %v163
    %v773 = vunpack.c.l.b16 %v164
    %v774 = vunpack.c.h.b16 %v164
    %v775 = vunpack.c.l.b16 %v165
    %v776 = vunpack.c.h.b16 %v165
    %v777 = vunpack.c.l.b16 %v166
    %v778 = vunpack.c.h.b16 %v166
    %v779 = vunpack.c.l.b16 %v167
    %v780 = vunpack.c.h.b16 %v167
    %v781 = vunpack.c.l.b16 %v168
    %v782 = vunpack.c.h.b16 %v168
    %v783 = vunpack.c.l.b16 %v169
    %v784 = vunpack.c.h.b16 %v169
    %v785 = vunpack.c.l.b16 %v170
    %v786 = vunpack.c.h.b16 %v170
    %v787 = vunpack.c.l.b16 %v171
    %v788 = vunpack.c.h.b16 %v171
    %v789 = vunpack.c.l.b16 %v172
    %v790 = vunpack.c.h.b16 %v172
    %v791 = vunpack.c.l.b16 %v173
    %v792 = vunpack.c.h.b16 %v173
    %v793 = vunpack.c.l.b16 %v174
    %v794 = vunpack.c.h.b16 %v174
    %v795 = vunpack.c.l.b16 %v175
    %v796 = vunpack.c.h.b16 %v175
    %v797 = vunpack.c.l.b16 %v176
    %v798 = vunpack.c.h.b16 %v176
    %v799 = vunpack.c.l.b16 %v177
    %v800 = vunpack.c.h.b16 %v177
    %v801 = vunpack.c.l.b16 %v178
    %v802 = vunpack.c.h.b16 %v178
    %v803 = vunpack.c.l.b16 %v179
    %v804 = vunpack.c.h.b16 %v179
    %v805 = vunpack.c.l.b16 %v180
    %v806 = vunpack.c.h.b16 %v180
    %v807 = vunpack.c.l.b16 %v181
    %v808 = vunpack.c.h.b16 %v181
    %v809 = vunpack.c.l.b16 %v182
    %v810 = vunpack.c.h.b16 %v182
    %v811 = vunpack.c.l.b16 %v183
    %v812 = vunpack.c.h.b16 %v183
    %v813 = vunpack.c.l.b16 %v184
    %v814 = vunpack.c.h.b16 %v184
    %v815 = vunpack.c.l.b16 %v185
    %v816 = vunpack.c.h.b16 %v185
    %v817 = vunpack.c.l.b16 %v186
    %v818 = vunpack.c.h.b16 %v186
    %v819 = vunpack.c.l.b16 %v187
    %v820 = vunpack.c.h.b16 %v187
    %v821 = vunpack.c.l.b16 %v188
    %v822 = vunpack.c.h.b16 %v188
    %v823 = vunpack.c.l.b16 %v189
    %v824 = vunpack.c.h.b16 %v189
    %v825 = vunpack.c.l.b16 %v190
    %v826 = vunpack.c.h.b16 %v190
    %v827 = vunpack.c.l.b16 %v191
    %v828 = vunpack.c.h.b16 %v191
    %v829 = vunpack.c.l.b16 %v192
    %v830 = vunpack.c.h.b16 %v192
    %v831 = vunpack.c.l.b16 %v193
    %v832 = vunpack.c.h.b16 %v193
    %v833 = vunpack.c.l.b16 %v194
    %v834 = vunpack.c.h.b16 %v194
    %v835 = vunpack.c.l.b16 %v195
    %v836 = vunpack.c.h.b16 %v195
    %v837 = vunpack.c.l.b16 %v196
    %v838 = vunpack.c.h.b16 %v196
    %v839 = vunpack.c.l.b16 %v197
    %v840 = vunpack.c.h.b16 %v197
    %v841 = vunpack.c.l.b16 %v198
    %v842 = vunpack.c.h.b16 %v198
    %v843 = vunpack.c.l.b16 %v199
    %v844 = vunpack.c.h.b16 %v199
    %v845 = vunpack.c.l.b16 %v200
    %v846 = vunpack.c.h.b16 %v200
    %v847 = vunpack.c.l.b16 %v201
    %v848 = vunpack.c.h.b16 %v201
    %v849 = vunpack.c.l.b16 %v202
    %v850 = vunpack.c.h.b16 %v202
    %v851 = vunpack.c.l.b16 %v203
    %v852 = vunpack.c.h.b16 %v203
    %v853 = vunpack.c.l.b16 %v204
    %v854 = vunpack.c.h.b16 %v204
    %v855 = vunpack.c.l.b16 %v205
    %v856 = vunpack.c.h.b16 %v205
    %v857 = vunpack.c.l.b16 %v206
    %v858 = vunpack.c.h.b16 %v206
    %v859 = vunpack.c.l.b16 %v207
    %v860 = vunpack.c.h.b16 %v207
    %v861 = vunpack.c.l.b16 %v208
    %v862 = vunpack.c.h.b16 %v208
    %v863 = vunpack.c.l.b16 %v209
    %v864 = vunpack.c.h.b16 %v209
    %v865 = vunpack.c.l.b16 %v210
    %v866 = vunpack.c.h.b16 %v210
    %v867 = vunpack.c.l.b16 %v211
    %v868 = vunpack.c.h.b16 %v211
    %v869 = vunpack.c.l.b16 %v212
    %v870 = vunpack.c.h.b16 %v212
    %v871 = vunpack.c.l.b16 %v213
    %v872 = vunpack.c.h.b16 %v213
    %v873 = vunpack.c.l.b16 %v214
    %v874 = vunpack.c.h.b16 %v214
    %v875 = vunpack.c.l.b16 %v215
    %v876 = vunpack.c.h.b16 %v215
    %v877 = vunpack.c.l.b16 %v216
    %v878 = vunpack.c.h.b16 %v216
    %v879 = vunpack.c.l.b16 %v217
    %v880 = vunpack.c.h.b16 %v217
    %v881 = vunpack.c.l.b16 %v218
    %v882 = vunpack.c.h.b16 %v218
    %v883 = vunpack.c.l.b16 %v219
    %v884 = vunpack.c.h.b16 %v219
    %v885 = vunpack.c.l.b16 %v220
    %v886 = vunpack.c.h.b16 %v220
    %v887 = vunpack.c.l.b16 %v221
    %v888 = vunpack.c.h.b16 %v221
    %v889 = vunpack.c.l.b16 %v222
    %v890 = vunpack.c.h.b16 %v222
    %v891 = vunpack.c.l.b16 %v223
    %v892 = vunpack.c.h.b16 %v223
    %v893 = vunpack.c.l.b16 %v224
    %v894 = vunpack.c.h.b16 %v224
    %v895 = vunpack.c.l.b16 %v225
    %v896 = vunpack.c.h.b16 %v225
    %v897 = vunpack.c.l.b16 %v226
    %v898 = vunpack.c.h.b16 %v226
    %v899 = vunpack.c.l.b16 %v227
    %v900 = vunpack.c.h.b16 %v227
    %v901 = vunpack.c.l.b16 %v228
    %v902 = vunpack.c.h.b16 %v228
    %v903 = vunpack.c.l.b16 %v229
    %v904 = vunpack.c.h.b16 %v229
    %v905 = vunpack.c.l.b16 %v230
    %v906 = vunpack.c.h.b16 %v230
    %v907 = vunpack.c.l.b16 %v231
    %v908 = vunpack.c.h.b16 %v231
    %v909 = vunpack.c.l.b16 %v232
    %v910 = vunpack.c.h.b16 %v232
    %v911 = vunpack.c.l.b16 %v233
    %v912 = vunpack.c.h.b16 %v233
    %v913 = vunpack.c.l.b16 %v234
    %v914 = vunpack.c.h.b16 %v234
    %v915 = vunpack.c.l.b16 %v235
    %v916 = vunpack.c.h.b16 %v235
    %v917 = vunpack.c.l.b16 %v236
    %v918 = vunpack.c.h.b16 %v236
    %v919 = vpack.c.b16 %v543, %v535
    %v920 = vpack.c.b16 %v544, %v536
    %v921 = vpack.c.b16 %v545, %v537
    %v922 = vpack.c.b16 %v546, %v538
    %v923 = vpack.c.b16 %v547, %v539
    %v924 = vpack.c.b16 %v548, %v540
    %v925 = vpack.c.b16 %v549, %v541
    %v926 = vpack.c.b16 %v550, %v542
    %v927 = vpack.c.b16 %v559, %v551
    %v928 = vpack.c.b16 %v560, %v552
    %v929 = vpack.c.b16 %v561, %v553
    %v930 = vpack.c.b16 %v562, %v554
    %v931 = vpack.c.b16 %v563, %v555
    %v932 = vpack.c.b16 %v564, %v556
    %v933 = vpack.c.b16 %v565, %v557
    %v934 = vpack.c.b16 %v566, %v558
    %v935 = vpack.c.b16 %v575, %v567
    %v936 = vpack.c.b16 %v576, %v568
    %v937 = vpack.c.b16 %v577, %v569
    %v938 = vpack.c.b16 %v578, %v570
    %v939 = vpack.c.b16 %v579, %v571
    %v940 = vpack.c.b16 %v580, %v572
    %v941 = vpack.c.b16 %v581, %v573
    %v942 = vpack.c.b16 %v582, %v574
    %v943 = vpack.c.b16 %v591, %v583
    %v944 = vpack.c.b16 %v592, %v584
    %v945 = vpack.c.b16 %v593, %v585
    %v946 = vpack.c.b16 %v594, %v586
    %v947 = vpack.c.b16 %v595, %v587
    %v948 = vpack.c.b16 %v596, %v588
    %v949 = vpack.c.b16 %v597, %v589
    %v950 = vpack.c.b16 %v598, %v590
    %v951 = vpack.c.b16 %v607, %v599
    %v952 = vpack.c.b16 %v608, %v600
    %v953 = vpack.c.b16 %v609, %v601
    %v954 = vpack.c.b16 %v610, %v602
    %v955 = vpack.c.b16 %v611, %v603
    %v956 = vpack.c.b16 %v612, %v604
    %v957 = vpack.c.b16 %v613, %v605
    %v958 = vpack.c.b16 %v614, %v606
    %v959 = vpack.c.b16 %v623, %v615
    %v960 = vpack.c.b16 %v624, %v616
    %v961 = vpack.c.b16 %v625, %v617
    %v962 = vpack.c.b16 %v626, %v618
    %v963 = vpack.c.b16 %v627, %v619
    %v964 = vpack.c.b16 %v628, %v620
    %v965 = vpack.c.b16 %v629, %v621
    %v966 = vpack.c.b16 %v630, %v622
    %v967 = vpack.c.b16 %v639, %v631
    %v968 = vpack.c.b16 %v640, %v632
    %v969 = vpack.c.b16 %v641, %v633
    %v970 = vpack.c.b16 %v642, %v634
    %v971 = vpack.c.b16 %v643, %v635
    %v972 = vpack.c.b16 %v644, %v636
    %v973 = vpack.c.b16 %v645, %v637
    %v974 = vpack.c.b16 %v646, %v638
    %v975 = vpack.c.b16 %v655, %v647
    %v976 = vpack.c.b16 %v656, %v648
    %v977 = vpack.c.b16 %v657, %v649
    %v978 = vpack.c.b16 %v658, %v650
    %v979 = vpack.c.b16 %v659, %v651
    %v980 = vpack.c.b16 %v660, %v652
    %v981 = vpack.c.b16 %v661, %v653
    %v982 = vpack.c.b16 %v662, %v654
    %v983 = vpack.c.b16 %v671, %v663
    %v984 = vpack.c.b16 %v672, %v664
    %v985 = vpack.c.b16 %v673, %v665
    %v986 = vpack.c.b16 %v674, %v666
    %v987 = vpack.c.b16 %v675, %v667
    %v988 = vpack.c.b16 %v676, %v668
    %v989 = vpack.c.b16 %v677, %v669
    %v990 = vpack.c.b16 %v678, %v670
    %v991 = vpack.c.b16 %v687, %v679
    %v992 = vpack.c.b16 %v688, %v680
    %v993 = vpack.c.b16 %v689, %v681
    %v994 = vpack.c.b16 %v690, %v682
    %v995 = vpack.c.b16 %v691, %v683
    %v996 = vpack.c.b16 %v692, %v684
    %v997 = vpack.c.b16 %v693, %v685
    %v998 = vpack.c.b16 %v694, %v686
    %v999 = vpack.c.b16 %v703, %v695
    %v1000 = vpack.c.b16 %v704, %v696
    %v1001 = vpack.c.b16 %v705, %v697
    %v1002 = vpack.c.b16 %v706, %v698
    %v1003 = vpack.c.b16 %v707, %v699
    %v1004 = vpack.c.b16 %v708, %v700
    %v1005 = vpack.c.b16 %v709, %v701
    %v1006 = vpack.c.b16 %v710, %v702
    %v1007 = vpack.c.b16 %v719, %v711
    %v1008 = vpack.c.b16 %v720, %v712
    %v1009 = vpack.c.b16 %v721, %v713
    %v1010 = vpack.c.b16 %v722, %v714
    %v1011 = vpack.c.b16 %v723, %v715
    %v1012 = vpack.c.b16 %v724, %v716
    %v1013 = vpack.c.b16 %v725, %v717
    %v1014 = vpack.c.b16 %v726, %v718
    %v1015 = vpack.c.b16 %v735, %v727
    %v1016 = vpack.c.b16 %v736, %v728
    %v1017 = vpack.c.b16 %v737, %v729
    %v1018 = vpack.c.b16 %v738, %v730
    %v1019 = vpack.c.b16 %v739, %v731
    %v1020 = vpack.c.b16 %v740, %v732
    %v1021 = vpack.c.b16 %v741, %v733
    %v1022 = vpack.c.b16 %v742, %v734
    %v1023 = vpack.c.b16 %v751, %v743
    %v1024 = vpack.c.b16 %v752, %v744
    %v1025 = vpack.c.b16 %v753, %v745
    %v1026 = vpack.c.b16 %v754, %v746
    %v1027 = vpack.c.b16 %v755, %v747
    %v1028 = vpack.c.b16 %v756, %v748
    %v1029 = vpack.c.b16 %v757, %v749
    %v1030 = vpack.c.b16 %v758, %v750
    %v1031 = vpack.c.b16 %v767, %v759
    %v1032 = vpack.c.b16 %v768, %v760
    %v1033 = vpack.c.b16 %v769, %v761
    %v1034 = vpack.c.b16 %v770, %v762
    %v1035 = vpack.c.b16 %v771, %v763
    %v1036 = vpack.c.b16 %v772, %v764
    %v1037 = vpack.c.b16 %v773, %v765
    %v1038 = vpack.c.b16 %v774, %v766
    %v1039 = vpack.c.b16 %v783, %v775
    %v1040 = vpack.c.b16 %v784, %v776
    %v1041 = vpack.c.b16 %v785, %v777
    %v1042 = vpack.c.b16 %v786, %v778
    %v1043 = vpack.c.b16 %v787, %v779
    %v1044 = vpack.c.b16 %v788, %v780
    %v1045 = vpack.c.b16 %v789, %v781
    %v1046 = vpack.c.b16 %v790, %v782
    %v1047 = vpack.c.b16 %v799, %v791
    %v1048 = vpack.c.b16 %v800, %v792
    %v1049 = vpack.c.b16 %v801, %v793
    %v1050 = vpack.c.b16 %v802, %v794
    %v1051 = vpack.c.b16 %v803, %v795
    %v1052 = vpack.c.b16 %v804, %v796
    %v1053 = vpack.c.b16 %v805, %v797
    %v1054 = vpack.c.b16 %v806, %v798
    %v1055 = vpack.c.b16 %v815, %v807
    %v1056 = vpack.c.b16 %v816, %v808
    %v1057 = vpack.c.b16 %v817, %v809
    %v1058 = vpack.c.b16 %v818, %v810
    %v1059 = vpack.c.b16 %v819, %v811
    %v1060 = vpack.c.b16 %v820, %v812
    %v1061 = vpack.c.b16 %v821, %v813
    %v1062 = vpack.c.b16 %v822, %v814
    %v1063 = vpack.c.b16 %v831, %v823
    %v1064 = vpack.c.b16 %v832, %v824
    %v1065 = vpack.c.b16 %v833, %v825
    %v1066 = vpack.c.b16 %v834, %v826
    %v1067 = vpack.c.b16 %v835, %v827
    %v1068 = vpack.c.b16 %v836, %v828
    %v1069 = vpack.c.b16 %v837, %v829
    %v1070 = vpack.c.b16 %v838, %v830
    %v1071 = vpack.c.b16 %v847, %v839
    %v1072 = vpack.c.b16 %v848, %v840
    %v1073 = vpack.c.b16 %v849, %v841
    %v1074 = vpack.c.b16 %v850, %v842
    %v1075 = vpack.c.b16 %v851, %v843
    %v1076 = vpack.c.b16 %v852, %v844
    %v1077 = vpack.c.b16 %v853, %v845
    %v1078 = vpack.c.b16 %v854, %v846
    %v1079 = vpack.c.b16 %v863, %v855
    %v1080 = vpack.c.b16 %v864, %v856
    %v1081 = vpack.c.b16 %v865, %v857
    %v1082 = vpack.c.b16 %v866, %v858
    %v1083 = vpack.c.b16 %v867, %v859
    %v1084 = vpack.c.b16 %v868, %v860
    %v1085 = vpack.c.b16 %v869, %v861
    %v1086 = vpack.c.b16 %v870, %v862
    %v1087 = vpack.c.b16 %v879, %v871
    %v1088 = vpack.c.b16 %v880, %v872
    %v1089 = vpack.c.b16 %v881, %v873
    %v1090 = vpack.c.b16 %v882, %v874
    %v1091 = vpack.c.b16 %v883, %v875
    %v1092 = vpack.c.b16 %v884, %v876
    %v1093 = vpack.c.b16 %v885, %v877
    %v1094 = vpack.c.b16 %v886, %v878
    %v1095 = vpack.c.b16 %v895, %v887
    %v1096 = vpack.c.b16 %v896, %v888
    %v1097 = vpack.c.b16 %v897, %v889
    %v1098 = vpack.c.b16 %v898, %v890
    %v1099 = vpack.c.b16 %v899, %v891
    %v1100 = vpack.c.b16 %v900, %v892
    %v1101 = vpack.c.b16 %v901, %v893
    %v1102 = vpack.c.b16 %v902, %v894
    %v1103 = vpack.c.b16 %v911, %v903
    %v1104 = vpack.c.b16 %v912, %v904
    %v1105 = vpack.c.b16 %v913, %v905
    %v1106 = vpack.c.b16 %v914, %v906
    %v1107 = vpack.c.b16 %v915, %v907
    %v1108 = vpack.c.b16 %v916, %v908
    %v1109 = vpack.c.b16 %v917, %v909
    %v1110 = vpack.c.b16 %v918, %v910
    %1303 = vmatprep.subr.bf16.mxu0 %v920
    %1304 = vmatpush1.bf16.msra.mxu0 %v919
    %1305 = vmatprep.subr.bf16.mxu0 %v928
    %1306 = vmatpush1.bf16.msra.mxu0 %v927
    %1307 = vmatprep.subr.bf16.mxu0 %v936
    %1308 = vmatpush1.bf16.msra.mxu0 %v935
    %1309 = vmatprep.subr.bf16.mxu0 %v944
    %1310 = vmatpush1.bf16.msra.mxu0 %v943
    %1311 = vmatprep.subr.bf16.mxu0 %v952
    %1312 = vmatpush1.bf16.msra.mxu0 %v951
    %1313 = vmatprep.subr.bf16.mxu0 %v960
    %1314 = vmatpush1.bf16.msra.mxu0 %v959
    %1315 = vmatprep.subr.bf16.mxu0 %v968
    %1316 = vmatpush1.bf16.msra.mxu0 %v967
    %1317 = vmatprep.subr.bf16.mxu0 %v976
    %1318 = vmatpush1.bf16.msra.mxu0 %v975
    %1319 = vmatprep.subr.bf16.mxu0 %v984
    %1320 = vmatpush1.bf16.msra.mxu0 %v983
    %1321 = vmatprep.subr.bf16.mxu0 %v992
    %1322 = vmatpush1.bf16.msra.mxu0 %v991
    %1323 = vmatprep.subr.bf16.mxu0 %v1000
    %1324 = vmatpush1.bf16.msra.mxu0 %v999
    %1325 = vmatprep.subr.bf16.mxu0 %v1008
    %1326 = vmatpush1.bf16.msra.mxu0 %v1007
    %1327 = vmatprep.subr.bf16.mxu0 %v1016
    %1328 = vmatpush1.bf16.msra.mxu0 %v1015
    %1329 = vmatprep.subr.bf16.mxu0 %v1024
    %1330 = vmatpush1.bf16.msra.mxu0 %v1023
    %1331 = vmatprep.subr.bf16.mxu0 %v1032
    %1332 = vmatpush1.bf16.msra.mxu0 %v1031
    %1333 = vmatprep.subr.bf16.mxu0 %v1040
    %1334 = vmatpush1.bf16.msra.mxu0 %v1039
    %1335 = vmatprep.mubr.bf16.mxu0 %v320
    %1336 = vmatmul.mubr.bf16.gmra.mrb[0].mxu0 %v319
    %v1337 = vpop.f32.mrb[0].mxu0
    %v1338 = vadd.f32 %v242, %v1337
    %v1339 = vpop.f32.mrb[0].mxu0
    %v1340 = vadd.f32 %v246, %v1339
    %v1341 = vpop.f32.mrb[0].mxu0
    %v1342 = vadd.f32 %v242, %v1341
    %v1343 = vpop.f32.mrb[0].mxu0
    %v1344 = vadd.f32 %v246, %v1343
    %1345 = vmatprep.mubr.bf16.mxu0 %v323
    %1346 = vmatmul.mubr.bf16.gmra.mrb[0].mxu0 %v322
    %v1347 = vpop.f32.mrb[0].mxu0
    %v1348 = vadd.f32 %v242, %v1347
    %v1349 = vpop.f32.mrb[0].mxu0
    %v1350 = vadd.f32 %v246, %v1349
    %v1351 = vpop.f32.mrb[0].mxu0
    %v1352 = vadd.f32 %v242, %v1351
    %v1353 = vpop.f32.mrb[0].mxu0
    %v1354 = vadd.f32 %v246, %v1353
    %1355 = vmatprep.mubr.bf16.mxu0 %v326
    %1356 = vmatmul.mubr.bf16.gmra.mrb[0].mxu0 %v325
    %v1357 = vpop.f32.mrb[0].mxu0
    %v1358 = vadd.f32 %v242, %v1357
    %v1359 = vpop.f32.mrb[0].mxu0
    %v1360 = vadd.f32 %v246, %v1359
    %v1361 = vpop.f32.mrb[0].mxu0
    %v1362 = vadd.f32 %v242, %v1361
    %v1363 = vpop.f32.mrb[0].mxu0
    %v1364 = vadd.f32 %v246, %v1363
    %1365 = vmatprep.mubr.bf16.mxu0 %v329
    %1366 = vmatmul.mubr.bf16.gmra.mrb[0].mxu0 %v328
    %v1367 = vpop.f32.mrb[0].mxu0
    %v1368 = vadd.f32 %v242, %v1367
    %v1369 = vpop.f32.mrb[0].mxu0
    %v1370 = vadd.f32 %v246, %v1369
    %v1371 = vpop.f32.mrb[0].mxu0
    %v1372 = vadd.f32 %v242, %v1371
    %v1373 = vpop.f32.mrb[0].mxu0
    %v1374 = vadd.f32 %v246, %v1373
    %1375 = vdwg.mxu0
    %1376 = vmatprep.subr.bf16.mxu0 %v1048
    %1377 = vmatpush1.bf16.msra.mxu0 %v1047
    %1378 = vmatprep.subr.bf16.mxu0 %v1056
    %1379 = vmatpush1.bf16.msra.mxu0 %v1055
    %1380 = vmatprep.subr.bf16.mxu0 %v1064
    %1381 = vmatpush1.bf16.msra.mxu0 %v1063
    %1382 = vmatprep.subr.bf16.mxu0 %v1072
    %1383 = vmatpush1.bf16.msra.mxu0 %v1071
    %1384 = vmatprep.subr.bf16.mxu0 %v1080
    %1385 = vmatpush1.bf16.msra.mxu0 %v1079
    %1386 = vmatprep.subr.bf16.mxu0 %v1088
    %1387 = vmatpush1.bf16.msra.mxu0 %v1087
    %1388 = vmatprep.subr.bf16.mxu0 %v1096
    %1389 = vmatpush1.bf16.msra.mxu0 %v1095
    %1390 = vmatprep.subr.bf16.mxu0 %v1104
    %1391 = vmatpush1.bf16.msra.mxu0 %v1103
    %1392 = vmatprep.subr.bf16.mxu0 0
    %1393 = vmatpush1.bf16.msra.mxu0 0
    %1394 = vmatprep.subr.bf16.mxu0 0
    %1395 = vmatpush1.bf16.msra.mxu0 0
    %1396 = vmatprep.subr.bf16.mxu0 0
    %1397 = vmatpush1.bf16.msra.mxu0 0
    %1398 = vmatprep.subr.bf16.mxu0 0
    %1399 = vmatpush1.bf16.msra.mxu0 0
    %1400 = vmatprep.subr.bf16.mxu0 0
    %1401 = vmatpush1.bf16.msra.mxu0 0
    %1402 = vmatprep.subr.bf16.mxu0 0
    %1403 = vmatpush1.bf16.msra.mxu0 0
    %1404 = vmatprep.subr.bf16.mxu0 0
    %1405 = vmatpush1.bf16.msra.mxu0 0
    %1406 = vmatprep.subr.bf16.mxu0 0
    %1407 = vmatpush1.bf16.msra.mxu0 0
    %1408 = vmatprep.mubr.bf16.mxu0 0
    %1409 = vmatmul.mubr.bf16.gmra.mrb[0].mxu0 %v321
    %v1410 = vpop.f32.mrb[0].mxu0
    %v1411 = vadd.f32 %v1338, %v1410
    %v1412 = vpop.f32.mrb[0].mxu0
    %v1413 = vadd.f32 %v1340, %v1412
    %v1414 = vpop.f32.mrb[0].mxu0
    %v1415 = vadd.f32 %v1342, %v1414
    %v1416 = vpop.f32.mrb[0].mxu0
    %v1417 = vadd.f32 %v1344, %v1416
    %1418 = vmatprep.mubr.bf16.mxu0 0
    %1419 = vmatmul.mubr.bf16.gmra.mrb[0].mxu0 %v324
    %v1420 = vpop.f32.mrb[0].mxu0
    %v1421 = vadd.f32 %v1348, %v1420
    %v1422 = vpop.f32.mrb[0].mxu0
    %v1423 = vadd.f32 %v1350, %v1422
    %v1424 = vpop.f32.mrb[0].mxu0
    %v1425 = vadd.f32 %v1352, %v1424
    %v1426 = vpop.f32.mrb[0].mxu0
    %v1427 = vadd.f32 %v1354, %v1426
    %1428 = vmatprep.mubr.bf16.mxu0 0
    %1429 = vmatmul.mubr.bf16.gmra.mrb[0].mxu0 %v327
    %v1430 = vpop.f32.mrb[0].mxu0
    %v1431 = vadd.f32 %v1358, %v1430
    %v1432 = vpop.f32.mrb[0].mxu0
    %v1433 = vadd.f32 %v1360, %v1432
    %v1434 = vpop.f32.mrb[0].mxu0
    %v1435 = vadd.f32 %v1362, %v1434
    %v1436 = vpop.f32.mrb[0].mxu0
    %v1437 = vadd.f32 %v1364, %v1436
    %1438 = vmatprep.mubr.bf16.mxu0 0
    %1439 = vmatmul.mubr.bf16.gmra.mrb[0].mxu0 %v330
    %v1440 = vpop.f32.mrb[0].mxu0
    %v1441 = vadd.f32 %v1368, %v1440
    %v1442 = vpop.f32.mrb[0].mxu0
    %v1443 = vadd.f32 %v1370, %v1442
    %v1444 = vpop.f32.mrb[0].mxu0
    %v1445 = vadd.f32 %v1372, %v1444
    %v1446 = vpop.f32.mrb[0].mxu0
    %v1447 = vadd.f32 %v1374, %v1446
    %1448 = vdwg.mxu0
    %1449 = vmatprep.subr.bf16.mxu0 %v922
    %1450 = vmatpush1.bf16.msra.mxu0 %v921
    %1451 = vmatprep.subr.bf16.mxu0 %v930
    %1452 = vmatpush1.bf16.msra.mxu0 %v929
    %1453 = vmatprep.subr.bf16.mxu0 %v938
    %1454 = vmatpush1.bf16.msra.mxu0 %v937
    %1455 = vmatprep.subr.bf16.mxu0 %v946
    %1456 = vmatpush1.bf16.msra.mxu0 %v945
    %1457 = vmatprep.subr.bf16.mxu0 %v954
    %1458 = vmatpush1.bf16.msra.mxu0 %v953
    %1459 = vmatprep.subr.bf16.mxu0 %v962
    %1460 = vmatpush1.bf16.msra.mxu0 %v961
    %1461 = vmatprep.subr.bf16.mxu0 %v970
    %1462 = vmatpush1.bf16.msra.mxu0 %v969
    %1463 = vmatprep.subr.bf16.mxu0 %v978
    %1464 = vmatpush1.bf16.msra.mxu0 %v977
    %1465 = vmatprep.subr.bf16.mxu0 %v986
    %1466 = vmatpush1.bf16.msra.mxu0 %v985
    %1467 = vmatprep.subr.bf16.mxu0 %v994
    %1468 = vmatpush1.bf16.msra.mxu0 %v993
    %1469 = vmatprep.subr.bf16.mxu0 %v1002
    %1470 = vmatpush1.bf16.msra.mxu0 %v1001
    %1471 = vmatprep.subr.bf16.mxu0 %v1010
    %1472 = vmatpush1.bf16.msra.mxu0 %v1009
    %1473 = vmatprep.subr.bf16.mxu0 %v1018
    %1474 = vmatpush1.bf16.msra.mxu0 %v1017
    %1475 = vmatprep.subr.bf16.mxu0 %v1026
    %1476 = vmatpush1.bf16.msra.mxu0 %v1025
    %1477 = vmatprep.subr.bf16.mxu0 %v1034
    %1478 = vmatpush1.bf16.msra.mxu0 %v1033
    %1479 = vmatprep.subr.bf16.mxu0 %v1042
    %1480 = vmatpush1.bf16.msra.mxu0 %v1041
    %1481 = vmatprep.mubr.bf16.mxu0 %v320
    %1482 = vmatmul.mubr.bf16.gmra.mrb[0].mxu0 %v319
    %v1483 = vpop.f32.mrb[0].mxu0
    %v1484 = vadd.f32 %v250, %v1483
    %v1485 = vpop.f32.mrb[0].mxu0
    %v1486 = vadd.f32 %v254, %v1485
    %v1487 = vpop.f32.mrb[0].mxu0
    %v1488 = vadd.f32 %v250, %v1487
    %v1489 = vpop.f32.mrb[0].mxu0
    %v1490 = vadd.f32 %v254, %v1489
    %1491 = vmatprep.mubr.bf16.mxu0 %v323
    %1492 = vmatmul.mubr.bf16.gmra.mrb[0].mxu0 %v322
    %v1493 = vpop.f32.mrb[0].mxu0
    %v1494 = vadd.f32 %v250, %v1493
    %v1495 = vpop.f32.mrb[0].mxu0
    %v1496 = vadd.f32 %v254, %v1495
    %v1497 = vpop.f32.mrb[0].mxu0
    %v1498 = vadd.f32 %v250, %v1497
    %v1499 = vpop.f32.mrb[0].mxu0
    %v1500 = vadd.f32 %v254, %v1499
    %1501 = vmatprep.mubr.bf16.mxu0 %v326
    %1502 = vmatmul.mubr.bf16.gmra.mrb[0].mxu0 %v325
    %v1503 = vpop.f32.mrb[0].mxu0
    %v1504 = vadd.f32 %v250, %v1503
    %v1505 = vpop.f32.mrb[0].mxu0
    %v1506 = vadd.f32 %v254, %v1505
    %v1507 = vpop.f32.mrb[0].mxu0
    %v1508 = vadd.f32 %v250, %v1507
    %v1509 = vpop.f32.mrb[0].mxu0
    %v1510 = vadd.f32 %v254, %v1509
    %1511 = vmatprep.mubr.bf16.mxu0 %v329
    %1512 = vmatmul.mubr.bf16.gmra.mrb[0].mxu0 %v328
    %v1513 = vpop.f32.mrb[0].mxu0
    %v1514 = vadd.f32 %v250, %v1513
    %v1515 = vpop.f32.mrb[0].mxu0
    %v1516 = vadd.f32 %v254, %v1515
    %v1517 = vpop.f32.mrb[0].mxu0
    %v1518 = vadd.f32 %v250, %v1517
    %v1519 = vpop.f32.mrb[0].mxu0
    %v1520 = vadd.f32 %v254, %v1519
    %1521 = vdwg.mxu0
    %1522 = vmatprep.subr.bf16.mxu0 %v1050
    %1523 = vmatpush1.bf16.msra.mxu0 %v1049
    %1524 = vmatprep.subr.bf16.mxu0 %v1058
    %1525 = vmatpush1.bf16.msra.mxu0 %v1057
    %1526 = vmatprep.subr.bf16.mxu0 %v1066
    %1527 = vmatpush1.bf16.msra.mxu0 %v1065
    %1528 = vmatprep.subr.bf16.mxu0 %v1074
    %1529 = vmatpush1.bf16.msra.mxu0 %v1073
    %1530 = vmatprep.subr.bf16.mxu0 %v1082
    %1531 = vmatpush1.bf16.msra.mxu0 %v1081
    %1532 = vmatprep.subr.bf16.mxu0 %v1090
    %1533 = vmatpush1.bf16.msra.mxu0 %v1089
    %1534 = vmatprep.subr.bf16.mxu0 %v1098
    %1535 = vmatpush1.bf16.msra.mxu0 %v1097
    %1536 = vmatprep.subr.bf16.mxu0 %v1106
    %1537 = vmatpush1.bf16.msra.mxu0 %v1105
    %1538 = vmatprep.subr.bf16.mxu0 0
    %1539 = vmatpush1.bf16.msra.mxu0 0
    %1540 = vmatprep.subr.bf16.mxu0 0
    %1541 = vmatpush1.bf16.msra.mxu0 0
    %1542 = vmatprep.subr.bf16.mxu0 0
    %1543 = vmatpush1.bf16.msra.mxu0 0
    %1544 = vmatprep.subr.bf16.mxu0 0
    %1545 = vmatpush1.bf16.msra.mxu0 0
    %1546 = vmatprep.subr.bf16.mxu0 0
    %1547 = vmatpush1.bf16.msra.mxu0 0
    %1548 = vmatprep.subr.bf16.mxu0 0
    %1549 = vmatpush1.bf16.msra.mxu0 0
    %1550 = vmatprep.subr.bf16.mxu0 0
    %1551 = vmatpush1.bf16.msra.mxu0 0
    %1552 = vmatprep.subr.bf16.mxu0 0
    %1553 = vmatpush1.bf16.msra.mxu0 0
    %1554 = vmatprep.mubr.bf16.mxu0 0
    %1555 = vmatmul.mubr.bf16.gmra.mrb[0].mxu0 %v321
    %v1556 = vpop.f32.mrb[0].mxu0
    %v1557 = vadd.f32 %v1484, %v1556
    %v1558 = vpop.f32.mrb[0].mxu0
    %v1559 = vadd.f32 %v1486, %v1558
    %v1560 = vpop.f32.mrb[0].mxu0
    %v1561 = vadd.f32 %v1488, %v1560
    %v1562 = vpop.f32.mrb[0].mxu0
    %v1563 = vadd.f32 %v1490, %v1562
    %1564 = vmatprep.mubr.bf16.mxu0 0
    %1565 = vmatmul.mubr.bf16.gmra.mrb[0].mxu0 %v324
    %v1566 = vpop.f32.mrb[0].mxu0
    %v1567 = vadd.f32 %v1494, %v1566
    %v1568 = vpop.f32.mrb[0].mxu0
    %v1569 = vadd.f32 %v1496, %v1568
    %v1570 = vpop.f32.mrb[0].mxu0
    %v1571 = vadd.f32 %v1498, %v1570
    %v1572 = vpop.f32.mrb[0].mxu0
    %v1573 = vadd.f32 %v1500, %v1572
    %1574 = vmatprep.mubr.bf16.mxu0 0
    %1575 = vmatmul.mubr.bf16.gmra.mrb[0].mxu0 %v327
    %v1576 = vpop.f32.mrb[0].mxu0
    %v1577 = vadd.f32 %v1504, %v1576
    %v1578 = vpop.f32.mrb[0].mxu0
    %v1579 = vadd.f32 %v1506, %v1578
    %v1580 = vpop.f32.mrb[0].mxu0
    %v1581 = vadd.f32 %v1508, %v1580
    %v1582 = vpop.f32.mrb[0].mxu0
    %v1583 = vadd.f32 %v1510, %v1582
    %1584 = vmatprep.mubr.bf16.mxu0 0
    %1585 = vmatmul.mubr.bf16.gmra.mrb[0].mxu0 %v330
    %v1586 = vpop.f32.mrb[0].mxu0
    %v1587 = vadd.f32 %v1514, %v1586
    %v1588 = vpop.f32.mrb[0].mxu0
    %v1589 = vadd.f32 %v1516, %v1588
    %v1590 = vpop.f32.mrb[0].mxu0
    %v1591 = vadd.f32 %v1518, %v1590
    %v1592 = vpop.f32.mrb[0].mxu0
    %v1593 = vadd.f32 %v1520, %v1592
    %1594 = vdwg.mxu0
    %1595 = vmatprep.subr.bf16.mxu0 %v924
    %1596 = vmatpush1.bf16.msra.mxu0 %v923
    %1597 = vmatprep.subr.bf16.mxu0 %v932
    %1598 = vmatpush1.bf16.msra.mxu0 %v931
    %1599 = vmatprep.subr.bf16.mxu0 %v940
    %1600 = vmatpush1.bf16.msra.mxu0 %v939
    %1601 = vmatprep.subr.bf16.mxu0 %v948
    %1602 = vmatpush1.bf16.msra.mxu0 %v947
    %1603 = vmatprep.subr.bf16.mxu0 %v956
    %1604 = vmatpush1.bf16.msra.mxu0 %v955
    %1605 = vmatprep.subr.bf16.mxu0 %v964
    %1606 = vmatpush1.bf16.msra.mxu0 %v963
    %1607 = vmatprep.subr.bf16.mxu0 %v972
    %1608 = vmatpush1.bf16.msra.mxu0 %v971
    %1609 = vmatprep.subr.bf16.mxu0 %v980
    %1610 = vmatpush1.bf16.msra.mxu0 %v979
    %1611 = vmatprep.subr.bf16.mxu0 %v988
    %1612 = vmatpush1.bf16.msra.mxu0 %v987
    %1613 = vmatprep.subr.bf16.mxu0 %v996
    %1614 = vmatpush1.bf16.msra.mxu0 %v995
    %1615 = vmatprep.subr.bf16.mxu0 %v1004
    %1616 = vmatpush1.bf16.msra.mxu0 %v1003
    %1617 = vmatprep.subr.bf16.mxu0 %v1012
    %1618 = vmatpush1.bf16.msra.mxu0 %v1011
    %1619 = vmatprep.subr.bf16.mxu0 %v1020
    %1620 = vmatpush1.bf16.msra.mxu0 %v1019
    %1621 = vmatprep.subr.bf16.mxu0 %v1028
    %1622 = vmatpush1.bf16.msra.mxu0 %v1027
    %1623 = vmatprep.subr.bf16.mxu0 %v1036
    %1624 = vmatpush1.bf16.msra.mxu0 %v1035
    %1625 = vmatprep.subr.bf16.mxu0 %v1044
    %1626 = vmatpush1.bf16.msra.mxu0 %v1043
    %1627 = vmatprep.mubr.bf16.mxu0 %v320
    %1628 = vmatmul.mubr.bf16.gmra.mrb[0].mxu0 %v319
    %v1629 = vpop.f32.mrb[0].mxu0
    %v1630 = vadd.f32 %v258, %v1629
    %v1631 = vpop.f32.mrb[0].mxu0
    %v1632 = vadd.f32 %v262, %v1631
    %v1633 = vpop.f32.mrb[0].mxu0
    %v1634 = vadd.f32 %v258, %v1633
    %v1635 = vpop.f32.mrb[0].mxu0
    %v1636 = vadd.f32 %v262, %v1635
    %1637 = vmatprep.mubr.bf16.mxu0 %v323
    %1638 = vmatmul.mubr.bf16.gmra.mrb[0].mxu0 %v322
    %v1639 = vpop.f32.mrb[0].mxu0
    %v1640 = vadd.f32 %v258, %v1639
    %v1641 = vpop.f32.mrb[0].mxu0
    %v1642 = vadd.f32 %v262, %v1641
    %v1643 = vpop.f32.mrb[0].mxu0
    %v1644 = vadd.f32 %v258, %v1643
    %v1645 = vpop.f32.mrb[0].mxu0
    %v1646 = vadd.f32 %v262, %v1645
    %1647 = vmatprep.mubr.bf16.mxu0 %v326
    %1648 = vmatmul.mubr.bf16.gmra.mrb[0].mxu0 %v325
    %v1649 = vpop.f32.mrb[0].mxu0
    %v1650 = vadd.f32 %v258, %v1649
    %v1651 = vpop.f32.mrb[0].mxu0
    %v1652 = vadd.f32 %v262, %v1651
    %v1653 = vpop.f32.mrb[0].mxu0
    %v1654 = vadd.f32 %v258, %v1653
    %v1655 = vpop.f32.mrb[0].mxu0
    %v1656 = vadd.f32 %v262, %v1655
    %1657 = vmatprep.mubr.bf16.mxu0 %v329
    %1658 = vmatmul.mubr.bf16.gmra.mrb[0].mxu0 %v328
    %v1659 = vpop.f32.mrb[0].mxu0
    %v1660 = vadd.f32 %v258, %v1659
    %v1661 = vpop.f32.mrb[0].mxu0
    %v1662 = vadd.f32 %v262, %v1661
    %v1663 = vpop.f32.mrb[0].mxu0
    %v1664 = vadd.f32 %v258, %v1663
    %v1665 = vpop.f32.mrb[0].mxu0
    %v1666 = vadd.f32 %v262, %v1665
    %1667 = vdwg.mxu0
    %1668 = vmatprep.subr.bf16.mxu0 %v1052
    %1669 = vmatpush1.bf16.msra.mxu0 %v1051
    %1670 = vmatprep.subr.bf16.mxu0 %v1060
    %1671 = vmatpush1.bf16.msra.mxu0 %v1059
    %1672 = vmatprep.subr.bf16.mxu0 %v1068
    %1673 = vmatpush1.bf16.msra.mxu0 %v1067
    %1674 = vmatprep.subr.bf16.mxu0 %v1076
    %1675 = vmatpush1.bf16.msra.mxu0 %v1075
    %1676 = vmatprep.subr.bf16.mxu0 %v1084
    %1677 = vmatpush1.bf16.msra.mxu0 %v1083
    %1678 = vmatprep.subr.bf16.mxu0 %v1092
    %1679 = vmatpush1.bf16.msra.mxu0 %v1091
    %1680 = vmatprep.subr.bf16.mxu0 %v1100
    %1681 = vmatpush1.bf16.msra.mxu0 %v1099
    %1682 = vmatprep.subr.bf16.mxu0 %v1108
    %1683 = vmatpush1.bf16.msra.mxu0 %v1107
    %1684 = vmatprep.subr.bf16.mxu0 0
    %1685 = vmatpush1.bf16.msra.mxu0 0
    %1686 = vmatprep.subr.bf16.mxu0 0
    %1687 = vmatpush1.bf16.msra.mxu0 0
    %1688 = vmatprep.subr.bf16.mxu0 0
    %1689 = vmatpush1.bf16.msra.mxu0 0
    %1690 = vmatprep.subr.bf16.mxu0 0
    %1691 = vmatpush1.bf16.msra.mxu0 0
    %1692 = vmatprep.subr.bf16.mxu0 0
    %1693 = vmatpush1.bf16.msra.mxu0 0
    %1694 = vmatprep.subr.bf16.mxu0 0
    %1695 = vmatpush1.bf16.msra.mxu0 0
    %1696 = vmatprep.subr.bf16.mxu0 0
    %1697 = vmatpush1.bf16.msra.mxu0 0
    %1698 = vmatprep.subr.bf16.mxu0 0
    %1699 = vmatpush1.bf16.msra.mxu0 0
    %1700 = vmatprep.mubr.bf16.mxu0 0
    %1701 = vmatmul.mubr.bf16.gmra.mrb[0].mxu0 %v321
    %v1702 = vpop.f32.mrb[0].mxu0
    %v1703 = vadd.f32 %v1630, %v1702
    %v1704 = vpop.f32.mrb[0].mxu0
    %v1705 = vadd.f32 %v1632, %v1704
    %v1706 = vpop.f32.mrb[0].mxu0
    %v1707 = vadd.f32 %v1634, %v1706
    %v1708 = vpop.f32.mrb[0].mxu0
    %v1709 = vadd.f32 %v1636, %v1708
    %1710 = vmatprep.mubr.bf16.mxu0 0
    %1711 = vmatmul.mubr.bf16.gmra.mrb[0].mxu0 %v324
    %v1712 = vpop.f32.mrb[0].mxu0
    %v1713 = vadd.f32 %v1640, %v1712
    %v1714 = vpop.f32.mrb[0].mxu0
    %v1715 = vadd.f32 %v1642, %v1714
    %v1716 = vpop.f32.mrb[0].mxu0
    %v1717 = vadd.f32 %v1644, %v1716
    %v1718 = vpop.f32.mrb[0].mxu0
    %v1719 = vadd.f32 %v1646, %v1718
    %1720 = vmatprep.mubr.bf16.mxu0 0
    %1721 = vmatmul.mubr.bf16.gmra.mrb[0].mxu0 %v327
    %v1722 = vpop.f32.mrb[0].mxu0
    %v1723 = vadd.f32 %v1650, %v1722
    %v1724 = vpop.f32.mrb[0].mxu0
    %v1725 = vadd.f32 %v1652, %v1724
    %v1726 = vpop.f32.mrb[0].mxu0
    %v1727 = vadd.f32 %v1654, %v1726
    %v1728 = vpop.f32.mrb[0].mxu0
    %v1729 = vadd.f32 %v1656, %v1728
    %1730 = vmatprep.mubr.bf16.mxu0 0
    %1731 = vmatmul.mubr.bf16.gmra.mrb[0].mxu0 %v330
    %v1732 = vpop.f32.mrb[0].mxu0
    %v1733 = vadd.f32 %v1660, %v1732
    %v1734 = vpop.f32.mrb[0].mxu0
    %v1735 = vadd.f32 %v1662, %v1734
    %v1736 = vpop.f32.mrb[0].mxu0
    %v1737 = vadd.f32 %v1664, %v1736
    %v1738 = vpop.f32.mrb[0].mxu0
    %v1739 = vadd.f32 %v1666, %v1738
    %1740 = vdwg.mxu0
    %1741 = vmatprep.subr.bf16.mxu0 %v926
    %1742 = vmatpush1.bf16.msra.mxu0 %v925
    %1743 = vmatprep.subr.bf16.mxu0 %v934
    %1744 = vmatpush1.bf16.msra.mxu0 %v933
    %1745 = vmatprep.subr.bf16.mxu0 %v942
    %1746 = vmatpush1.bf16.msra.mxu0 %v941
    %1747 = vmatprep.subr.bf16.mxu0 %v950
    %1748 = vmatpush1.bf16.msra.mxu0 %v949
    %1749 = vmatprep.subr.bf16.mxu0 %v958
    %1750 = vmatpush1.bf16.msra.mxu0 %v957
    %1751 = vmatprep.subr.bf16.mxu0 %v966
    %1752 = vmatpush1.bf16.msra.mxu0 %v965
    %1753 = vmatprep.subr.bf16.mxu0 %v974
    %1754 = vmatpush1.bf16.msra.mxu0 %v973
    %1755 = vmatprep.subr.bf16.mxu0 %v982
    %1756 = vmatpush1.bf16.msra.mxu0 %v981
    %1757 = vmatprep.subr.bf16.mxu0 %v990
    %1758 = vmatpush1.bf16.msra.mxu0 %v989
    %1759 = vmatprep.subr.bf16.mxu0 %v998
    %1760 = vmatpush1.bf16.msra.mxu0 %v997
    %1761 = vmatprep.subr.bf16.mxu0 %v1006
    %1762 = vmatpush1.bf16.msra.mxu0 %v1005
    %1763 = vmatprep.subr.bf16.mxu0 %v1014
    %1764 = vmatpush1.bf16.msra.mxu0 %v1013
    %1765 = vmatprep.subr.bf16.mxu0 %v1022
    %1766 = vmatpush1.bf16.msra.mxu0 %v1021
    %1767 = vmatprep.subr.bf16.mxu0 %v1030
    %1768 = vmatpush1.bf16.msra.mxu0 %v1029
    %1769 = vmatprep.subr.bf16.mxu0 %v1038
    %1770 = vmatpush1.bf16.msra.mxu0 %v1037
    %1771 = vmatprep.subr.bf16.mxu0 %v1046
    %1772 = vmatpush1.bf16.msra.mxu0 %v1045
    %1773 = vmatprep.mubr.bf16.mxu0 %v320
    %1774 = vmatmul.mubr.bf16.gmra.mrb[0].mxu0 %v319
    %v1775 = vpop.f32.mrb[0].mxu0
    %v1776 = vadd.f32 %v266, %v1775
    %v1777 = vpop.f32.mrb[0].mxu0
    %v1778 = vadd.f32 %v270, %v1777
    %v1779 = vpop.f32.mrb[0].mxu0
    %v1780 = vadd.f32 %v266, %v1779
    %v1781 = vpop.f32.mrb[0].mxu0
    %v1782 = vadd.f32 %v270, %v1781
    %1783 = vmatprep.mubr.bf16.mxu0 %v323
    %1784 = vmatmul.mubr.bf16.gmra.mrb[0].mxu0 %v322
    %v1785 = vpop.f32.mrb[0].mxu0
    %v1786 = vadd.f32 %v266, %v1785
    %v1787 = vpop.f32.mrb[0].mxu0
    %v1788 = vadd.f32 %v270, %v1787
    %v1789 = vpop.f32.mrb[0].mxu0
    %v1790 = vadd.f32 %v266, %v1789
    %v1791 = vpop.f32.mrb[0].mxu0
    %v1792 = vadd.f32 %v270, %v1791
    %1793 = vmatprep.mubr.bf16.mxu0 %v326
    %1794 = vmatmul.mubr.bf16.gmra.mrb[0].mxu0 %v325
    %v1795 = vpop.f32.mrb[0].mxu0
    %v1796 = vadd.f32 %v266, %v1795
    %v1797 = vpop.f32.mrb[0].mxu0
    %v1798 = vadd.f32 %v270, %v1797
    %v1799 = vpop.f32.mrb[0].mxu0
    %v1800 = vadd.f32 %v266, %v1799
    %v1801 = vpop.f32.mrb[0].mxu0
    %v1802 = vadd.f32 %v270, %v1801
    %1803 = vmatprep.mubr.bf16.mxu0 %v329
    %1804 = vmatmul.mubr.bf16.gmra.mrb[0].mxu0 %v328
    %v1805 = vpop.f32.mrb[0].mxu0
    %v1806 = vadd.f32 %v266, %v1805
    %v1807 = vpop.f32.mrb[0].mxu0
    %v1808 = vadd.f32 %v270, %v1807
    %v1809 = vpop.f32.mrb[0].mxu0
    %v1810 = vadd.f32 %v266, %v1809
    %v1811 = vpop.f32.mrb[0].mxu0
    %v1812 = vadd.f32 %v270, %v1811
    %1813 = vdwg.mxu0
    %1814 = vmatprep.subr.bf16.mxu0 %v1054
    %1815 = vmatpush1.bf16.msra.mxu0 %v1053
    %1816 = vmatprep.subr.bf16.mxu0 %v1062
    %1817 = vmatpush1.bf16.msra.mxu0 %v1061
    %1818 = vmatprep.subr.bf16.mxu0 %v1070
    %1819 = vmatpush1.bf16.msra.mxu0 %v1069
    %1820 = vmatprep.subr.bf16.mxu0 %v1078
    %1821 = vmatpush1.bf16.msra.mxu0 %v1077
    %1822 = vmatprep.subr.bf16.mxu0 %v1086
    %1823 = vmatpush1.bf16.msra.mxu0 %v1085
    %1824 = vmatprep.subr.bf16.mxu0 %v1094
    %1825 = vmatpush1.bf16.msra.mxu0 %v1093
    %1826 = vmatprep.subr.bf16.mxu0 %v1102
    %1827 = vmatpush1.bf16.msra.mxu0 %v1101
    %1828 = vmatprep.subr.bf16.mxu0 %v1110
    %1829 = vmatpush1.bf16.msra.mxu0 %v1109
    %1830 = vmatprep.subr.bf16.mxu0 0
    %1831 = vmatpush1.bf16.msra.mxu0 0
    %1832 = vmatprep.subr.bf16.mxu0 0
    %1833 = vmatpush1.bf16.msra.mxu0 0
    %1834 = vmatprep.subr.bf16.mxu0 0
    %1835 = vmatpush1.bf16.msra.mxu0 0
    %1836 = vmatprep.subr.bf16.mxu0 0
    %1837 = vmatpush1.bf16.msra.mxu0 0
    %1838 = vmatprep.subr.bf16.mxu0 0
    %1839 = vmatpush1.bf16.msra.mxu0 0
    %1840 = vmatprep.subr.bf16.mxu0 0
    %1841 = vmatpush1.bf16.msra.mxu0 0
    %1842 = vmatprep.subr.bf16.mxu0 0
    %1843 = vmatpush1.bf16.msra.mxu0 0
    %1844 = vmatprep.subr.bf16.mxu0 0
    %1845 = vmatpush1.bf16.msra.mxu0 0
    %1846 = vmatprep.mubr.bf16.mxu0 0
    %1847 = vmatmul.mubr.bf16.gmra.mrb[0].mxu0 %v321
    %v1848 = vpop.f32.mrb[0].mxu0
    %v1849 = vadd.f32 %v1776, %v1848
    %v1850 = vpop.f32.mrb[0].mxu0
    %v1851 = vadd.f32 %v1778, %v1850
    %v1852 = vpop.f32.mrb[0].mxu0
    %v1853 = vadd.f32 %v1780, %v1852
    %v1854 = vpop.f32.mrb[0].mxu0
    %v1855 = vadd.f32 %v1782, %v1854
    %1856 = vmatprep.mubr.bf16.mxu0 0
    %1857 = vmatmul.mubr.bf16.gmra.mrb[0].mxu0 %v324
    %v1858 = vpop.f32.mrb[0].mxu0
    %v1859 = vadd.f32 %v1786, %v1858
    %v1860 = vpop.f32.mrb[0].mxu0
    %v1861 = vadd.f32 %v1788, %v1860
    %v1862 = vpop.f32.mrb[0].mxu0
    %v1863 = vadd.f32 %v1790, %v1862
    %v1864 = vpop.f32.mrb[0].mxu0
    %v1865 = vadd.f32 %v1792, %v1864
    %1866 = vmatprep.mubr.bf16.mxu0 0
    %1867 = vmatmul.mubr.bf16.gmra.mrb[0].mxu0 %v327
    %v1868 = vpop.f32.mrb[0].mxu0
    %v1869 = vadd.f32 %v1796, %v1868
    %v1870 = vpop.f32.mrb[0].mxu0
    %v1871 = vadd.f32 %v1798, %v1870
    %v1872 = vpop.f32.mrb[0].mxu0
    %v1873 = vadd.f32 %v1800, %v1872
    %v1874 = vpop.f32.mrb[0].mxu0
    %v1875 = vadd.f32 %v1802, %v1874
    %1876 = vmatprep.mubr.bf16.mxu0 0
    %1877 = vmatmul.mubr.bf16.gmra.mrb[0].mxu0 %v330
    %v1878 = vpop.f32.mrb[0].mxu0
    %v1879 = vadd.f32 %v1806, %v1878
    %v1880 = vpop.f32.mrb[0].mxu0
    %v1881 = vadd.f32 %v1808, %v1880
    %v1882 = vpop.f32.mrb[0].mxu0
    %v1883 = vadd.f32 %v1810, %v1882
    %v1884 = vpop.f32.mrb[0].mxu0
    %v1885 = vadd.f32 %v1812, %v1884
    %1886 = vdwg.mxu0
    %1887 = vst [vmem:[%s3] sm:$0xff] %v1411
    %1888 = vst [vmem:[%s3 + $0x8] sm:$0xff] %v1413
    %1889 = vst [vmem:[%s3 + $0x10] sm:$0xff] %v1557
    %1890 = vst [vmem:[%s3 + $0x18] sm:$0xff] %v1559
    %1891 = vst [vmem:[%s3 + $0x20] sm:$0xff] %v1703
    %1892 = vst [vmem:[%s3 + $0x28] sm:$0xff] %v1705
    %1893 = vst [vmem:[%s3 + $0x30] sm:$0xff] %v1849
    %1894 = vst [vmem:[%s3 + $0x38] sm:$0xff] %v1851
    %1895 = vst [vmem:[%s3 + $0x40] sm:$0xff] %v1415
    %1896 = vst [vmem:[%s3 + $0x48] sm:$0xff] %v1417
    %1897 = vst [vmem:[%s3 + $0x50] sm:$0xff] %v1561
    %1898 = vst [vmem:[%s3 + $0x58] sm:$0xff] %v1563
    %1899 = vst [vmem:[%s3 + $0x60] sm:$0xff] %v1707
    %1900 = vst [vmem:[%s3 + $0x68] sm:$0xff] %v1709
    %1901 = vst [vmem:[%s3 + $0x70] sm:$0xff] %v1853
    %1902 = vst [vmem:[%s3 + $0x78] sm:$0xff] %v1855
    %1903 = vst [vmem:[%s3 + $0x80] sm:$0xff] %v1421
    %1904 = vst [vmem:[%s3 + $0x88] sm:$0xff] %v1423
    %1905 = vst [vmem:[%s3 + $0x90] sm:$0xff] %v1567
    %1906 = vst [vmem:[%s3 + $0x98] sm:$0xff] %v1569
    %1907 = vst [vmem:[%s3 + $0xa0] sm:$0xff] %v1713
    %1908 = vst [vmem:[%s3 + $0xa8] sm:$0xff] %v1715
    %1909 = vst [vmem:[%s3 + $0xb0] sm:$0xff] %v1859
    %1910 = vst [vmem:[%s3 + $0xb8] sm:$0xff] %v1861
    %1911 = vst [vmem:[%s3 + $0xc0] sm:$0xff] %v1425
    %1912 = vst [vmem:[%s3 + $0xc8] sm:$0xff] %v1427
    %1913 = vst [vmem:[%s3 + $0xd0] sm:$0xff] %v1571
    %1914 = vst [vmem:[%s3 + $0xd8] sm:$0xff] %v1573
    %1915 = vst [vmem:[%s3 + $0xe0] sm:$0xff] %v1717
    %1916 = vst [vmem:[%s3 + $0xe8] sm:$0xff] %v1719
    %1917 = vst [vmem:[%s3 + $0xf0] sm:$0xff] %v1863
    %1918 = vst [vmem:[%s3 + $0xf8] sm:$0xff] %v1865
    %1919 = vst [vmem:[%s3 + $0x100] sm:$0xff] %v1431
    %1920 = vst [vmem:[%s3 + $0x108] sm:$0xff] %v1433
    %1921 = vst [vmem:[%s3 + $0x110] sm:$0xff] %v1577
    %1922 = vst [vmem:[%s3 + $0x118] sm:$0xff] %v1579
    %1923 = vst [vmem:[%s3 + $0x120] sm:$0xff] %v1723
    %1924 = vst [vmem:[%s3 + $0x128] sm:$0xff] %v1725
    %1925 = vst [vmem:[%s3 + $0x130] sm:$0xff] %v1869
    %1926 = vst [vmem:[%s3 + $0x138] sm:$0xff] %v1871
    %1927 = vst [vmem:[%s3 + $0x140] sm:$0xff] %v1435
    %1928 = vst [vmem:[%s3 + $0x148] sm:$0xff] %v1437
    %1929 = vst [vmem:[%s3 + $0x150] sm:$0xff] %v1581
    %1930 = vst [vmem:[%s3 + $0x158] sm:$0xff] %v1583
    %1931 = vst [vmem:[%s3 + $0x160] sm:$0xff] %v1727
    %1932 = vst [vmem:[%s3 + $0x168] sm:$0xff] %v1729
    %1933 = vst [vmem:[%s3 + $0x170] sm:$0xff] %v1873
    %1934 = vst [vmem:[%s3 + $0x178] sm:$0xff] %v1875
    %1935 = vst [vmem:[%s3 + $0x180] sm:$0xff] %v1441
    %1936 = vst [vmem:[%s3 + $0x188] sm:$0xff] %v1443
    %1937 = vst [vmem:[%s3 + $0x190] sm:$0xff] %v1587
    %1938 = vst [vmem:[%s3 + $0x198] sm:$0xff] %v1589
    %1939 = vst [vmem:[%s3 + $0x1a0] sm:$0xff] %v1733
    %1940 = vst [vmem:[%s3 + $0x1a8] sm:$0xff] %v1735
    %1941 = vst [vmem:[%s3 + $0x1b0] sm:$0xff] %v1879
    %1942 = vst [vmem:[%s3 + $0x1b8] sm:$0xff] %v1881
    %1943 = vst [vmem:[%s3 + $0x1c0] sm:$0xff] %v1445
    %1944 = vst [vmem:[%s3 + $0x1c8] sm:$0xff] %v1447
    %1945 = vst [vmem:[%s3 + $0x1d0] sm:$0xff] %v1591
    %1946 = vst [vmem:[%s3 + $0x1d8] sm:$0xff] %v1593
    %1947 = vst [vmem:[%s3 + $0x1e0] sm:$0xff] %v1737
    %1948 = vst [vmem:[%s3 + $0x1e8] sm:$0xff] %v1739
    %1949 = vst [vmem:[%s3 + $0x1f0] sm:$0xff] %v1883
    %1950 = vst [vmem:[%s3 + $0x1f8] sm:$0xff] %v1885
    // Predicated region
    $region18: #{lstm_forward.2} parent=1 // pred_check
      _
    $region19: #{lstm_forward.2} parent=1 // pred_check_branch
      %1952 = sbr.rel (0) target = $region21
    $region20: #{lstm_forward.2} parent=1 // pred_region
      _
    $region21: #{lstm_forward.2} parent=1 // pred_fallthru
      _
    // Predicated region
    $region22: #{lstm_forward.2} parent=1 // pred_check
      _
    $region23: #{lstm_forward.2} parent=1 // pred_check_branch
      %1954 = sbr.rel (0) target = $region25
    $region24: #{lstm_forward.2} parent=1 // pred_region
      _
    $region25: #{lstm_forward.2} parent=1 // pred_fallthru
      _
    %1955 = vsyncpa [#allocation3], 1

// kernel: lstm_forward.3
$region0: #{lstm_forward.3}
  #allocation0 [shape = 'u32[]', space=smem, size = 0x4, offset = 0x4, fixed_abs, tag = 'smem constant byte address 0x4 - core index']
  #allocation1 [shape = 'u32[144,128]{1,0:T(1,128)}', space=vmem, size = 0x12000, scoped, tag = 'internal scratch']
  #allocation2 [shape = 'f32[8,128]{1,0:T(8,128)}', space=vmem, size = 0x1000, scoped, tag = 'scratch operand']
  #allocation3 [shape = 'f32[8,128]{1,0:T(8,128)}', space=vmem, size = 0x1000, scoped, tag = 'scratch operand']
  #allocation4 [shape = 'f32[8,128]{1,0:T(8,128)}', space=vmem, size = 0x1000, scoped, tag = 'scratch operand']
  #allocation5 [shape = 'f32[8,128]{1,0:T(8,128)}', space=vmem, size = 0x1000, scoped, tag = 'scratch operand']
  #allocation6 [shape = 'f32[8,128]{1,0:T(8,128)}', space=vmem, size = 0x1000, scoped, tag = 'scratch operand']
  #allocation7 [shape = 'f32[8,128]{1,0:T(8,128)}', space=vmem, size = 0x1000, scoped, tag = 'scratch operand']
  #allocation8 [shape = 'f32[1,1]{1,0:T(1,128)S(1)}', space=vmem, size = 0x200, scoped, tag = 'scoped memory for lstm_forward.3']
  %s0 = inlined_call_operand.vmem [shape: f32[8,8,1024], index: 0, kind: input, shape index: {}, may-alias: {0,1}]
  %s1 = inlined_call_operand.vmem [shape: f32[8,8,1024], index: 1, kind: input, shape index: {}, may-alias: {0,1}]
  %s2 = inlined_call_operand.vmem [shape: bf16[128,512], index: 2, kind: input, shape index: {}]
  %s3 = inlined_call_operand.vmem [shape: bf16[128,512], index: 3, kind: input, shape index: {}]
  %s4 = inlined_call_operand.vmem [shape: f32[1,128], index: 4, kind: input, shape index: {}]
  %s5 = inlined_call_operand.vmem [shape: f32[1,128], index: 5, kind: input, shape index: {}]
  %s6 = inlined_call_operand.<no memory space> [shape: f32[1,1], index: 6, kind: input, shape index: {}]
  %s7 = inlined_call_operand.vmem [shape: f32[8,1], index: 7, kind: output, shape index: {}]
  %s8 = sld [smem:[#allocation0]]
  $region92: #{lstm_forward.3} parent=0
    _
  %s10 = ssub.s32 1, %s8
  %s11 = scalar_select 0, %s10, %s8
  %v12 = vstv %s6
  %13 = vst [vmem:[#allocation8] sm:$0x1] %v12
  $region1: #{lstm_forward.3} parent=0
    #allocation9 [shape = 'u8[131072]{0}', space=vmem, size = 0x20000, scoped, tag = 'input window, operand 0, single buffered']
    #allocation10 [shape = 'u8[131072]{0}', space=vmem, size = 0x20000, scoped, tag = 'input window, operand 1, single buffered']
    // Predicated region
    $region2: #{lstm_forward.3} parent=1 // pred_check
      _
    $region3: #{lstm_forward.3} parent=1 // pred_check_branch
      %15 = sbr.rel (0) target = $region5
    $region4: #{lstm_forward.3} parent=1 // pred_region
      // Predicated region
      $region6: #{lstm_forward.3} parent=4 // pred_check
        _
      $region7: #{lstm_forward.3} parent=4 // pred_check_branch
        %17 = sbr.rel (0) target = $region9
      $region8: #{lstm_forward.3} parent=4 // pred_region
        // Predicated region
        $region10: #{lstm_forward.3} parent=8 // pred_check
          _
        $region11: #{lstm_forward.3} parent=8 // pred_check_branch
          %19 = sbr.rel (0) target = $region13
        $region12: #{lstm_forward.3} parent=8 // pred_region
          loop: start=0, step=1, limit=1
          $region14: #{lstm_forward.3} parent=12 // loop_pre_header
            _
          $region15: #{lstm_forward.3} parent=12 // loop_header
            %s21 = sphi 0, %s25
            %p22 = scmp.ge.s32.totalorder %s21, 1
            %s26 = sphi %s0, %s0
            %s27 = sphi [#allocation9], [#allocation9]
          $region16: #{lstm_forward.3} parent=12 // loop_header_branch
            %24 = sbr.rel (%p22) target = $region20
          $region17: #{lstm_forward.3} parent=12 // loop_body
            %v28 = vld [vmem:[%s26] sm:$0xff]
            %29 = vst [vmem:[%s27] sm:$0xff] %v28
            %v30 = vld [vmem:[%s26 + $0x8] sm:$0xff]
            %31 = vst [vmem:[%s27 + $0x8] sm:$0xff] %v30
            %v32 = vld [vmem:[%s26 + $0x10] sm:$0xff]
            %33 = vst [vmem:[%s27 + $0x10] sm:$0xff] %v32
            %v34 = vld [vmem:[%s26 + $0x18] sm:$0xff]
            %35 = vst [vmem:[%s27 + $0x18] sm:$0xff] %v34
            %v36 = vld [vmem:[%s26 + $0x40] sm:$0xff]
            %37 = vst [vmem:[%s27 + $0x20] sm:$0xff] %v36
            %v38 = vld [vmem:[%s26 + $0x48] sm:$0xff]
            %39 = vst [vmem:[%s27 + $0x28] sm:$0xff] %v38
            %v40 = vld [vmem:[%s26 + $0x50] sm:$0xff]
            %41 = vst [vmem:[%s27 + $0x30] sm:$0xff] %v40
            %v42 = vld [vmem:[%s26 + $0x58] sm:$0xff]
            %43 = vst [vmem:[%s27 + $0x38] sm:$0xff] %v42
            %v44 = vld [vmem:[%s26 + $0x80] sm:$0xff]
            %45 = vst [vmem:[%s27 + $0x40] sm:$0xff] %v44
            %v46 = vld [vmem:[%s26 + $0x88] sm:$0xff]
            %47 = vst [vmem:[%s27 + $0x48] sm:$0xff] %v46
            %v48 = vld [vmem:[%s26 + $0x90] sm:$0xff]
            %49 = vst [vmem:[%s27 + $0x50] sm:$0xff] %v48
            %v50 = vld [vmem:[%s26 + $0x98] sm:$0xff]
            %51 = vst [vmem:[%s27 + $0x58] sm:$0xff] %v50
            %v52 = vld [vmem:[%s26 + $0xc0] sm:$0xff]
            %53 = vst [vmem:[%s27 + $0x60] sm:$0xff] %v52
            %v54 = vld [vmem:[%s26 + $0xc8] sm:$0xff]
            %55 = vst [vmem:[%s27 + $0x68] sm:$0xff] %v54
            %v56 = vld [vmem:[%s26 + $0xd0] sm:$0xff]
            %57 = vst [vmem:[%s27 + $0x70] sm:$0xff] %v56
            %v58 = vld [vmem:[%s26 + $0xd8] sm:$0xff]
            %59 = vst [vmem:[%s27 + $0x78] sm:$0xff] %v58
            %v60 = vld [vmem:[%s26 + $0x100] sm:$0xff]
            %61 = vst [vmem:[%s27 + $0x80] sm:$0xff] %v60
            %v62 = vld [vmem:[%s26 + $0x108] sm:$0xff]
            %63 = vst [vmem:[%s27 + $0x88] sm:$0xff] %v62
            %v64 = vld [vmem:[%s26 + $0x110] sm:$0xff]
            %65 = vst [vmem:[%s27 + $0x90] sm:$0xff] %v64
            %v66 = vld [vmem:[%s26 + $0x118] sm:$0xff]
            %67 = vst [vmem:[%s27 + $0x98] sm:$0xff] %v66
            %v68 = vld [vmem:[%s26 + $0x140] sm:$0xff]
            %69 = vst [vmem:[%s27 + $0xa0] sm:$0xff] %v68
            %v70 = vld [vmem:[%s26 + $0x148] sm:$0xff]
            %71 = vst [vmem:[%s27 + $0xa8] sm:$0xff] %v70
            %v72 = vld [vmem:[%s26 + $0x150] sm:$0xff]
            %73 = vst [vmem:[%s27 + $0xb0] sm:$0xff] %v72
            %v74 = vld [vmem:[%s26 + $0x158] sm:$0xff]
            %75 = vst [vmem:[%s27 + $0xb8] sm:$0xff] %v74
            %v76 = vld [vmem:[%s26 + $0x180] sm:$0xff]
            %77 = vst [vmem:[%s27 + $0xc0] sm:$0xff] %v76
            %v78 = vld [vmem:[%s26 + $0x188] sm:$0xff]
            %79 = vst [vmem:[%s27 + $0xc8] sm:$0xff] %v78
            %v80 = vld [vmem:[%s26 + $0x190] sm:$0xff]
            %81 = vst [vmem:[%s27 + $0xd0] sm:$0xff] %v80
            %v82 = vld [vmem:[%s26 + $0x198] sm:$0xff]
            %83 = vst [vmem:[%s27 + $0xd8] sm:$0xff] %v82
            %v84 = vld [vmem:[%s26 + $0x1c0] sm:$0xff]
            %85 = vst [vmem:[%s27 + $0xe0] sm:$0xff] %v84
            %v86 = vld [vmem:[%s26 + $0x1c8] sm:$0xff]
            %87 = vst [vmem:[%s27 + $0xe8] sm:$0xff] %v86
            %v88 = vld [vmem:[%s26 + $0x1d0] sm:$0xff]
            %89 = vst [vmem:[%s27 + $0xf0] sm:$0xff] %v88
            %v90 = vld [vmem:[%s26 + $0x1d8] sm:$0xff]
            %91 = vst [vmem:[%s27 + $0xf8] sm:$0xff] %v90
          $region18: #{lstm_forward.3} parent=12 // loop_footer
            %s25 = sadd.s32 1, %s21
          $region19: #{lstm_forward.3} parent=12 // loop_footer_branch
            %20 = sbr.rel target = $region15
          $region20: #{lstm_forward.3} parent=12 // loop_exit
            _
        $region13: #{lstm_forward.3} parent=8 // pred_fallthru
          _
        // Predicated region
        $region21: #{lstm_forward.3} parent=8 // pred_check
          _
        $region22: #{lstm_forward.3} parent=8 // pred_check_branch
          %93 = sbr.rel target = $region24
        $region23: #{lstm_forward.3} parent=8 // pred_region
          _
        $region24: #{lstm_forward.3} parent=8 // pred_fallthru
          _
      $region9: #{lstm_forward.3} parent=4 // pred_fallthru
        _
      %94 = vnop
    $region5: #{lstm_forward.3} parent=1 // pred_fallthru
      _
    // Predicated region
    $region25: #{lstm_forward.3} parent=1 // pred_check
      _
    $region26: #{lstm_forward.3} parent=1 // pred_check_branch
      %96 = sbr.rel (0) target = $region28
    $region27: #{lstm_forward.3} parent=1 // pred_region
      %s97 = ssub.s32 0, 0
      %s98 = smul.u32 8, %s97
      %s99 = smul.addr %s98, 8
      %s100 = sadd.s32 4, %s99
      %s101 = smul.addr %s100, 8
      %s102 = scalar_lea.vmem %s1, %s101
      // Predicated region
      $region29: #{lstm_forward.3} parent=27 // pred_check
        _
      $region30: #{lstm_forward.3} parent=27 // pred_check_branch
        %104 = sbr.rel (0) target = $region32
      $region31: #{lstm_forward.3} parent=27 // pred_region
        // Predicated region
        $region33: #{lstm_forward.3} parent=31 // pred_check
          _
        $region34: #{lstm_forward.3} parent=31 // pred_check_branch
          %106 = sbr.rel (0) target = $region36
        $region35: #{lstm_forward.3} parent=31 // pred_region
          loop: start=0, step=1, limit=1
          $region37: #{lstm_forward.3} parent=35 // loop_pre_header
            _
          $region38: #{lstm_forward.3} parent=35 // loop_header
            %s108 = sphi 0, %s112
            %p109 = scmp.ge.s32.totalorder %s108, 1
            %s113 = sphi %s102, %s102
            %s114 = sphi [#allocation10], [#allocation10]
          $region39: #{lstm_forward.3} parent=35 // loop_header_branch
            %111 = sbr.rel (%p109) target = $region43
          $region40: #{lstm_forward.3} parent=35 // loop_body
            %v115 = vld [vmem:[%s113] sm:$0xff]
            %116 = vst [vmem:[%s114] sm:$0xff] %v115
            %v117 = vld [vmem:[%s113 + $0x8] sm:$0xff]
            %118 = vst [vmem:[%s114 + $0x8] sm:$0xff] %v117
            %v119 = vld [vmem:[%s113 + $0x10] sm:$0xff]
            %120 = vst [vmem:[%s114 + $0x10] sm:$0xff] %v119
            %v121 = vld [vmem:[%s113 + $0x18] sm:$0xff]
            %122 = vst [vmem:[%s114 + $0x18] sm:$0xff] %v121
            %v123 = vld [vmem:[%s113 + $0x40] sm:$0xff]
            %124 = vst [vmem:[%s114 + $0x20] sm:$0xff] %v123
            %v125 = vld [vmem:[%s113 + $0x48] sm:$0xff]
            %126 = vst [vmem:[%s114 + $0x28] sm:$0xff] %v125
            %v127 = vld [vmem:[%s113 + $0x50] sm:$0xff]
            %128 = vst [vmem:[%s114 + $0x30] sm:$0xff] %v127
            %v129 = vld [vmem:[%s113 + $0x58] sm:$0xff]
            %130 = vst [vmem:[%s114 + $0x38] sm:$0xff] %v129
            %v131 = vld [vmem:[%s113 + $0x80] sm:$0xff]
            %132 = vst [vmem:[%s114 + $0x40] sm:$0xff] %v131
            %v133 = vld [vmem:[%s113 + $0x88] sm:$0xff]
            %134 = vst [vmem:[%s114 + $0x48] sm:$0xff] %v133
            %v135 = vld [vmem:[%s113 + $0x90] sm:$0xff]
            %136 = vst [vmem:[%s114 + $0x50] sm:$0xff] %v135
            %v137 = vld [vmem:[%s113 + $0x98] sm:$0xff]
            %138 = vst [vmem:[%s114 + $0x58] sm:$0xff] %v137
            %v139 = vld [vmem:[%s113 + $0xc0] sm:$0xff]
            %140 = vst [vmem:[%s114 + $0x60] sm:$0xff] %v139
            %v141 = vld [vmem:[%s113 + $0xc8] sm:$0xff]
            %142 = vst [vmem:[%s114 + $0x68] sm:$0xff] %v141
            %v143 = vld [vmem:[%s113 + $0xd0] sm:$0xff]
            %144 = vst [vmem:[%s114 + $0x70] sm:$0xff] %v143
            %v145 = vld [vmem:[%s113 + $0xd8] sm:$0xff]
            %146 = vst [vmem:[%s114 + $0x78] sm:$0xff] %v145
            %v147 = vld [vmem:[%s113 + $0x100] sm:$0xff]
            %148 = vst [vmem:[%s114 + $0x80] sm:$0xff] %v147
            %v149 = vld [vmem:[%s113 + $0x108] sm:$0xff]
            %150 = vst [vmem:[%s114 + $0x88] sm:$0xff] %v149
            %v151 = vld [vmem:[%s113 + $0x110] sm:$0xff]
            %152 = vst [vmem:[%s114 + $0x90] sm:$0xff] %v151
            %v153 = vld [vmem:[%s113 + $0x118] sm:$0xff]
            %154 = vst [vmem:[%s114 + $0x98] sm:$0xff] %v153
            %v155 = vld [vmem:[%s113 + $0x140] sm:$0xff]
            %156 = vst [vmem:[%s114 + $0xa0] sm:$0xff] %v155
            %v157 = vld [vmem:[%s113 + $0x148] sm:$0xff]
            %158 = vst [vmem:[%s114 + $0xa8] sm:$0xff] %v157
            %v159 = vld [vmem:[%s113 + $0x150] sm:$0xff]
            %160 = vst [vmem:[%s114 + $0xb0] sm:$0xff] %v159
            %v161 = vld [vmem:[%s113 + $0x158] sm:$0xff]
            %162 = vst [vmem:[%s114 + $0xb8] sm:$0xff] %v161
            %v163 = vld [vmem:[%s113 + $0x180] sm:$0xff]
            %164 = vst [vmem:[%s114 + $0xc0] sm:$0xff] %v163
            %v165 = vld [vmem:[%s113 + $0x188] sm:$0xff]
            %166 = vst [vmem:[%s114 + $0xc8] sm:$0xff] %v165
            %v167 = vld [vmem:[%s113 + $0x190] sm:$0xff]
            %168 = vst [vmem:[%s114 + $0xd0] sm:$0xff] %v167
            %v169 = vld [vmem:[%s113 + $0x198] sm:$0xff]
            %170 = vst [vmem:[%s114 + $0xd8] sm:$0xff] %v169
            %v171 = vld [vmem:[%s113 + $0x1c0] sm:$0xff]
            %172 = vst [vmem:[%s114 + $0xe0] sm:$0xff] %v171
            %v173 = vld [vmem:[%s113 + $0x1c8] sm:$0xff]
            %174 = vst [vmem:[%s114 + $0xe8] sm:$0xff] %v173
            %v175 = vld [vmem:[%s113 + $0x1d0] sm:$0xff]
            %176 = vst [vmem:[%s114 + $0xf0] sm:$0xff] %v175
            %v177 = vld [vmem:[%s113 + $0x1d8] sm:$0xff]
            %178 = vst [vmem:[%s114 + $0xf8] sm:$0xff] %v177
          $region41: #{lstm_forward.3} parent=35 // loop_footer
            %s112 = sadd.s32 1, %s108
          $region42: #{lstm_forward.3} parent=35 // loop_footer_branch
            %107 = sbr.rel target = $region38
          $region43: #{lstm_forward.3} parent=35 // loop_exit
            _
        $region36: #{lstm_forward.3} parent=31 // pred_fallthru
          _
        // Predicated region
        $region44: #{lstm_forward.3} parent=31 // pred_check
          _
        $region45: #{lstm_forward.3} parent=31 // pred_check_branch
          %180 = sbr.rel target = $region47
        $region46: #{lstm_forward.3} parent=31 // pred_region
          _
        $region47: #{lstm_forward.3} parent=31 // pred_fallthru
          _
      $region32: #{lstm_forward.3} parent=27 // pred_fallthru
        _
      %181 = vnop
    $region28: #{lstm_forward.3} parent=1 // pred_fallthru
      _
    // Predicated region
    $region48: #{lstm_forward.3} parent=1 // pred_check
      _
    $region49: #{lstm_forward.3} parent=1 // pred_check_branch
      %183 = sbr.rel (0) target = $region51
    $region50: #{lstm_forward.3} parent=1 // pred_region
      _
    $region51: #{lstm_forward.3} parent=1 // pred_fallthru
      _
    // Predicated region
    $region52: #{lstm_forward.3} parent=1 // pred_check
      _
    $region53: #{lstm_forward.3} parent=1 // pred_check_branch
      %185 = sbr.rel (0) target = $region55
    $region54: #{lstm_forward.3} parent=1 // pred_region
      _
    $region55: #{lstm_forward.3} parent=1 // pred_fallthru
      _
    // Predicated region
    $region56: #{lstm_forward.3} parent=1 // pred_check
      _
    $region57: #{lstm_forward.3} parent=1 // pred_check_branch
      %187 = sbr.rel (0) target = $region59
    $region58: #{lstm_forward.3} parent=1 // pred_region
      _
    $region59: #{lstm_forward.3} parent=1 // pred_fallthru
      _
    // Predicated region
    $region60: #{lstm_forward.3} parent=1 // pred_check
      _
    $region61: #{lstm_forward.3} parent=1 // pred_check_branch
      %189 = sbr.rel (0) target = $region63
    $region62: #{lstm_forward.3} parent=1 // pred_region
      _
    $region63: #{lstm_forward.3} parent=1 // pred_fallthru
      _
    // Predicated region
    $region64: #{lstm_forward.3} parent=1 // pred_check
      _
    $region65: #{lstm_forward.3} parent=1 // pred_check_branch
      %191 = sbr.rel (0) target = $region67
    $region66: #{lstm_forward.3} parent=1 // pred_region
      _
    $region67: #{lstm_forward.3} parent=1 // pred_fallthru
      _
    // Predicated region
    $region68: #{lstm_forward.3} parent=1 // pred_check
      _
    $region69: #{lstm_forward.3} parent=1 // pred_check_branch
      %193 = sbr.rel (0) target = $region71
    $region70: #{lstm_forward.3} parent=1 // pred_region
      _
    $region71: #{lstm_forward.3} parent=1 // pred_fallthru
      _
    // Predicated region
    $region72: #{lstm_forward.3} parent=1 // pred_check
      _
    $region73: #{lstm_forward.3} parent=1 // pred_check_branch
      %195 = sbr.rel (0) target = $region75
    $region74: #{lstm_forward.3} parent=1 // pred_region
      _
    $region75: #{lstm_forward.3} parent=1 // pred_fallthru
      _
    %s196 = ssub.s32 0, 0
    %s197 = smul.u32 8, %s196
    %p199 = scmp.eq.s32.totalorder 0, 0
    // Predicated region
    $region76: #{lstm_forward.3} parent=1 // pred_check
      %p200 = pneg %p199
    $region77: #{lstm_forward.3} parent=1 // pred_check_branch
      %202 = sbr.rel (%p200) target = $region79
    $region78: #{lstm_forward.3} parent=1 // pred_region
      %203 = vst [vmem:[#allocation2] sm:$0xff] 0.0
      %204 = vst [vmem:[#allocation3] sm:$0xff] 0.0
      %205 = vst [vmem:[#allocation4] sm:$0xff] 0.0
      %206 = vst [vmem:[#allocation5] sm:$0xff] 0.0
      %207 = vst [vmem:[#allocation6] sm:$0xff] 0.0
      %208 = vst [vmem:[#allocation7] sm:$0xff] 0.0
    $region79: #{lstm_forward.3} parent=1 // pred_fallthru
      _
    %v209 = vld [vmem:[%s2] sm:$0xff]
    %v210 = vld [vmem:[%s2 + $0x8] sm:$0xff]
    %v211 = vld [vmem:[%s2 + $0x10] sm:$0xff]
    %v212 = vld [vmem:[%s2 + $0x18] sm:$0xff]
    %v213 = vld [vmem:[%s2 + $0x20] sm:$0xff]
    %v214 = vld [vmem:[%s2 + $0x28] sm:$0xff]
    %v215 = vld [vmem:[%s2 + $0x30] sm:$0xff]
    %v216 = vld [vmem:[%s2 + $0x38] sm:$0xff]
    %v217 = vld [vmem:[%s2 + $0x40] sm:$0xff]
    %v218 = vld [vmem:[%s2 + $0x48] sm:$0xff]
    %v219 = vld [vmem:[%s2 + $0x50] sm:$0xff]
    %v220 = vld [vmem:[%s2 + $0x58] sm:$0xff]
    %v221 = vld [vmem:[%s2 + $0x60] sm:$0xff]
    %v222 = vld [vmem:[%s2 + $0x68] sm:$0xff]
    %v223 = vld [vmem:[%s2 + $0x70] sm:$0xff]
    %v224 = vld [vmem:[%s2 + $0x78] sm:$0xff]
    %v225 = vld [vmem:[%s2 + $0x80] sm:$0xff]
    %v226 = vld [vmem:[%s2 + $0x88] sm:$0xff]
    %v227 = vld [vmem:[%s2 + $0x90] sm:$0xff]
    %v228 = vld [vmem:[%s2 + $0x98] sm:$0xff]
    %v229 = vld [vmem:[%s2 + $0xa0] sm:$0xff]
    %v230 = vld [vmem:[%s2 + $0xa8] sm:$0xff]
    %v231 = vld [vmem:[%s2 + $0xb0] sm:$0xff]
    %v232 = vld [vmem:[%s2 + $0xb8] sm:$0xff]
    %v233 = vld [vmem:[%s2 + $0xc0] sm:$0xff]
    %v234 = vld [vmem:[%s2 + $0xc8] sm:$0xff]
    %v235 = vld [vmem:[%s2 + $0xd0] sm:$0xff]
    %v236 = vld [vmem:[%s2 + $0xd8] sm:$0xff]
    %v237 = vld [vmem:[%s2 + $0xe0] sm:$0xff]
    %v238 = vld [vmem:[%s2 + $0xe8] sm:$0xff]
    %v239 = vld [vmem:[%s2 + $0xf0] sm:$0xff]
    %v240 = vld [vmem:[%s2 + $0xf8] sm:$0xff]
    %v241 = vld [vmem:[%s3] sm:$0xff]
    %v242 = vld [vmem:[%s3 + $0x8] sm:$0xff]
    %v243 = vld [vmem:[%s3 + $0x10] sm:$0xff]
    %v244 = vld [vmem:[%s3 + $0x18] sm:$0xff]
    %v245 = vld [vmem:[%s3 + $0x20] sm:$0xff]
    %v246 = vld [vmem:[%s3 + $0x28] sm:$0xff]
    %v247 = vld [vmem:[%s3 + $0x30] sm:$0xff]
    %v248 = vld [vmem:[%s3 + $0x38] sm:$0xff]
    %v249 = vld [vmem:[%s3 + $0x40] sm:$0xff]
    %v250 = vld [vmem:[%s3 + $0x48] sm:$0xff]
    %v251 = vld [vmem:[%s3 + $0x50] sm:$0xff]
    %v252 = vld [vmem:[%s3 + $0x58] sm:$0xff]
    %v253 = vld [vmem:[%s3 + $0x60] sm:$0xff]
    %v254 = vld [vmem:[%s3 + $0x68] sm:$0xff]
    %v255 = vld [vmem:[%s3 + $0x70] sm:$0xff]
    %v256 = vld [vmem:[%s3 + $0x78] sm:$0xff]
    %v257 = vld [vmem:[%s3 + $0x80] sm:$0xff]
    %v258 = vld [vmem:[%s3 + $0x88] sm:$0xff]
    %v259 = vld [vmem:[%s3 + $0x90] sm:$0xff]
    %v260 = vld [vmem:[%s3 + $0x98] sm:$0xff]
    %v261 = vld [vmem:[%s3 + $0xa0] sm:$0xff]
    %v262 = vld [vmem:[%s3 + $0xa8] sm:$0xff]
    %v263 = vld [vmem:[%s3 + $0xb0] sm:$0xff]
    %v264 = vld [vmem:[%s3 + $0xb8] sm:$0xff]
    %v265 = vld [vmem:[%s3 + $0xc0] sm:$0xff]
    %v266 = vld [vmem:[%s3 + $0xc8] sm:$0xff]
    %v267 = vld [vmem:[%s3 + $0xd0] sm:$0xff]
    %v268 = vld [vmem:[%s3 + $0xd8] sm:$0xff]
    %v269 = vld [vmem:[%s3 + $0xe0] sm:$0xff]
    %v270 = vld [vmem:[%s3 + $0xe8] sm:$0xff]
    %v271 = vld [vmem:[%s3 + $0xf0] sm:$0xff]
    %v272 = vld [vmem:[%s3 + $0xf8] sm:$0xff]
    %v273 = vld [vmem:[#allocation2] sm:$0xff]
    %v274 = vld [vmem:[#allocation3] sm:$0xff]
    %v275 = vld [vmem:[#allocation4] sm:$0xff]
    %v276 = vld [vmem:[#allocation5] sm:$0xff]
    %v277 = vld [vmem:[#allocation6] sm:$0xff]
    %v278 = vld [vmem:[#allocation7] sm:$0xff]
    %v279 = vld [vmem:[#allocation9] sm:$0xff]
    %v280 = vld [vmem:[#allocation9 + $0x8] sm:$0xff]
    %v281 = vld [vmem:[#allocation9 + $0x10] sm:$0xff]
    %v282 = vld [vmem:[#allocation9 + $0x18] sm:$0xff]
    %v283 = vpack.c.bf16 %v273, %v273
    %v316 = vunpack.c.l.b16 %v209
    %v317 = vunpack.c.h.b16 %v209
    %v318 = vunpack.c.l.b16 %v210
    %v319 = vunpack.c.h.b16 %v210
    %v320 = vunpack.c.l.b16 %v211
    %v321 = vunpack.c.h.b16 %v211
    %v322 = vunpack.c.l.b16 %v212
    %v323 = vunpack.c.h.b16 %v212
    %v324 = vunpack.c.l.b16 %v213
    %v325 = vunpack.c.h.b16 %v213
    %v326 = vunpack.c.l.b16 %v214
    %v327 = vunpack.c.h.b16 %v214
    %v328 = vunpack.c.l.b16 %v215
    %v329 = vunpack.c.h.b16 %v215
    %v330 = vunpack.c.l.b16 %v216
    %v331 = vunpack.c.h.b16 %v216
    %v332 = vunpack.c.l.b16 %v217
    %v333 = vunpack.c.h.b16 %v217
    %v334 = vunpack.c.l.b16 %v218
    %v335 = vunpack.c.h.b16 %v218
    %v336 = vunpack.c.l.b16 %v219
    %v337 = vunpack.c.h.b16 %v219
    %v338 = vunpack.c.l.b16 %v220
    %v339 = vunpack.c.h.b16 %v220
    %v340 = vunpack.c.l.b16 %v221
    %v341 = vunpack.c.h.b16 %v221
    %v342 = vunpack.c.l.b16 %v222
    %v343 = vunpack.c.h.b16 %v222
    %v344 = vunpack.c.l.b16 %v223
    %v345 = vunpack.c.h.b16 %v223
    %v346 = vunpack.c.l.b16 %v224
    %v347 = vunpack.c.h.b16 %v224
    %v348 = vunpack.c.l.b16 %v225
    %v349 = vunpack.c.h.b16 %v225
    %v350 = vunpack.c.l.b16 %v226
    %v351 = vunpack.c.h.b16 %v226
    %v352 = vunpack.c.l.b16 %v227
    %v353 = vunpack.c.h.b16 %v227
    %v354 = vunpack.c.l.b16 %v228
    %v355 = vunpack.c.h.b16 %v228
    %v356 = vunpack.c.l.b16 %v229
    %v357 = vunpack.c.h.b16 %v229
    %v358 = vunpack.c.l.b16 %v230
    %v359 = vunpack.c.h.b16 %v230
    %v360 = vunpack.c.l.b16 %v231
    %v361 = vunpack.c.h.b16 %v231
    %v362 = vunpack.c.l.b16 %v232
    %v363 = vunpack.c.h.b16 %v232
    %v364 = vunpack.c.l.b16 %v233
    %v365 = vunpack.c.h.b16 %v233
    %v366 = vunpack.c.l.b16 %v234
    %v367 = vunpack.c.h.b16 %v234
    %v368 = vunpack.c.l.b16 %v235
    %v369 = vunpack.c.h.b16 %v235
    %v370 = vunpack.c.l.b16 %v236
    %v371 = vunpack.c.h.b16 %v236
    %v372 = vunpack.c.l.b16 %v237
    %v373 = vunpack.c.h.b16 %v237
    %v374 = vunpack.c.l.b16 %v238
    %v375 = vunpack.c.h.b16 %v238
    %v376 = vunpack.c.l.b16 %v239
    %v377 = vunpack.c.h.b16 %v239
    %v378 = vunpack.c.l.b16 %v240
    %v379 = vunpack.c.h.b16 %v240
    %v380 = vpack.c.b16 %v320, %v316
    %v381 = vpack.c.b16 %v321, %v317
    %v382 = vpack.c.b16 %v322, %v318
    %v383 = vpack.c.b16 %v323, %v319
    %v384 = vpack.c.b16 %v328, %v324
    %v385 = vpack.c.b16 %v329, %v325
    %v386 = vpack.c.b16 %v330, %v326
    %v387 = vpack.c.b16 %v331, %v327
    %v388 = vpack.c.b16 %v336, %v332
    %v389 = vpack.c.b16 %v337, %v333
    %v390 = vpack.c.b16 %v338, %v334
    %v391 = vpack.c.b16 %v339, %v335
    %v392 = vpack.c.b16 %v344, %v340
    %v393 = vpack.c.b16 %v345, %v341
    %v394 = vpack.c.b16 %v346, %v342
    %v395 = vpack.c.b16 %v347, %v343
    %v396 = vpack.c.b16 %v352, %v348
    %v397 = vpack.c.b16 %v353, %v349
    %v398 = vpack.c.b16 %v354, %v350
    %v399 = vpack.c.b16 %v355, %v351
    %v400 = vpack.c.b16 %v360, %v356
    %v401 = vpack.c.b16 %v361, %v357
    %v402 = vpack.c.b16 %v362, %v358
    %v403 = vpack.c.b16 %v363, %v359
    %v404 = vpack.c.b16 %v368, %v364
    %v405 = vpack.c.b16 %v369, %v365
    %v406 = vpack.c.b16 %v370, %v366
    %v407 = vpack.c.b16 %v371, %v367
    %v408 = vpack.c.b16 %v376, %v372
    %v409 = vpack.c.b16 %v377, %v373
    %v410 = vpack.c.b16 %v378, %v374
    %v411 = vpack.c.b16 %v379, %v375
    %444 = vmatprep.subr.bf16.mxu0 %v381
    %445 = vmatpush1.bf16.msra.mxu0 %v380
    %446 = vmatprep.subr.bf16.mxu0 %v385
    %447 = vmatpush1.bf16.msra.mxu0 %v384
    %448 = vmatprep.subr.bf16.mxu0 %v389
    %449 = vmatpush1.bf16.msra.mxu0 %v388
    %450 = vmatprep.subr.bf16.mxu0 %v393
    %451 = vmatpush1.bf16.msra.mxu0 %v392
    %452 = vmatprep.subr.bf16.mxu0 %v397
    %453 = vmatpush1.bf16.msra.mxu0 %v396
    %454 = vmatprep.subr.bf16.mxu0 %v401
    %455 = vmatpush1.bf16.msra.mxu0 %v400
    %456 = vmatprep.subr.bf16.mxu0 %v405
    %457 = vmatpush1.bf16.msra.mxu0 %v404
    %458 = vmatprep.subr.bf16.mxu0 %v409
    %459 = vmatpush1.bf16.msra.mxu0 %v408
    %460 = vmatprep.subr.bf16.mxu0 0
    %461 = vmatpush1.bf16.msra.mxu0 0
    %462 = vmatprep.subr.bf16.mxu0 0
    %463 = vmatpush1.bf16.msra.mxu0 0
    %464 = vmatprep.subr.bf16.mxu0 0
    %465 = vmatpush1.bf16.msra.mxu0 0
    %466 = vmatprep.subr.bf16.mxu0 0
    %467 = vmatpush1.bf16.msra.mxu0 0
    %468 = vmatprep.subr.bf16.mxu0 0
    %469 = vmatpush1.bf16.msra.mxu0 0
    %470 = vmatprep.subr.bf16.mxu0 0
    %471 = vmatpush1.bf16.msra.mxu0 0
    %472 = vmatprep.subr.bf16.mxu0 0
    %473 = vmatpush1.bf16.msra.mxu0 0
    %474 = vmatprep.subr.bf16.mxu0 0
    %475 = vmatpush1.bf16.msra.mxu0 0
    %476 = vmatprep.mubr.bf16.mxu0 0
    %477 = vmatmul.mubr.bf16.gmra.mrb[0].mxu0 %v283
    %v478 = vpop.f32.mrb[0].mxu0
    %v479 = vadd.f32 0.0, %v478
    %v480 = vpop.f32.mrb[0].mxu0
    %v481 = vadd.f32 0.0, %v480
    %v482 = vpop.f32.mrb[0].mxu0
    %v483 = vpop.f32.mrb[0].mxu0
    %484 = vdwg.mxu0
    %485 = vmatprep.subr.bf16.mxu0 %v383
    %486 = vmatpush1.bf16.msra.mxu0 %v382
    %487 = vmatprep.subr.bf16.mxu0 %v387
    %488 = vmatpush1.bf16.msra.mxu0 %v386
    %489 = vmatprep.subr.bf16.mxu0 %v391
    %490 = vmatpush1.bf16.msra.mxu0 %v390
    %491 = vmatprep.subr.bf16.mxu0 %v395
    %492 = vmatpush1.bf16.msra.mxu0 %v394
    %493 = vmatprep.subr.bf16.mxu0 %v399
    %494 = vmatpush1.bf16.msra.mxu0 %v398
    %495 = vmatprep.subr.bf16.mxu0 %v403
    %496 = vmatpush1.bf16.msra.mxu0 %v402
    %497 = vmatprep.subr.bf16.mxu0 %v407
    %498 = vmatpush1.bf16.msra.mxu0 %v406
    %499 = vmatprep.subr.bf16.mxu0 %v411
    %500 = vmatpush1.bf16.msra.mxu0 %v410
    %501 = vmatprep.subr.bf16.mxu0 0
    %502 = vmatpush1.bf16.msra.mxu0 0
    %503 = vmatprep.subr.bf16.mxu0 0
    %504 = vmatpush1.bf16.msra.mxu0 0
    %505 = vmatprep.subr.bf16.mxu0 0
    %506 = vmatpush1.bf16.msra.mxu0 0
    %507 = vmatprep.subr.bf16.mxu0 0
    %508 = vmatpush1.bf16.msra.mxu0 0
    %509 = vmatprep.subr.bf16.mxu0 0
    %510 = vmatpush1.bf16.msra.mxu0 0
    %511 = vmatprep.subr.bf16.mxu0 0
    %512 = vmatpush1.bf16.msra.mxu0 0
    %513 = vmatprep.subr.bf16.mxu0 0
    %514 = vmatpush1.bf16.msra.mxu0 0
    %515 = vmatprep.subr.bf16.mxu0 0
    %516 = vmatpush1.bf16.msra.mxu0 0
    %517 = vmatprep.mubr.bf16.mxu0 0
    %518 = vmatmul.mubr.bf16.gmra.mrb[0].mxu0 %v283
    %v519 = vpop.f32.mrb[0].mxu0
    %v520 = vadd.f32 0.0, %v519
    %v521 = vpop.f32.mrb[0].mxu0
    %v522 = vadd.f32 0.0, %v521
    %v523 = vpop.f32.mrb[0].mxu0
    %v524 = vpop.f32.mrb[0].mxu0
    %525 = vdwg.mxu0
    %v526 = vadd.f32 %v279, %v479
    %v527 = vadd.f32 %v280, %v481
    %v528 = vadd.f32 %v281, %v520
    %v529 = vadd.f32 %v282, %v522
    %v530 = vxor.u32 %v526, 2147483648
    %v531 = vmul.f32 %v530, 1.442695
    %v532 = vpow.pop %v531
    %v533 = vadd.f32 %v532, 1.0
    %v534 = vrcp.pop %v533
    %v535 = vmul.f32 1.0, %v534
    %v536 = vxor.u32 %v527, 2147483648
    %v537 = vmul.f32 %v536, 1.442695
    %v538 = vpow.pop %v537
    %v539 = vadd.f32 %v538, 1.0
    %v540 = vrcp.pop %v539
    %v541 = vmul.f32 1.0, %v540
    %v542 = vtanh.pop %v528
    %v543 = vxor.u32 %v529, 2147483648
    %v544 = vmul.f32 %v543, 1.442695
    %v545 = vpow.pop %v544
    %v546 = vadd.f32 %v545, 1.0
    %v547 = vrcp.pop %v546
    %v548 = vmul.f32 1.0, %v547
    %v549 = vmul.f32 %v541, %v274
    %v550 = vmul.f32 %v535, %v542
    %v551 = vadd.f32 %v549, %v550
    %v552 = vtanh.pop %v551
    %v553 = vmul.f32 %v548, %v552
    %s554 = scalar_lea.vmem [#allocation10], 224
    %v555 = vld [vmem:[%s554] sm:$0xff]
    %v556 = vld [vmem:[%s554 + $0x8] sm:$0xff]
    %v557 = vld [vmem:[%s554 + $0x10] sm:$0xff]
    %v558 = vld [vmem:[%s554 + $0x18] sm:$0xff]
    %v559 = vpack.c.bf16 %v275, %v275
    %v592 = vunpack.c.l.b16 %v241
    %v593 = vunpack.c.h.b16 %v241
    %v594 = vunpack.c.l.b16 %v242
    %v595 = vunpack.c.h.b16 %v242
    %v596 = vunpack.c.l.b16 %v243
    %v597 = vunpack.c.h.b16 %v243
    %v598 = vunpack.c.l.b16 %v244
    %v599 = vunpack.c.h.b16 %v244
    %v600 = vunpack.c.l.b16 %v245
    %v601 = vunpack.c.h.b16 %v245
    %v602 = vunpack.c.l.b16 %v246
    %v603 = vunpack.c.h.b16 %v246
    %v604 = vunpack.c.l.b16 %v247
    %v605 = vunpack.c.h.b16 %v247
    %v606 = vunpack.c.l.b16 %v248
    %v607 = vunpack.c.h.b16 %v248
    %v608 = vunpack.c.l.b16 %v249
    %v609 = vunpack.c.h.b16 %v249
    %v610 = vunpack.c.l.b16 %v250
    %v611 = vunpack.c.h.b16 %v250
    %v612 = vunpack.c.l.b16 %v251
    %v613 = vunpack.c.h.b16 %v251
    %v614 = vunpack.c.l.b16 %v252
    %v615 = vunpack.c.h.b16 %v252
    %v616 = vunpack.c.l.b16 %v253
    %v617 = vunpack.c.h.b16 %v253
    %v618 = vunpack.c.l.b16 %v254
    %v619 = vunpack.c.h.b16 %v254
    %v620 = vunpack.c.l.b16 %v255
    %v621 = vunpack.c.h.b16 %v255
    %v622 = vunpack.c.l.b16 %v256
    %v623 = vunpack.c.h.b16 %v256
    %v624 = vunpack.c.l.b16 %v257
    %v625 = vunpack.c.h.b16 %v257
    %v626 = vunpack.c.l.b16 %v258
    %v627 = vunpack.c.h.b16 %v258
    %v628 = vunpack.c.l.b16 %v259
    %v629 = vunpack.c.h.b16 %v259
    %v630 = vunpack.c.l.b16 %v260
    %v631 = vunpack.c.h.b16 %v260
    %v632 = vunpack.c.l.b16 %v261
    %v633 = vunpack.c.h.b16 %v261
    %v634 = vunpack.c.l.b16 %v262
    %v635 = vunpack.c.h.b16 %v262
    %v636 = vunpack.c.l.b16 %v263
    %v637 = vunpack.c.h.b16 %v263
    %v638 = vunpack.c.l.b16 %v264
    %v639 = vunpack.c.h.b16 %v264
    %v640 = vunpack.c.l.b16 %v265
    %v641 = vunpack.c.h.b16 %v265
    %v642 = vunpack.c.l.b16 %v266
    %v643 = vunpack.c.h.b16 %v266
    %v644 = vunpack.c.l.b16 %v267
    %v645 = vunpack.c.h.b16 %v267
    %v646 = vunpack.c.l.b16 %v268
    %v647 = vunpack.c.h.b16 %v268
    %v648 = vunpack.c.l.b16 %v269
    %v649 = vunpack.c.h.b16 %v269
    %v650 = vunpack.c.l.b16 %v270
    %v651 = vunpack.c.h.b16 %v270
    %v652 = vunpack.c.l.b16 %v271
    %v653 = vunpack.c.h.b16 %v271
    %v654 = vunpack.c.l.b16 %v272
    %v655 = vunpack.c.h.b16 %v272
    %v656 = vpack.c.b16 %v596, %v592
    %v657 = vpack.c.b16 %v597, %v593
    %v658 = vpack.c.b16 %v598, %v594
    %v659 = vpack.c.b16 %v599, %v595
    %v660 = vpack.c.b16 %v604, %v600
    %v661 = vpack.c.b16 %v605, %v601
    %v662 = vpack.c.b16 %v606, %v602
    %v663 = vpack.c.b16 %v607, %v603
    %v664 = vpack.c.b16 %v612, %v608
    %v665 = vpack.c.b16 %v613, %v609
    %v666 = vpack.c.b16 %v614, %v610
    %v667 = vpack.c.b16 %v615, %v611
    %v668 = vpack.c.b16 %v620, %v616
    %v669 = vpack.c.b16 %v621, %v617
    %v670 = vpack.c.b16 %v622, %v618
    %v671 = vpack.c.b16 %v623, %v619
    %v672 = vpack.c.b16 %v628, %v624
    %v673 = vpack.c.b16 %v629, %v625
    %v674 = vpack.c.b16 %v630, %v626
    %v675 = vpack.c.b16 %v631, %v627
    %v676 = vpack.c.b16 %v636, %v632
    %v677 = vpack.c.b16 %v637, %v633
    %v678 = vpack.c.b16 %v638, %v634
    %v679 = vpack.c.b16 %v639, %v635
    %v680 = vpack.c.b16 %v644, %v640
    %v681 = vpack.c.b16 %v645, %v641
    %v682 = vpack.c.b16 %v646, %v642
    %v683 = vpack.c.b16 %v647, %v643
    %v684 = vpack.c.b16 %v652, %v648
    %v685 = vpack.c.b16 %v653, %v649
    %v686 = vpack.c.b16 %v654, %v650
    %v687 = vpack.c.b16 %v655, %v651
    %720 = vmatprep.subr.bf16.mxu0 %v657
    %721 = vmatpush1.bf16.msra.mxu0 %v656
    %722 = vmatprep.subr.bf16.mxu0 %v661
    %723 = vmatpush1.bf16.msra.mxu0 %v660
    %724 = vmatprep.subr.bf16.mxu0 %v665
    %725 = vmatpush1.bf16.msra.mxu0 %v664
    %726 = vmatprep.subr.bf16.mxu0 %v669
    %727 = vmatpush1.bf16.msra.mxu0 %v668
    %728 = vmatprep.subr.bf16.mxu0 %v673
    %729 = vmatpush1.bf16.msra.mxu0 %v672
    %730 = vmatprep.subr.bf16.mxu0 %v677
    %731 = vmatpush1.bf16.msra.mxu0 %v676
    %732 = vmatprep.subr.bf16.mxu0 %v681
    %733 = vmatpush1.bf16.msra.mxu0 %v680
    %734 = vmatprep.subr.bf16.mxu0 %v685
    %735 = vmatpush1.bf16.msra.mxu0 %v684
    %736 = vmatprep.subr.bf16.mxu0 0
    %737 = vmatpush1.bf16.msra.mxu0 0
    %738 = vmatprep.subr.bf16.mxu0 0
    %739 = vmatpush1.bf16.msra.mxu0 0
    %740 = vmatprep.subr.bf16.mxu0 0
    %741 = vmatpush1.bf16.msra.mxu0 0
    %742 = vmatprep.subr.bf16.mxu0 0
    %743 = vmatpush1.bf16.msra.mxu0 0
    %744 = vmatprep.subr.bf16.mxu0 0
    %745 = vmatpush1.bf16.msra.mxu0 0
    %746 = vmatprep.subr.bf16.mxu0 0
    %747 = vmatpush1.bf16.msra.mxu0 0
    %748 = vmatprep.subr.bf16.mxu0 0
    %749 = vmatpush1.bf16.msra.mxu0 0
    %750 = vmatprep.subr.bf16.mxu0 0
    %751 = vmatpush1.bf16.msra.mxu0 0
    %752 = vmatprep.mubr.bf16.mxu0 0
    %753 = vmatmul.mubr.bf16.gmra.mrb[0].mxu0 %v559
    %v754 = vpop.f32.mrb[0].mxu0
    %v755 = vadd.f32 0.0, %v754
    %v756 = vpop.f32.mrb[0].mxu0
    %v757 = vadd.f32 0.0, %v756
    %v758 = vpop.f32.mrb[0].mxu0
    %v759 = vpop.f32.mrb[0].mxu0
    %760 = vdwg.mxu0
    %761 = vmatprep.subr.bf16.mxu0 %v659
    %762 = vmatpush1.bf16.msra.mxu0 %v658
    %763 = vmatprep.subr.bf16.mxu0 %v663
    %764 = vmatpush1.bf16.msra.mxu0 %v662
    %765 = vmatprep.subr.bf16.mxu0 %v667
    %766 = vmatpush1.bf16.msra.mxu0 %v666
    %767 = vmatprep.subr.bf16.mxu0 %v671
    %768 = vmatpush1.bf16.msra.mxu0 %v670
    %769 = vmatprep.subr.bf16.mxu0 %v675
    %770 = vmatpush1.bf16.msra.mxu0 %v674
    %771 = vmatprep.subr.bf16.mxu0 %v679
    %772 = vmatpush1.bf16.msra.mxu0 %v678
    %773 = vmatprep.subr.bf16.mxu0 %v683
    %774 = vmatpush1.bf16.msra.mxu0 %v682
    %775 = vmatprep.subr.bf16.mxu0 %v687
    %776 = vmatpush1.bf16.msra.mxu0 %v686
    %777 = vmatprep.subr.bf16.mxu0 0
    %778 = vmatpush1.bf16.msra.mxu0 0
    %779 = vmatprep.subr.bf16.mxu0 0
    %780 = vmatpush1.bf16.msra.mxu0 0
    %781 = vmatprep.subr.bf16.mxu0 0
    %782 = vmatpush1.bf16.msra.mxu0 0
    %783 = vmatprep.subr.bf16.mxu0 0
    %784 = vmatpush1.bf16.msra.mxu0 0
    %785 = vmatprep.subr.bf16.mxu0 0
    %786 = vmatpush1.bf16.msra.mxu0 0
    %787 = vmatprep.subr.bf16.mxu0 0
    %788 = vmatpush1.bf16.msra.mxu0 0
    %789 = vmatprep.subr.bf16.mxu0 0
    %790 = vmatpush1.bf16.msra.mxu0 0
    %791 = vmatprep.subr.bf16.mxu0 0
    %792 = vmatpush1.bf16.msra.mxu0 0
    %793 = vmatprep.mubr.bf16.mxu0 0
    %794 = vmatmul.mubr.bf16.gmra.mrb[0].mxu0 %v559
    %v795 = vpop.f32.mrb[0].mxu0
    %v796 = vadd.f32 0.0, %v795
    %v797 = vpop.f32.mrb[0].mxu0
    %v798 = vadd.f32 0.0, %v797
    %v799 = vpop.f32.mrb[0].mxu0
    %v800 = vpop.f32.mrb[0].mxu0
    %801 = vdwg.mxu0
    %v802 = vadd.f32 %v555, %v755
    %v803 = vadd.f32 %v556, %v757
    %v804 = vadd.f32 %v557, %v796
    %v805 = vadd.f32 %v558, %v798
    %v806 = vxor.u32 %v802, 2147483648
    %v807 = vmul.f32 %v806, 1.442695
    %v808 = vpow.pop %v807
    %v809 = vadd.f32 %v808, 1.0
    %v810 = vrcp.pop %v809
    %v811 = vmul.f32 1.0, %v810
    %v812 = vxor.u32 %v803, 2147483648
    %v813 = vmul.f32 %v812, 1.442695
    %v814 = vpow.pop %v813
    %v815 = vadd.f32 %v814, 1.0
    %v816 = vrcp.pop %v815
    %v817 = vmul.f32 1.0, %v816
    %v818 = vtanh.pop %v804
    %v819 = vxor.u32 %v805, 2147483648
    %v820 = vmul.f32 %v819, 1.442695
    %v821 = vpow.pop %v820
    %v822 = vadd.f32 %v821, 1.0
    %v823 = vrcp.pop %v822
    %v824 = vmul.f32 1.0, %v823
    %v825 = vmul.f32 %v817, %v276
    %v826 = vmul.f32 %v811, %v818
    %v827 = vadd.f32 %v825, %v826
    %v828 = vtanh.pop %v827
    %v829 = vmul.f32 %v824, %v828
    %v830 = vmax.f32 %v277, %v553
    %v831 = vmax.f32 %v278, %v829
    %s832 = scalar_lea.vmem [#allocation9], 32
    %v833 = vld [vmem:[%s832] sm:$0xff]
    %v834 = vld [vmem:[%s832 + $0x8] sm:$0xff]
    %v835 = vld [vmem:[%s832 + $0x10] sm:$0xff]
    %v836 = vld [vmem:[%s832 + $0x18] sm:$0xff]
    %v837 = vpack.c.bf16 %v553, %v553
    %838 = vmatprep.subr.bf16.mxu0 %v381
    %839 = vmatpush1.bf16.msra.mxu0 %v380
    %840 = vmatprep.subr.bf16.mxu0 %v385
    %841 = vmatpush1.bf16.msra.mxu0 %v384
    %842 = vmatprep.subr.bf16.mxu0 %v389
    %843 = vmatpush1.bf16.msra.mxu0 %v388
    %844 = vmatprep.subr.bf16.mxu0 %v393
    %845 = vmatpush1.bf16.msra.mxu0 %v392
    %846 = vmatprep.subr.bf16.mxu0 %v397
    %847 = vmatpush1.bf16.msra.mxu0 %v396
    %848 = vmatprep.subr.bf16.mxu0 %v401
    %849 = vmatpush1.bf16.msra.mxu0 %v400
    %850 = vmatprep.subr.bf16.mxu0 %v405
    %851 = vmatpush1.bf16.msra.mxu0 %v404
    %852 = vmatprep.subr.bf16.mxu0 %v409
    %853 = vmatpush1.bf16.msra.mxu0 %v408
    %854 = vmatprep.subr.bf16.mxu0 0
    %855 = vmatpush1.bf16.msra.mxu0 0
    %856 = vmatprep.subr.bf16.mxu0 0
    %857 = vmatpush1.bf16.msra.mxu0 0
    %858 = vmatprep.subr.bf16.mxu0 0
    %859 = vmatpush1.bf16.msra.mxu0 0
    %860 = vmatprep.subr.bf16.mxu0 0
    %861 = vmatpush1.bf16.msra.mxu0 0
    %862 = vmatprep.subr.bf16.mxu0 0
    %863 = vmatpush1.bf16.msra.mxu0 0
    %864 = vmatprep.subr.bf16.mxu0 0
    %865 = vmatpush1.bf16.msra.mxu0 0
    %866 = vmatprep.subr.bf16.mxu0 0
    %867 = vmatpush1.bf16.msra.mxu0 0
    %868 = vmatprep.subr.bf16.mxu0 0
    %869 = vmatpush1.bf16.msra.mxu0 0
    %870 = vmatprep.mubr.bf16.mxu0 0
    %871 = vmatmul.mubr.bf16.gmra.mrb[0].mxu0 %v837
    %v872 = vpop.f32.mrb[0].mxu0
    %v873 = vadd.f32 0.0, %v872
    %v874 = vpop.f32.mrb[0].mxu0
    %v875 = vadd.f32 0.0, %v874
    %v876 = vpop.f32.mrb[0].mxu0
    %v877 = vpop.f32.mrb[0].mxu0
    %878 = vdwg.mxu0
    %879 = vmatprep.subr.bf16.mxu0 %v383
    %880 = vmatpush1.bf16.msra.mxu0 %v382
    %881 = vmatprep.subr.bf16.mxu0 %v387
    %882 = vmatpush1.bf16.msra.mxu0 %v386
    %883 = vmatprep.subr.bf16.mxu0 %v391
    %884 = vmatpush1.bf16.msra.mxu0 %v390
    %885 = vmatprep.subr.bf16.mxu0 %v395
    %886 = vmatpush1.bf16.msra.mxu0 %v394
    %887 = vmatprep.subr.bf16.mxu0 %v399
    %888 = vmatpush1.bf16.msra.mxu0 %v398
    %889 = vmatprep.subr.bf16.mxu0 %v403
    %890 = vmatpush1.bf16.msra.mxu0 %v402
    %891 = vmatprep.subr.bf16.mxu0 %v407
    %892 = vmatpush1.bf16.msra.mxu0 %v406
    %893 = vmatprep.subr.bf16.mxu0 %v411
    %894 = vmatpush1.bf16.msra.mxu0 %v410
    %895 = vmatprep.subr.bf16.mxu0 0
    %896 = vmatpush1.bf16.msra.mxu0 0
    %897 = vmatprep.subr.bf16.mxu0 0
    %898 = vmatpush1.bf16.msra.mxu0 0
    %899 = vmatprep.subr.bf16.mxu0 0
    %900 = vmatpush1.bf16.msra.mxu0 0
    %901 = vmatprep.subr.bf16.mxu0 0
    %902 = vmatpush1.bf16.msra.mxu0 0
    %903 = vmatprep.subr.bf16.mxu0 0
    %904 = vmatpush1.bf16.msra.mxu0 0
    %905 = vmatprep.subr.bf16.mxu0 0
    %906 = vmatpush1.bf16.msra.mxu0 0
    %907 = vmatprep.subr.bf16.mxu0 0
    %908 = vmatpush1.bf16.msra.mxu0 0
    %909 = vmatprep.subr.bf16.mxu0 0
    %910 = vmatpush1.bf16.msra.mxu0 0
    %911 = vmatprep.mubr.bf16.mxu0 0
    %912 = vmatmul.mubr.bf16.gmra.mrb[0].mxu0 %v837
    %v913 = vpop.f32.mrb[0].mxu0
    %v914 = vadd.f32 0.0, %v913
    %v915 = vpop.f32.mrb[0].mxu0
    %v916 = vadd.f32 0.0, %v915
    %v917 = vpop.f32.mrb[0].mxu0
    %v918 = vpop.f32.mrb[0].mxu0
    %919 = vdwg.mxu0
    %v920 = vadd.f32 %v833, %v873
    %v921 = vadd.f32 %v834, %v875
    %v922 = vadd.f32 %v835, %v914
    %v923 = vadd.f32 %v836, %v916
    %v924 = vxor.u32 %v920, 2147483648
    %v925 = vmul.f32 %v924, 1.442695
    %v926 = vpow.pop %v925
    %v927 = vadd.f32 %v926, 1.0
    %v928 = vrcp.pop %v927
    %v929 = vmul.f32 1.0, %v928
    %v930 = vxor.u32 %v921, 2147483648
    %v931 = vmul.f32 %v930, 1.442695
    %v932 = vpow.pop %v931
    %v933 = vadd.f32 %v932, 1.0
    %v934 = vrcp.pop %v933
    %v935 = vmul.f32 1.0, %v934
    %v936 = vtanh.pop %v922
    %v937 = vxor.u32 %v923, 2147483648
    %v938 = vmul.f32 %v937, 1.442695
    %v939 = vpow.pop %v938
    %v940 = vadd.f32 %v939, 1.0
    %v941 = vrcp.pop %v940
    %v942 = vmul.f32 1.0, %v941
    %v943 = vmul.f32 %v935, %v551
    %v944 = vmul.f32 %v929, %v936
    %v945 = vadd.f32 %v943, %v944
    %v946 = vtanh.pop %v945
    %v947 = vmul.f32 %v942, %v946
    %s948 = scalar_lea.vmem [#allocation10], 192
    %v949 = vld [vmem:[%s948] sm:$0xff]
    %v950 = vld [vmem:[%s948 + $0x8] sm:$0xff]
    %v951 = vld [vmem:[%s948 + $0x10] sm:$0xff]
    %v952 = vld [vmem:[%s948 + $0x18] sm:$0xff]
    %v953 = vpack.c.bf16 %v829, %v829
    %954 = vmatprep.subr.bf16.mxu0 %v657
    %955 = vmatpush1.bf16.msra.mxu0 %v656
    %956 = vmatprep.subr.bf16.mxu0 %v661
    %957 = vmatpush1.bf16.msra.mxu0 %v660
    %958 = vmatprep.subr.bf16.mxu0 %v665
    %959 = vmatpush1.bf16.msra.mxu0 %v664
    %960 = vmatprep.subr.bf16.mxu0 %v669
    %961 = vmatpush1.bf16.msra.mxu0 %v668
    %962 = vmatprep.subr.bf16.mxu0 %v673
    %963 = vmatpush1.bf16.msra.mxu0 %v672
    %964 = vmatprep.subr.bf16.mxu0 %v677
    %965 = vmatpush1.bf16.msra.mxu0 %v676
    %966 = vmatprep.subr.bf16.mxu0 %v681
    %967 = vmatpush1.bf16.msra.mxu0 %v680
    %968 = vmatprep.subr.bf16.mxu0 %v685
    %969 = vmatpush1.bf16.msra.mxu0 %v684
    %970 = vmatprep.subr.bf16.mxu0 0
    %971 = vmatpush1.bf16.msra.mxu0 0
    %972 = vmatprep.subr.bf16.mxu0 0
    %973 = vmatpush1.bf16.msra.mxu0 0
    %974 = vmatprep.subr.bf16.mxu0 0
    %975 = vmatpush1.bf16.msra.mxu0 0
    %976 = vmatprep.subr.bf16.mxu0 0
    %977 = vmatpush1.bf16.msra.mxu0 0
    %978 = vmatprep.subr.bf16.mxu0 0
    %979 = vmatpush1.bf16.msra.mxu0 0
    %980 = vmatprep.subr.bf16.mxu0 0
    %981 = vmatpush1.bf16.msra.mxu0 0
    %982 = vmatprep.subr.bf16.mxu0 0
    %983 = vmatpush1.bf16.msra.mxu0 0
    %984 = vmatprep.subr.bf16.mxu0 0
    %985 = vmatpush1.bf16.msra.mxu0 0
    %986 = vmatprep.mubr.bf16.mxu0 0
    %987 = vmatmul.mubr.bf16.gmra.mrb[0].mxu0 %v953
    %v988 = vpop.f32.mrb[0].mxu0
    %v989 = vadd.f32 0.0, %v988
    %v990 = vpop.f32.mrb[0].mxu0
    %v991 = vadd.f32 0.0, %v990
    %v992 = vpop.f32.mrb[0].mxu0
    %v993 = vpop.f32.mrb[0].mxu0
    %994 = vdwg.mxu0
    %995 = vmatprep.subr.bf16.mxu0 %v659
    %996 = vmatpush1.bf16.msra.mxu0 %v658
    %997 = vmatprep.subr.bf16.mxu0 %v663
    %998 = vmatpush1.bf16.msra.mxu0 %v662
    %999 = vmatprep.subr.bf16.mxu0 %v667
    %1000 = vmatpush1.bf16.msra.mxu0 %v666
    %1001 = vmatprep.subr.bf16.mxu0 %v671
    %1002 = vmatpush1.bf16.msra.mxu0 %v670
    %1003 = vmatprep.subr.bf16.mxu0 %v675
    %1004 = vmatpush1.bf16.msra.mxu0 %v674
    %1005 = vmatprep.subr.bf16.mxu0 %v679
    %1006 = vmatpush1.bf16.msra.mxu0 %v678
    %1007 = vmatprep.subr.bf16.mxu0 %v683
    %1008 = vmatpush1.bf16.msra.mxu0 %v682
    %1009 = vmatprep.subr.bf16.mxu0 %v687
    %1010 = vmatpush1.bf16.msra.mxu0 %v686
    %1011 = vmatprep.subr.bf16.mxu0 0
    %1012 = vmatpush1.bf16.msra.mxu0 0
    %1013 = vmatprep.subr.bf16.mxu0 0
    %1014 = vmatpush1.bf16.msra.mxu0 0
    %1015 = vmatprep.subr.bf16.mxu0 0
    %1016 = vmatpush1.bf16.msra.mxu0 0
    %1017 = vmatprep.subr.bf16.mxu0 0
    %1018 = vmatpush1.bf16.msra.mxu0 0
    %1019 = vmatprep.subr.bf16.mxu0 0
    %1020 = vmatpush1.bf16.msra.mxu0 0
    %1021 = vmatprep.subr.bf16.mxu0 0
    %1022 = vmatpush1.bf16.msra.mxu0 0
    %1023 = vmatprep.subr.bf16.mxu0 0
    %1024 = vmatpush1.bf16.msra.mxu0 0
    %1025 = vmatprep.subr.bf16.mxu0 0
    %1026 = vmatpush1.bf16.msra.mxu0 0
    %1027 = vmatprep.mubr.bf16.mxu0 0
    %1028 = vmatmul.mubr.bf16.gmra.mrb[0].mxu0 %v953
    %v1029 = vpop.f32.mrb[0].mxu0
    %v1030 = vadd.f32 0.0, %v1029
    %v1031 = vpop.f32.mrb[0].mxu0
    %v1032 = vadd.f32 0.0, %v1031
    %v1033 = vpop.f32.mrb[0].mxu0
    %v1034 = vpop.f32.mrb[0].mxu0
    %1035 = vdwg.mxu0
    %v1036 = vadd.f32 %v949, %v989
    %v1037 = vadd.f32 %v950, %v991
    %v1038 = vadd.f32 %v951, %v1030
    %v1039 = vadd.f32 %v952, %v1032
    %v1040 = vxor.u32 %v1036, 2147483648
    %v1041 = vmul.f32 %v1040, 1.442695
    %v1042 = vpow.pop %v1041
    %v1043 = vadd.f32 %v1042, 1.0
    %v1044 = vrcp.pop %v1043
    %v1045 = vmul.f32 1.0, %v1044
    %v1046 = vxor.u32 %v1037, 2147483648
    %v1047 = vmul.f32 %v1046, 1.442695
    %v1048 = vpow.pop %v1047
    %v1049 = vadd.f32 %v1048, 1.0
    %v1050 = vrcp.pop %v1049
    %v1051 = vmul.f32 1.0, %v1050
    %v1052 = vtanh.pop %v1038
    %v1053 = vxor.u32 %v1039, 2147483648
    %v1054 = vmul.f32 %v1053, 1.442695
    %v1055 = vpow.pop %v1054
    %v1056 = vadd.f32 %v1055, 1.0
    %v1057 = vrcp.pop %v1056
    %v1058 = vmul.f32 1.0, %v1057
    %v1059 = vmul.f32 %v1051, %v827
    %v1060 = vmul.f32 %v1045, %v1052
    %v1061 = vadd.f32 %v1059, %v1060
    %v1062 = vtanh.pop %v1061
    %v1063 = vmul.f32 %v1058, %v1062
    %v1064 = vmax.f32 %v830, %v947
    %v1065 = vmax.f32 %v831, %v1063
    %s1066 = scalar_lea.vmem [#allocation9], 64
    %v1067 = vld [vmem:[%s1066] sm:$0xff]
    %v1068 = vld [vmem:[%s1066 + $0x8] sm:$0xff]
    %v1069 = vld [vmem:[%s1066 + $0x10] sm:$0xff]
    %v1070 = vld [vmem:[%s1066 + $0x18] sm:$0xff]
    %v1071 = vpack.c.bf16 %v947, %v947
    %1072 = vmatprep.subr.bf16.mxu0 %v381
    %1073 = vmatpush1.bf16.msra.mxu0 %v380
    %1074 = vmatprep.subr.bf16.mxu0 %v385
    %1075 = vmatpush1.bf16.msra.mxu0 %v384
    %1076 = vmatprep.subr.bf16.mxu0 %v389
    %1077 = vmatpush1.bf16.msra.mxu0 %v388
    %1078 = vmatprep.subr.bf16.mxu0 %v393
    %1079 = vmatpush1.bf16.msra.mxu0 %v392
    %1080 = vmatprep.subr.bf16.mxu0 %v397
    %1081 = vmatpush1.bf16.msra.mxu0 %v396
    %1082 = vmatprep.subr.bf16.mxu0 %v401
    %1083 = vmatpush1.bf16.msra.mxu0 %v400
    %1084 = vmatprep.subr.bf16.mxu0 %v405
    %1085 = vmatpush1.bf16.msra.mxu0 %v404
    %1086 = vmatprep.subr.bf16.mxu0 %v409
    %1087 = vmatpush1.bf16.msra.mxu0 %v408
    %1088 = vmatprep.subr.bf16.mxu0 0
    %1089 = vmatpush1.bf16.msra.mxu0 0
    %1090 = vmatprep.subr.bf16.mxu0 0
    %1091 = vmatpush1.bf16.msra.mxu0 0
    %1092 = vmatprep.subr.bf16.mxu0 0
    %1093 = vmatpush1.bf16.msra.mxu0 0
    %1094 = vmatprep.subr.bf16.mxu0 0
    %1095 = vmatpush1.bf16.msra.mxu0 0
    %1096 = vmatprep.subr.bf16.mxu0 0
    %1097 = vmatpush1.bf16.msra.mxu0 0
    %1098 = vmatprep.subr.bf16.mxu0 0
    %1099 = vmatpush1.bf16.msra.mxu0 0
    %1100 = vmatprep.subr.bf16.mxu0 0
    %1101 = vmatpush1.bf16.msra.mxu0 0
    %1102 = vmatprep.subr.bf16.mxu0 0
    %1103 = vmatpush1.bf16.msra.mxu0 0
    %1104 = vmatprep.mubr.bf16.mxu0 0
    %1105 = vmatmul.mubr.bf16.gmra.mrb[0].mxu0 %v1071
    %v1106 = vpop.f32.mrb[0].mxu0
    %v1107 = vadd.f32 0.0, %v1106
    %v1108 = vpop.f32.mrb[0].mxu0
    %v1109 = vadd.f32 0.0, %v1108
    %v1110 = vpop.f32.mrb[0].mxu0
    %v1111 = vpop.f32.mrb[0].mxu0
    %1112 = vdwg.mxu0
    %1113 = vmatprep.subr.bf16.mxu0 %v383
    %1114 = vmatpush1.bf16.msra.mxu0 %v382
    %1115 = vmatprep.subr.bf16.mxu0 %v387
    %1116 = vmatpush1.bf16.msra.mxu0 %v386
    %1117 = vmatprep.subr.bf16.mxu0 %v391
    %1118 = vmatpush1.bf16.msra.mxu0 %v390
    %1119 = vmatprep.subr.bf16.mxu0 %v395
    %1120 = vmatpush1.bf16.msra.mxu0 %v394
    %1121 = vmatprep.subr.bf16.mxu0 %v399
    %1122 = vmatpush1.bf16.msra.mxu0 %v398
    %1123 = vmatprep.subr.bf16.mxu0 %v403
    %1124 = vmatpush1.bf16.msra.mxu0 %v402
    %1125 = vmatprep.subr.bf16.mxu0 %v407
    %1126 = vmatpush1.bf16.msra.mxu0 %v406
    %1127 = vmatprep.subr.bf16.mxu0 %v411
    %1128 = vmatpush1.bf16.msra.mxu0 %v410
    %1129 = vmatprep.subr.bf16.mxu0 0
    %1130 = vmatpush1.bf16.msra.mxu0 0
    %1131 = vmatprep.subr.bf16.mxu0 0
    %1132 = vmatpush1.bf16.msra.mxu0 0
    %1133 = vmatprep.subr.bf16.mxu0 0
    %1134 = vmatpush1.bf16.msra.mxu0 0
    %1135 = vmatprep.subr.bf16.mxu0 0
    %1136 = vmatpush1.bf16.msra.mxu0 0
    %1137 = vmatprep.subr.bf16.mxu0 0
    %1138 = vmatpush1.bf16.msra.mxu0 0
    %1139 = vmatprep.subr.bf16.mxu0 0
    %1140 = vmatpush1.bf16.msra.mxu0 0
    %1141 = vmatprep.subr.bf16.mxu0 0
    %1142 = vmatpush1.bf16.msra.mxu0 0
    %1143 = vmatprep.subr.bf16.mxu0 0
    %1144 = vmatpush1.bf16.msra.mxu0 0
    %1145 = vmatprep.mubr.bf16.mxu0 0
    %1146 = vmatmul.mubr.bf16.gmra.mrb[0].mxu0 %v1071
    %v1147 = vpop.f32.mrb[0].mxu0
    %v1148 = vadd.f32 0.0, %v1147
    %v1149 = vpop.f32.mrb[0].mxu0
    %v1150 = vadd.f32 0.0, %v1149
    %v1151 = vpop.f32.mrb[0].mxu0
    %v1152 = vpop.f32.mrb[0].mxu0
    %1153 = vdwg.mxu0
    %v1154 = vadd.f32 %v1067, %v1107
    %v1155 = vadd.f32 %v1068, %v1109
    %v1156 = vadd.f32 %v1069, %v1148
    %v1157 = vadd.f32 %v1070, %v1150
    %v1158 = vxor.u32 %v1154, 2147483648
    %v1159 = vmul.f32 %v1158, 1.442695
    %v1160 = vpow.pop %v1159
    %v1161 = vadd.f32 %v1160, 1.0
    %v1162 = vrcp.pop %v1161
    %v1163 = vmul.f32 1.0, %v1162
    %v1164 = vxor.u32 %v1155, 2147483648
    %v1165 = vmul.f32 %v1164, 1.442695
    %v1166 = vpow.pop %v1165
    %v1167 = vadd.f32 %v1166, 1.0
    %v1168 = vrcp.pop %v1167
    %v1169 = vmul.f32 1.0, %v1168
    %v1170 = vtanh.pop %v1156
    %v1171 = vxor.u32 %v1157, 2147483648
    %v1172 = vmul.f32 %v1171, 1.442695
    %v1173 = vpow.pop %v1172
    %v1174 = vadd.f32 %v1173, 1.0
    %v1175 = vrcp.pop %v1174
    %v1176 = vmul.f32 1.0, %v1175
    %v1177 = vmul.f32 %v1169, %v945
    %v1178 = vmul.f32 %v1163, %v1170
    %v1179 = vadd.f32 %v1177, %v1178
    %v1180 = vtanh.pop %v1179
    %v1181 = vmul.f32 %v1176, %v1180
    %s1182 = scalar_lea.vmem [#allocation10], 160
    %v1183 = vld [vmem:[%s1182] sm:$0xff]
    %v1184 = vld [vmem:[%s1182 + $0x8] sm:$0xff]
    %v1185 = vld [vmem:[%s1182 + $0x10] sm:$0xff]
    %v1186 = vld [vmem:[%s1182 + $0x18] sm:$0xff]
    %v1187 = vpack.c.bf16 %v1063, %v1063
    %1188 = vmatprep.subr.bf16.mxu0 %v657
    %1189 = vmatpush1.bf16.msra.mxu0 %v656
    %1190 = vmatprep.subr.bf16.mxu0 %v661
    %1191 = vmatpush1.bf16.msra.mxu0 %v660
    %1192 = vmatprep.subr.bf16.mxu0 %v665
    %1193 = vmatpush1.bf16.msra.mxu0 %v664
    %1194 = vmatprep.subr.bf16.mxu0 %v669
    %1195 = vmatpush1.bf16.msra.mxu0 %v668
    %1196 = vmatprep.subr.bf16.mxu0 %v673
    %1197 = vmatpush1.bf16.msra.mxu0 %v672
    %1198 = vmatprep.subr.bf16.mxu0 %v677
    %1199 = vmatpush1.bf16.msra.mxu0 %v676
    %1200 = vmatprep.subr.bf16.mxu0 %v681
    %1201 = vmatpush1.bf16.msra.mxu0 %v680
    %1202 = vmatprep.subr.bf16.mxu0 %v685
    %1203 = vmatpush1.bf16.msra.mxu0 %v684
    %1204 = vmatprep.subr.bf16.mxu0 0
    %1205 = vmatpush1.bf16.msra.mxu0 0
    %1206 = vmatprep.subr.bf16.mxu0 0
    %1207 = vmatpush1.bf16.msra.mxu0 0
    %1208 = vmatprep.subr.bf16.mxu0 0
    %1209 = vmatpush1.bf16.msra.mxu0 0
    %1210 = vmatprep.subr.bf16.mxu0 0
    %1211 = vmatpush1.bf16.msra.mxu0 0
    %1212 = vmatprep.subr.bf16.mxu0 0
    %1213 = vmatpush1.bf16.msra.mxu0 0
    %1214 = vmatprep.subr.bf16.mxu0 0
    %1215 = vmatpush1.bf16.msra.mxu0 0
    %1216 = vmatprep.subr.bf16.mxu0 0
    %1217 = vmatpush1.bf16.msra.mxu0 0
    %1218 = vmatprep.subr.bf16.mxu0 0
    %1219 = vmatpush1.bf16.msra.mxu0 0
    %1220 = vmatprep.mubr.bf16.mxu0 0
    %1221 = vmatmul.mubr.bf16.gmra.mrb[0].mxu0 %v1187
    %v1222 = vpop.f32.mrb[0].mxu0
    %v1223 = vadd.f32 0.0, %v1222
    %v1224 = vpop.f32.mrb[0].mxu0
    %v1225 = vadd.f32 0.0, %v1224
    %v1226 = vpop.f32.mrb[0].mxu0
    %v1227 = vpop.f32.mrb[0].mxu0
    %1228 = vdwg.mxu0
    %1229 = vmatprep.subr.bf16.mxu0 %v659
    %1230 = vmatpush1.bf16.msra.mxu0 %v658
    %1231 = vmatprep.subr.bf16.mxu0 %v663
    %1232 = vmatpush1.bf16.msra.mxu0 %v662
    %1233 = vmatprep.subr.bf16.mxu0 %v667
    %1234 = vmatpush1.bf16.msra.mxu0 %v666
    %1235 = vmatprep.subr.bf16.mxu0 %v671
    %1236 = vmatpush1.bf16.msra.mxu0 %v670
    %1237 = vmatprep.subr.bf16.mxu0 %v675
    %1238 = vmatpush1.bf16.msra.mxu0 %v674
    %1239 = vmatprep.subr.bf16.mxu0 %v679
    %1240 = vmatpush1.bf16.msra.mxu0 %v678
    %1241 = vmatprep.subr.bf16.mxu0 %v683
    %1242 = vmatpush1.bf16.msra.mxu0 %v682
    %1243 = vmatprep.subr.bf16.mxu0 %v687
    %1244 = vmatpush1.bf16.msra.mxu0 %v686
    %1245 = vmatprep.subr.bf16.mxu0 0
    %1246 = vmatpush1.bf16.msra.mxu0 0
    %1247 = vmatprep.subr.bf16.mxu0 0
    %1248 = vmatpush1.bf16.msra.mxu0 0
    %1249 = vmatprep.subr.bf16.mxu0 0
    %1250 = vmatpush1.bf16.msra.mxu0 0
    %1251 = vmatprep.subr.bf16.mxu0 0
    %1252 = vmatpush1.bf16.msra.mxu0 0
    %1253 = vmatprep.subr.bf16.mxu0 0
    %1254 = vmatpush1.bf16.msra.mxu0 0
    %1255 = vmatprep.subr.bf16.mxu0 0
    %1256 = vmatpush1.bf16.msra.mxu0 0
    %1257 = vmatprep.subr.bf16.mxu0 0
    %1258 = vmatpush1.bf16.msra.mxu0 0
    %1259 = vmatprep.subr.bf16.mxu0 0
    %1260 = vmatpush1.bf16.msra.mxu0 0
    %1261 = vmatprep.mubr.bf16.mxu0 0
    %1262 = vmatmul.mubr.bf16.gmra.mrb[0].mxu0 %v1187
    %v1263 = vpop.f32.mrb[0].mxu0
    %v1264 = vadd.f32 0.0, %v1263
    %v1265 = vpop.f32.mrb[0].mxu0
    %v1266 = vadd.f32 0.0, %v1265
    %v1267 = vpop.f32.mrb[0].mxu0
    %v1268 = vpop.f32.mrb[0].mxu0
    %1269 = vdwg.mxu0
    %v1270 = vadd.f32 %v1183, %v1223
    %v1271 = vadd.f32 %v1184, %v1225
    %v1272 = vadd.f32 %v1185, %v1264
    %v1273 = vadd.f32 %v1186, %v1266
    %v1274 = vxor.u32 %v1270, 2147483648
    %v1275 = vmul.f32 %v1274, 1.442695
    %v1276 = vpow.pop %v1275
    %v1277 = vadd.f32 %v1276, 1.0
    %v1278 = vrcp.pop %v1277
    %v1279 = vmul.f32 1.0, %v1278
    %v1280 = vxor.u32 %v1271, 2147483648
    %v1281 = vmul.f32 %v1280, 1.442695
    %v1282 = vpow.pop %v1281
    %v1283 = vadd.f32 %v1282, 1.0
    %v1284 = vrcp.pop %v1283
    %v1285 = vmul.f32 1.0, %v1284
    %v1286 = vtanh.pop %v1272
    %v1287 = vxor.u32 %v1273, 2147483648
    %v1288 = vmul.f32 %v1287, 1.442695
    %v1289 = vpow.pop %v1288
    %v1290 = vadd.f32 %v1289, 1.0
    %v1291 = vrcp.pop %v1290
    %v1292 = vmul.f32 1.0, %v1291
    %v1293 = vmul.f32 %v1285, %v1061
    %v1294 = vmul.f32 %v1279, %v1286
    %v1295 = vadd.f32 %v1293, %v1294
    %v1296 = vtanh.pop %v1295
    %v1297 = vmul.f32 %v1292, %v1296
    %v1298 = vmax.f32 %v1064, %v1181
    %v1299 = vmax.f32 %v1065, %v1297
    %s1300 = scalar_lea.vmem [#allocation9], 96
    %v1301 = vld [vmem:[%s1300] sm:$0xff]
    %v1302 = vld [vmem:[%s1300 + $0x8] sm:$0xff]
    %v1303 = vld [vmem:[%s1300 + $0x10] sm:$0xff]
    %v1304 = vld [vmem:[%s1300 + $0x18] sm:$0xff]
    %v1305 = vpack.c.bf16 %v1181, %v1181
    %1306 = vmatprep.subr.bf16.mxu0 %v381
    %1307 = vmatpush1.bf16.msra.mxu0 %v380
    %1308 = vmatprep.subr.bf16.mxu0 %v385
    %1309 = vmatpush1.bf16.msra.mxu0 %v384
    %1310 = vmatprep.subr.bf16.mxu0 %v389
    %1311 = vmatpush1.bf16.msra.mxu0 %v388
    %1312 = vmatprep.subr.bf16.mxu0 %v393
    %1313 = vmatpush1.bf16.msra.mxu0 %v392
    %1314 = vmatprep.subr.bf16.mxu0 %v397
    %1315 = vmatpush1.bf16.msra.mxu0 %v396
    %1316 = vmatprep.subr.bf16.mxu0 %v401
    %1317 = vmatpush1.bf16.msra.mxu0 %v400
    %1318 = vmatprep.subr.bf16.mxu0 %v405
    %1319 = vmatpush1.bf16.msra.mxu0 %v404
    %1320 = vmatprep.subr.bf16.mxu0 %v409
    %1321 = vmatpush1.bf16.msra.mxu0 %v408
    %1322 = vmatprep.subr.bf16.mxu0 0
    %1323 = vmatpush1.bf16.msra.mxu0 0
    %1324 = vmatprep.subr.bf16.mxu0 0
    %1325 = vmatpush1.bf16.msra.mxu0 0
    %1326 = vmatprep.subr.bf16.mxu0 0
    %1327 = vmatpush1.bf16.msra.mxu0 0
    %1328 = vmatprep.subr.bf16.mxu0 0
    %1329 = vmatpush1.bf16.msra.mxu0 0
    %1330 = vmatprep.subr.bf16.mxu0 0
    %1331 = vmatpush1.bf16.msra.mxu0 0
    %1332 = vmatprep.subr.bf16.mxu0 0
    %1333 = vmatpush1.bf16.msra.mxu0 0
    %1334 = vmatprep.subr.bf16.mxu0 0
    %1335 = vmatpush1.bf16.msra.mxu0 0
    %1336 = vmatprep.subr.bf16.mxu0 0
    %1337 = vmatpush1.bf16.msra.mxu0 0
    %1338 = vmatprep.mubr.bf16.mxu0 0
    %1339 = vmatmul.mubr.bf16.gmra.mrb[0].mxu0 %v1305
    %v1340 = vpop.f32.mrb[0].mxu0
    %v1341 = vadd.f32 0.0, %v1340
    %v1342 = vpop.f32.mrb[0].mxu0
    %v1343 = vadd.f32 0.0, %v1342
    %v1344 = vpop.f32.mrb[0].mxu0
    %v1345 = vpop.f32.mrb[0].mxu0
    %1346 = vdwg.mxu0
    %1347 = vmatprep.subr.bf16.mxu0 %v383
    %1348 = vmatpush1.bf16.msra.mxu0 %v382
    %1349 = vmatprep.subr.bf16.mxu0 %v387
    %1350 = vmatpush1.bf16.msra.mxu0 %v386
    %1351 = vmatprep.subr.bf16.mxu0 %v391
    %1352 = vmatpush1.bf16.msra.mxu0 %v390
    %1353 = vmatprep.subr.bf16.mxu0 %v395
    %1354 = vmatpush1.bf16.msra.mxu0 %v394
    %1355 = vmatprep.subr.bf16.mxu0 %v399
    %1356 = vmatpush1.bf16.msra.mxu0 %v398
    %1357 = vmatprep.subr.bf16.mxu0 %v403
    %1358 = vmatpush1.bf16.msra.mxu0 %v402
    %1359 = vmatprep.subr.bf16.mxu0 %v407
    %1360 = vmatpush1.bf16.msra.mxu0 %v406
    %1361 = vmatprep.subr.bf16.mxu0 %v411
    %1362 = vmatpush1.bf16.msra.mxu0 %v410
    %1363 = vmatprep.subr.bf16.mxu0 0
    %1364 = vmatpush1.bf16.msra.mxu0 0
    %1365 = vmatprep.subr.bf16.mxu0 0
    %1366 = vmatpush1.bf16.msra.mxu0 0
    %1367 = vmatprep.subr.bf16.mxu0 0
    %1368 = vmatpush1.bf16.msra.mxu0 0
    %1369 = vmatprep.subr.bf16.mxu0 0
    %1370 = vmatpush1.bf16.msra.mxu0 0
    %1371 = vmatprep.subr.bf16.mxu0 0
    %1372 = vmatpush1.bf16.msra.mxu0 0
    %1373 = vmatprep.subr.bf16.mxu0 0
    %1374 = vmatpush1.bf16.msra.mxu0 0
    %1375 = vmatprep.subr.bf16.mxu0 0
    %1376 = vmatpush1.bf16.msra.mxu0 0
    %1377 = vmatprep.subr.bf16.mxu0 0
    %1378 = vmatpush1.bf16.msra.mxu0 0
    %1379 = vmatprep.mubr.bf16.mxu0 0
    %1380 = vmatmul.mubr.bf16.gmra.mrb[0].mxu0 %v1305
    %v1381 = vpop.f32.mrb[0].mxu0
    %v1382 = vadd.f32 0.0, %v1381
    %v1383 = vpop.f32.mrb[0].mxu0
    %v1384 = vadd.f32 0.0, %v1383
    %v1385 = vpop.f32.mrb[0].mxu0
    %v1386 = vpop.f32.mrb[0].mxu0
    %1387 = vdwg.mxu0
    %v1388 = vadd.f32 %v1301, %v1341
    %v1389 = vadd.f32 %v1302, %v1343
    %v1390 = vadd.f32 %v1303, %v1382
    %v1391 = vadd.f32 %v1304, %v1384
    %v1392 = vxor.u32 %v1388, 2147483648
    %v1393 = vmul.f32 %v1392, 1.442695
    %v1394 = vpow.pop %v1393
    %v1395 = vadd.f32 %v1394, 1.0
    %v1396 = vrcp.pop %v1395
    %v1397 = vmul.f32 1.0, %v1396
    %v1398 = vxor.u32 %v1389, 2147483648
    %v1399 = vmul.f32 %v1398, 1.442695
    %v1400 = vpow.pop %v1399
    %v1401 = vadd.f32 %v1400, 1.0
    %v1402 = vrcp.pop %v1401
    %v1403 = vmul.f32 1.0, %v1402
    %v1404 = vtanh.pop %v1390
    %v1405 = vxor.u32 %v1391, 2147483648
    %v1406 = vmul.f32 %v1405, 1.442695
    %v1407 = vpow.pop %v1406
    %v1408 = vadd.f32 %v1407, 1.0
    %v1409 = vrcp.pop %v1408
    %v1410 = vmul.f32 1.0, %v1409
    %v1411 = vmul.f32 %v1403, %v1179
    %v1412 = vmul.f32 %v1397, %v1404
    %v1413 = vadd.f32 %v1411, %v1412
    %v1414 = vtanh.pop %v1413
    %v1415 = vmul.f32 %v1410, %v1414
    %s1416 = scalar_lea.vmem [#allocation10], 128
    %v1417 = vld [vmem:[%s1416] sm:$0xff]
    %v1418 = vld [vmem:[%s1416 + $0x8] sm:$0xff]
    %v1419 = vld [vmem:[%s1416 + $0x10] sm:$0xff]
    %v1420 = vld [vmem:[%s1416 + $0x18] sm:$0xff]
    %v1421 = vpack.c.bf16 %v1297, %v1297
    %1422 = vmatprep.subr.bf16.mxu0 %v657
    %1423 = vmatpush1.bf16.msra.mxu0 %v656
    %1424 = vmatprep.subr.bf16.mxu0 %v661
    %1425 = vmatpush1.bf16.msra.mxu0 %v660
    %1426 = vmatprep.subr.bf16.mxu0 %v665
    %1427 = vmatpush1.bf16.msra.mxu0 %v664
    %1428 = vmatprep.subr.bf16.mxu0 %v669
    %1429 = vmatpush1.bf16.msra.mxu0 %v668
    %1430 = vmatprep.subr.bf16.mxu0 %v673
    %1431 = vmatpush1.bf16.msra.mxu0 %v672
    %1432 = vmatprep.subr.bf16.mxu0 %v677
    %1433 = vmatpush1.bf16.msra.mxu0 %v676
    %1434 = vmatprep.subr.bf16.mxu0 %v681
    %1435 = vmatpush1.bf16.msra.mxu0 %v680
    %1436 = vmatprep.subr.bf16.mxu0 %v685
    %1437 = vmatpush1.bf16.msra.mxu0 %v684
    %1438 = vmatprep.subr.bf16.mxu0 0
    %1439 = vmatpush1.bf16.msra.mxu0 0
    %1440 = vmatprep.subr.bf16.mxu0 0
    %1441 = vmatpush1.bf16.msra.mxu0 0
    %1442 = vmatprep.subr.bf16.mxu0 0
    %1443 = vmatpush1.bf16.msra.mxu0 0
    %1444 = vmatprep.subr.bf16.mxu0 0
    %1445 = vmatpush1.bf16.msra.mxu0 0
    %1446 = vmatprep.subr.bf16.mxu0 0
    %1447 = vmatpush1.bf16.msra.mxu0 0
    %1448 = vmatprep.subr.bf16.mxu0 0
    %1449 = vmatpush1.bf16.msra.mxu0 0
    %1450 = vmatprep.subr.bf16.mxu0 0
    %1451 = vmatpush1.bf16.msra.mxu0 0
    %1452 = vmatprep.subr.bf16.mxu0 0
    %1453 = vmatpush1.bf16.msra.mxu0 0
    %1454 = vmatprep.mubr.bf16.mxu0 0
    %1455 = vmatmul.mubr.bf16.gmra.mrb[0].mxu0 %v1421
    %v1456 = vpop.f32.mrb[0].mxu0
    %v1457 = vadd.f32 0.0, %v1456
    %v1458 = vpop.f32.mrb[0].mxu0
    %v1459 = vadd.f32 0.0, %v1458
    %v1460 = vpop.f32.mrb[0].mxu0
    %v1461 = vpop.f32.mrb[0].mxu0
    %1462 = vdwg.mxu0
    %1463 = vmatprep.subr.bf16.mxu0 %v659
    %1464 = vmatpush1.bf16.msra.mxu0 %v658
    %1465 = vmatprep.subr.bf16.mxu0 %v663
    %1466 = vmatpush1.bf16.msra.mxu0 %v662
    %1467 = vmatprep.subr.bf16.mxu0 %v667
    %1468 = vmatpush1.bf16.msra.mxu0 %v666
    %1469 = vmatprep.subr.bf16.mxu0 %v671
    %1470 = vmatpush1.bf16.msra.mxu0 %v670
    %1471 = vmatprep.subr.bf16.mxu0 %v675
    %1472 = vmatpush1.bf16.msra.mxu0 %v674
    %1473 = vmatprep.subr.bf16.mxu0 %v679
    %1474 = vmatpush1.bf16.msra.mxu0 %v678
    %1475 = vmatprep.subr.bf16.mxu0 %v683
    %1476 = vmatpush1.bf16.msra.mxu0 %v682
    %1477 = vmatprep.subr.bf16.mxu0 %v687
    %1478 = vmatpush1.bf16.msra.mxu0 %v686
    %1479 = vmatprep.subr.bf16.mxu0 0
    %1480 = vmatpush1.bf16.msra.mxu0 0
    %1481 = vmatprep.subr.bf16.mxu0 0
    %1482 = vmatpush1.bf16.msra.mxu0 0
    %1483 = vmatprep.subr.bf16.mxu0 0
    %1484 = vmatpush1.bf16.msra.mxu0 0
    %1485 = vmatprep.subr.bf16.mxu0 0
    %1486 = vmatpush1.bf16.msra.mxu0 0
    %1487 = vmatprep.subr.bf16.mxu0 0
    %1488 = vmatpush1.bf16.msra.mxu0 0
    %1489 = vmatprep.subr.bf16.mxu0 0
    %1490 = vmatpush1.bf16.msra.mxu0 0
    %1491 = vmatprep.subr.bf16.mxu0 0
    %1492 = vmatpush1.bf16.msra.mxu0 0
    %1493 = vmatprep.subr.bf16.mxu0 0
    %1494 = vmatpush1.bf16.msra.mxu0 0
    %1495 = vmatprep.mubr.bf16.mxu0 0
    %1496 = vmatmul.mubr.bf16.gmra.mrb[0].mxu0 %v1421
    %v1497 = vpop.f32.mrb[0].mxu0
    %v1498 = vadd.f32 0.0, %v1497
    %v1499 = vpop.f32.mrb[0].mxu0
    %v1500 = vadd.f32 0.0, %v1499
    %v1501 = vpop.f32.mrb[0].mxu0
    %v1502 = vpop.f32.mrb[0].mxu0
    %1503 = vdwg.mxu0
    %v1504 = vadd.f32 %v1417, %v1457
    %v1505 = vadd.f32 %v1418, %v1459
    %v1506 = vadd.f32 %v1419, %v1498
    %v1507 = vadd.f32 %v1420, %v1500
    %v1508 = vxor.u32 %v1504, 2147483648
    %v1509 = vmul.f32 %v1508, 1.442695
    %v1510 = vpow.pop %v1509
    %v1511 = vadd.f32 %v1510, 1.0
    %v1512 = vrcp.pop %v1511
    %v1513 = vmul.f32 1.0, %v1512
    %v1514 = vxor.u32 %v1505, 2147483648
    %v1515 = vmul.f32 %v1514, 1.442695
    %v1516 = vpow.pop %v1515
    %v1517 = vadd.f32 %v1516, 1.0
    %v1518 = vrcp.pop %v1517
    %v1519 = vmul.f32 1.0, %v1518
    %v1520 = vtanh.pop %v1506
    %v1521 = vxor.u32 %v1507, 2147483648
    %v1522 = vmul.f32 %v1521, 1.442695
    %v1523 = vpow.pop %v1522
    %v1524 = vadd.f32 %v1523, 1.0
    %v1525 = vrcp.pop %v1524
    %v1526 = vmul.f32 1.0, %v1525
    %v1527 = vmul.f32 %v1519, %v1295
    %v1528 = vmul.f32 %v1513, %v1520
    %v1529 = vadd.f32 %v1527, %v1528
    %v1530 = vtanh.pop %v1529
    %v1531 = vmul.f32 %v1526, %v1530
    %v1532 = vmax.f32 %v1298, %v1415
    %v1533 = vmax.f32 %v1299, %v1531
    %s1534 = scalar_lea.vmem [#allocation9], 128
    %v1535 = vld [vmem:[%s1534] sm:$0xff]
    %v1536 = vld [vmem:[%s1534 + $0x8] sm:$0xff]
    %v1537 = vld [vmem:[%s1534 + $0x10] sm:$0xff]
    %v1538 = vld [vmem:[%s1534 + $0x18] sm:$0xff]
    %v1539 = vpack.c.bf16 %v1415, %v1415
    %1540 = vmatprep.subr.bf16.mxu0 %v381
    %1541 = vmatpush1.bf16.msra.mxu0 %v380
    %1542 = vmatprep.subr.bf16.mxu0 %v385
    %1543 = vmatpush1.bf16.msra.mxu0 %v384
    %1544 = vmatprep.subr.bf16.mxu0 %v389
    %1545 = vmatpush1.bf16.msra.mxu0 %v388
    %1546 = vmatprep.subr.bf16.mxu0 %v393
    %1547 = vmatpush1.bf16.msra.mxu0 %v392
    %1548 = vmatprep.subr.bf16.mxu0 %v397
    %1549 = vmatpush1.bf16.msra.mxu0 %v396
    %1550 = vmatprep.subr.bf16.mxu0 %v401
    %1551 = vmatpush1.bf16.msra.mxu0 %v400
    %1552 = vmatprep.subr.bf16.mxu0 %v405
    %1553 = vmatpush1.bf16.msra.mxu0 %v404
    %1554 = vmatprep.subr.bf16.mxu0 %v409
    %1555 = vmatpush1.bf16.msra.mxu0 %v408
    %1556 = vmatprep.subr.bf16.mxu0 0
    %1557 = vmatpush1.bf16.msra.mxu0 0
    %1558 = vmatprep.subr.bf16.mxu0 0
    %1559 = vmatpush1.bf16.msra.mxu0 0
    %1560 = vmatprep.subr.bf16.mxu0 0
    %1561 = vmatpush1.bf16.msra.mxu0 0
    %1562 = vmatprep.subr.bf16.mxu0 0
    %1563 = vmatpush1.bf16.msra.mxu0 0
    %1564 = vmatprep.subr.bf16.mxu0 0
    %1565 = vmatpush1.bf16.msra.mxu0 0
    %1566 = vmatprep.subr.bf16.mxu0 0
    %1567 = vmatpush1.bf16.msra.mxu0 0
    %1568 = vmatprep.subr.bf16.mxu0 0
    %1569 = vmatpush1.bf16.msra.mxu0 0
    %1570 = vmatprep.subr.bf16.mxu0 0
    %1571 = vmatpush1.bf16.msra.mxu0 0
    %1572 = vmatprep.mubr.bf16.mxu0 0
    %1573 = vmatmul.mubr.bf16.gmra.mrb[0].mxu0 %v1539
    %v1574 = vpop.f32.mrb[0].mxu0
    %v1575 = vadd.f32 0.0, %v1574
    %v1576 = vpop.f32.mrb[0].mxu0
    %v1577 = vadd.f32 0.0, %v1576
    %v1578 = vpop.f32.mrb[0].mxu0
    %v1579 = vpop.f32.mrb[0].mxu0
    %1580 = vdwg.mxu0
    %1581 = vmatprep.subr.bf16.mxu0 %v383
    %1582 = vmatpush1.bf16.msra.mxu0 %v382
    %1583 = vmatprep.subr.bf16.mxu0 %v387
    %1584 = vmatpush1.bf16.msra.mxu0 %v386
    %1585 = vmatprep.subr.bf16.mxu0 %v391
    %1586 = vmatpush1.bf16.msra.mxu0 %v390
    %1587 = vmatprep.subr.bf16.mxu0 %v395
    %1588 = vmatpush1.bf16.msra.mxu0 %v394
    %1589 = vmatprep.subr.bf16.mxu0 %v399
    %1590 = vmatpush1.bf16.msra.mxu0 %v398
    %1591 = vmatprep.subr.bf16.mxu0 %v403
    %1592 = vmatpush1.bf16.msra.mxu0 %v402
    %1593 = vmatprep.subr.bf16.mxu0 %v407
    %1594 = vmatpush1.bf16.msra.mxu0 %v406
    %1595 = vmatprep.subr.bf16.mxu0 %v411
    %1596 = vmatpush1.bf16.msra.mxu0 %v410
    %1597 = vmatprep.subr.bf16.mxu0 0
    %1598 = vmatpush1.bf16.msra.mxu0 0
    %1599 = vmatprep.subr.bf16.mxu0 0
    %1600 = vmatpush1.bf16.msra.mxu0 0
    %1601 = vmatprep.subr.bf16.mxu0 0
    %1602 = vmatpush1.bf16.msra.mxu0 0
    %1603 = vmatprep.subr.bf16.mxu0 0
    %1604 = vmatpush1.bf16.msra.mxu0 0
    %1605 = vmatprep.subr.bf16.mxu0 0
    %1606 = vmatpush1.bf16.msra.mxu0 0
    %1607 = vmatprep.subr.bf16.mxu0 0
    %1608 = vmatpush1.bf16.msra.mxu0 0
    %1609 = vmatprep.subr.bf16.mxu0 0
    %1610 = vmatpush1.bf16.msra.mxu0 0
    %1611 = vmatprep.subr.bf16.mxu0 0
    %1612 = vmatpush1.bf16.msra.mxu0 0
    %1613 = vmatprep.mubr.bf16.mxu0 0
    %1614 = vmatmul.mubr.bf16.gmra.mrb[0].mxu0 %v1539
    %v1615 = vpop.f32.mrb[0].mxu0
    %v1616 = vadd.f32 0.0, %v1615
    %v1617 = vpop.f32.mrb[0].mxu0
    %v1618 = vadd.f32 0.0, %v1617
    %v1619 = vpop.f32.mrb[0].mxu0
    %v1620 = vpop.f32.mrb[0].mxu0
    %1621 = vdwg.mxu0
    %v1622 = vadd.f32 %v1535, %v1575
    %v1623 = vadd.f32 %v1536, %v1577
    %v1624 = vadd.f32 %v1537, %v1616
    %v1625 = vadd.f32 %v1538, %v1618
    %v1626 = vxor.u32 %v1622, 2147483648
    %v1627 = vmul.f32 %v1626, 1.442695
    %v1628 = vpow.pop %v1627
    %v1629 = vadd.f32 %v1628, 1.0
    %v1630 = vrcp.pop %v1629
    %v1631 = vmul.f32 1.0, %v1630
    %v1632 = vxor.u32 %v1623, 2147483648
    %v1633 = vmul.f32 %v1632, 1.442695
    %v1634 = vpow.pop %v1633
    %v1635 = vadd.f32 %v1634, 1.0
    %v1636 = vrcp.pop %v1635
    %v1637 = vmul.f32 1.0, %v1636
    %v1638 = vtanh.pop %v1624
    %v1639 = vxor.u32 %v1625, 2147483648
    %v1640 = vmul.f32 %v1639, 1.442695
    %v1641 = vpow.pop %v1640
    %v1642 = vadd.f32 %v1641, 1.0
    %v1643 = vrcp.pop %v1642
    %v1644 = vmul.f32 1.0, %v1643
    %v1645 = vmul.f32 %v1637, %v1413
    %v1646 = vmul.f32 %v1631, %v1638
    %v1647 = vadd.f32 %v1645, %v1646
    %v1648 = vtanh.pop %v1647
    %v1649 = vmul.f32 %v1644, %v1648
    %s1650 = scalar_lea.vmem [#allocation10], 96
    %v1651 = vld [vmem:[%s1650] sm:$0xff]
    %v1652 = vld [vmem:[%s1650 + $0x8] sm:$0xff]
    %v1653 = vld [vmem:[%s1650 + $0x10] sm:$0xff]
    %v1654 = vld [vmem:[%s1650 + $0x18] sm:$0xff]
    %v1655 = vpack.c.bf16 %v1531, %v1531
    %1656 = vmatprep.subr.bf16.mxu0 %v657
    %1657 = vmatpush1.bf16.msra.mxu0 %v656
    %1658 = vmatprep.subr.bf16.mxu0 %v661
    %1659 = vmatpush1.bf16.msra.mxu0 %v660
    %1660 = vmatprep.subr.bf16.mxu0 %v665
    %1661 = vmatpush1.bf16.msra.mxu0 %v664
    %1662 = vmatprep.subr.bf16.mxu0 %v669
    %1663 = vmatpush1.bf16.msra.mxu0 %v668
    %1664 = vmatprep.subr.bf16.mxu0 %v673
    %1665 = vmatpush1.bf16.msra.mxu0 %v672
    %1666 = vmatprep.subr.bf16.mxu0 %v677
    %1667 = vmatpush1.bf16.msra.mxu0 %v676
    %1668 = vmatprep.subr.bf16.mxu0 %v681
    %1669 = vmatpush1.bf16.msra.mxu0 %v680
    %1670 = vmatprep.subr.bf16.mxu0 %v685
    %1671 = vmatpush1.bf16.msra.mxu0 %v684
    %1672 = vmatprep.subr.bf16.mxu0 0
    %1673 = vmatpush1.bf16.msra.mxu0 0
    %1674 = vmatprep.subr.bf16.mxu0 0
    %1675 = vmatpush1.bf16.msra.mxu0 0
    %1676 = vmatprep.subr.bf16.mxu0 0
    %1677 = vmatpush1.bf16.msra.mxu0 0
    %1678 = vmatprep.subr.bf16.mxu0 0
    %1679 = vmatpush1.bf16.msra.mxu0 0
    %1680 = vmatprep.subr.bf16.mxu0 0
    %1681 = vmatpush1.bf16.msra.mxu0 0
    %1682 = vmatprep.subr.bf16.mxu0 0
    %1683 = vmatpush1.bf16.msra.mxu0 0
    %1684 = vmatprep.subr.bf16.mxu0 0
    %1685 = vmatpush1.bf16.msra.mxu0 0
    %1686 = vmatprep.subr.bf16.mxu0 0
    %1687 = vmatpush1.bf16.msra.mxu0 0
    %1688 = vmatprep.mubr.bf16.mxu0 0
    %1689 = vmatmul.mubr.bf16.gmra.mrb[0].mxu0 %v1655
    %v1690 = vpop.f32.mrb[0].mxu0
    %v1691 = vadd.f32 0.0, %v1690
    %v1692 = vpop.f32.mrb[0].mxu0
    %v1693 = vadd.f32 0.0, %v1692
    %v1694 = vpop.f32.mrb[0].mxu0
    %v1695 = vpop.f32.mrb[0].mxu0
    %1696 = vdwg.mxu0
    %1697 = vmatprep.subr.bf16.mxu0 %v659
    %1698 = vmatpush1.bf16.msra.mxu0 %v658
    %1699 = vmatprep.subr.bf16.mxu0 %v663
    %1700 = vmatpush1.bf16.msra.mxu0 %v662
    %1701 = vmatprep.subr.bf16.mxu0 %v667
    %1702 = vmatpush1.bf16.msra.mxu0 %v666
    %1703 = vmatprep.subr.bf16.mxu0 %v671
    %1704 = vmatpush1.bf16.msra.mxu0 %v670
    %1705 = vmatprep.subr.bf16.mxu0 %v675
    %1706 = vmatpush1.bf16.msra.mxu0 %v674
    %1707 = vmatprep.subr.bf16.mxu0 %v679
    %1708 = vmatpush1.bf16.msra.mxu0 %v678
    %1709 = vmatprep.subr.bf16.mxu0 %v683
    %1710 = vmatpush1.bf16.msra.mxu0 %v682
    %1711 = vmatprep.subr.bf16.mxu0 %v687
    %1712 = vmatpush1.bf16.msra.mxu0 %v686
    %1713 = vmatprep.subr.bf16.mxu0 0
    %1714 = vmatpush1.bf16.msra.mxu0 0
    %1715 = vmatprep.subr.bf16.mxu0 0
    %1716 = vmatpush1.bf16.msra.mxu0 0
    %1717 = vmatprep.subr.bf16.mxu0 0
    %1718 = vmatpush1.bf16.msra.mxu0 0
    %1719 = vmatprep.subr.bf16.mxu0 0
    %1720 = vmatpush1.bf16.msra.mxu0 0
    %1721 = vmatprep.subr.bf16.mxu0 0
    %1722 = vmatpush1.bf16.msra.mxu0 0
    %1723 = vmatprep.subr.bf16.mxu0 0
    %1724 = vmatpush1.bf16.msra.mxu0 0
    %1725 = vmatprep.subr.bf16.mxu0 0
    %1726 = vmatpush1.bf16.msra.mxu0 0
    %1727 = vmatprep.subr.bf16.mxu0 0
    %1728 = vmatpush1.bf16.msra.mxu0 0
    %1729 = vmatprep.mubr.bf16.mxu0 0
    %1730 = vmatmul.mubr.bf16.gmra.mrb[0].mxu0 %v1655
    %v1731 = vpop.f32.mrb[0].mxu0
    %v1732 = vadd.f32 0.0, %v1731
    %v1733 = vpop.f32.mrb[0].mxu0
    %v1734 = vadd.f32 0.0, %v1733
    %v1735 = vpop.f32.mrb[0].mxu0
    %v1736 = vpop.f32.mrb[0].mxu0
    %1737 = vdwg.mxu0
    %v1738 = vadd.f32 %v1651, %v1691
    %v1739 = vadd.f32 %v1652, %v1693
    %v1740 = vadd.f32 %v1653, %v1732
    %v1741 = vadd.f32 %v1654, %v1734
    %v1742 = vxor.u32 %v1738, 2147483648
    %v1743 = vmul.f32 %v1742, 1.442695
    %v1744 = vpow.pop %v1743
    %v1745 = vadd.f32 %v1744, 1.0
    %v1746 = vrcp.pop %v1745
    %v1747 = vmul.f32 1.0, %v1746
    %v1748 = vxor.u32 %v1739, 2147483648
    %v1749 = vmul.f32 %v1748, 1.442695
    %v1750 = vpow.pop %v1749
    %v1751 = vadd.f32 %v1750, 1.0
    %v1752 = vrcp.pop %v1751
    %v1753 = vmul.f32 1.0, %v1752
    %v1754 = vtanh.pop %v1740
    %v1755 = vxor.u32 %v1741, 2147483648
    %v1756 = vmul.f32 %v1755, 1.442695
    %v1757 = vpow.pop %v1756
    %v1758 = vadd.f32 %v1757, 1.0
    %v1759 = vrcp.pop %v1758
    %v1760 = vmul.f32 1.0, %v1759
    %v1761 = vmul.f32 %v1753, %v1529
    %v1762 = vmul.f32 %v1747, %v1754
    %v1763 = vadd.f32 %v1761, %v1762
    %v1764 = vtanh.pop %v1763
    %v1765 = vmul.f32 %v1760, %v1764
    %v1766 = vmax.f32 %v1532, %v1649
    %v1767 = vmax.f32 %v1533, %v1765
    %s1768 = scalar_lea.vmem [#allocation9], 160
    %v1769 = vld [vmem:[%s1768] sm:$0xff]
    %v1770 = vld [vmem:[%s1768 + $0x8] sm:$0xff]
    %v1771 = vld [vmem:[%s1768 + $0x10] sm:$0xff]
    %v1772 = vld [vmem:[%s1768 + $0x18] sm:$0xff]
    %v1773 = vpack.c.bf16 %v1649, %v1649
    %1774 = vmatprep.subr.bf16.mxu0 %v381
    %1775 = vmatpush1.bf16.msra.mxu0 %v380
    %1776 = vmatprep.subr.bf16.mxu0 %v385
    %1777 = vmatpush1.bf16.msra.mxu0 %v384
    %1778 = vmatprep.subr.bf16.mxu0 %v389
    %1779 = vmatpush1.bf16.msra.mxu0 %v388
    %1780 = vmatprep.subr.bf16.mxu0 %v393
    %1781 = vmatpush1.bf16.msra.mxu0 %v392
    %1782 = vmatprep.subr.bf16.mxu0 %v397
    %1783 = vmatpush1.bf16.msra.mxu0 %v396
    %1784 = vmatprep.subr.bf16.mxu0 %v401
    %1785 = vmatpush1.bf16.msra.mxu0 %v400
    %1786 = vmatprep.subr.bf16.mxu0 %v405
    %1787 = vmatpush1.bf16.msra.mxu0 %v404
    %1788 = vmatprep.subr.bf16.mxu0 %v409
    %1789 = vmatpush1.bf16.msra.mxu0 %v408
    %1790 = vmatprep.subr.bf16.mxu0 0
    %1791 = vmatpush1.bf16.msra.mxu0 0
    %1792 = vmatprep.subr.bf16.mxu0 0
    %1793 = vmatpush1.bf16.msra.mxu0 0
    %1794 = vmatprep.subr.bf16.mxu0 0
    %1795 = vmatpush1.bf16.msra.mxu0 0
    %1796 = vmatprep.subr.bf16.mxu0 0
    %1797 = vmatpush1.bf16.msra.mxu0 0
    %1798 = vmatprep.subr.bf16.mxu0 0
    %1799 = vmatpush1.bf16.msra.mxu0 0
    %1800 = vmatprep.subr.bf16.mxu0 0
    %1801 = vmatpush1.bf16.msra.mxu0 0
    %1802 = vmatprep.subr.bf16.mxu0 0
    %1803 = vmatpush1.bf16.msra.mxu0 0
    %1804 = vmatprep.subr.bf16.mxu0 0
    %1805 = vmatpush1.bf16.msra.mxu0 0
    %1806 = vmatprep.mubr.bf16.mxu0 0
    %1807 = vmatmul.mubr.bf16.gmra.mrb[0].mxu0 %v1773
    %v1808 = vpop.f32.mrb[0].mxu0
    %v1809 = vadd.f32 0.0, %v1808
    %v1810 = vpop.f32.mrb[0].mxu0
    %v1811 = vadd.f32 0.0, %v1810
    %v1812 = vpop.f32.mrb[0].mxu0
    %v1813 = vpop.f32.mrb[0].mxu0
    %1814 = vdwg.mxu0
    %1815 = vmatprep.subr.bf16.mxu0 %v383
    %1816 = vmatpush1.bf16.msra.mxu0 %v382
    %1817 = vmatprep.subr.bf16.mxu0 %v387
    %1818 = vmatpush1.bf16.msra.mxu0 %v386
    %1819 = vmatprep.subr.bf16.mxu0 %v391
    %1820 = vmatpush1.bf16.msra.mxu0 %v390
    %1821 = vmatprep.subr.bf16.mxu0 %v395
    %1822 = vmatpush1.bf16.msra.mxu0 %v394
    %1823 = vmatprep.subr.bf16.mxu0 %v399
    %1824 = vmatpush1.bf16.msra.mxu0 %v398
    %1825 = vmatprep.subr.bf16.mxu0 %v403
    %1826 = vmatpush1.bf16.msra.mxu0 %v402
    %1827 = vmatprep.subr.bf16.mxu0 %v407
    %1828 = vmatpush1.bf16.msra.mxu0 %v406
    %1829 = vmatprep.subr.bf16.mxu0 %v411
    %1830 = vmatpush1.bf16.msra.mxu0 %v410
    %1831 = vmatprep.subr.bf16.mxu0 0
    %1832 = vmatpush1.bf16.msra.mxu0 0
    %1833 = vmatprep.subr.bf16.mxu0 0
    %1834 = vmatpush1.bf16.msra.mxu0 0
    %1835 = vmatprep.subr.bf16.mxu0 0
    %1836 = vmatpush1.bf16.msra.mxu0 0
    %1837 = vmatprep.subr.bf16.mxu0 0
    %1838 = vmatpush1.bf16.msra.mxu0 0
    %1839 = vmatprep.subr.bf16.mxu0 0
    %1840 = vmatpush1.bf16.msra.mxu0 0
    %1841 = vmatprep.subr.bf16.mxu0 0
    %1842 = vmatpush1.bf16.msra.mxu0 0
    %1843 = vmatprep.subr.bf16.mxu0 0
    %1844 = vmatpush1.bf16.msra.mxu0 0
    %1845 = vmatprep.subr.bf16.mxu0 0
    %1846 = vmatpush1.bf16.msra.mxu0 0
    %1847 = vmatprep.mubr.bf16.mxu0 0
    %1848 = vmatmul.mubr.bf16.gmra.mrb[0].mxu0 %v1773
    %v1849 = vpop.f32.mrb[0].mxu0
    %v1850 = vadd.f32 0.0, %v1849
    %v1851 = vpop.f32.mrb[0].mxu0
    %v1852 = vadd.f32 0.0, %v1851
    %v1853 = vpop.f32.mrb[0].mxu0
    %v1854 = vpop.f32.mrb[0].mxu0
    %1855 = vdwg.mxu0
    %v1856 = vadd.f32 %v1769, %v1809
    %v1857 = vadd.f32 %v1770, %v1811
    %v1858 = vadd.f32 %v1771, %v1850
    %v1859 = vadd.f32 %v1772, %v1852
    %v1860 = vxor.u32 %v1856, 2147483648
    %v1861 = vmul.f32 %v1860, 1.442695
    %v1862 = vpow.pop %v1861
    %v1863 = vadd.f32 %v1862, 1.0
    %v1864 = vrcp.pop %v1863
    %v1865 = vmul.f32 1.0, %v1864
    %v1866 = vxor.u32 %v1857, 2147483648
    %v1867 = vmul.f32 %v1866, 1.442695
    %v1868 = vpow.pop %v1867
    %v1869 = vadd.f32 %v1868, 1.0
    %v1870 = vrcp.pop %v1869
    %v1871 = vmul.f32 1.0, %v1870
    %v1872 = vtanh.pop %v1858
    %v1873 = vxor.u32 %v1859, 2147483648
    %v1874 = vmul.f32 %v1873, 1.442695
    %v1875 = vpow.pop %v1874
    %v1876 = vadd.f32 %v1875, 1.0
    %v1877 = vrcp.pop %v1876
    %v1878 = vmul.f32 1.0, %v1877
    %v1879 = vmul.f32 %v1871, %v1647
    %v1880 = vmul.f32 %v1865, %v1872
    %v1881 = vadd.f32 %v1879, %v1880
    %v1882 = vtanh.pop %v1881
    %v1883 = vmul.f32 %v1878, %v1882
    %s1884 = scalar_lea.vmem [#allocation10], 64
    %v1885 = vld [vmem:[%s1884] sm:$0xff]
    %v1886 = vld [vmem:[%s1884 + $0x8] sm:$0xff]
    %v1887 = vld [vmem:[%s1884 + $0x10] sm:$0xff]
    %v1888 = vld [vmem:[%s1884 + $0x18] sm:$0xff]
    %v1889 = vpack.c.bf16 %v1765, %v1765
    %1890 = vmatprep.subr.bf16.mxu0 %v657
    %1891 = vmatpush1.bf16.msra.mxu0 %v656
    %1892 = vmatprep.subr.bf16.mxu0 %v661
    %1893 = vmatpush1.bf16.msra.mxu0 %v660
    %1894 = vmatprep.subr.bf16.mxu0 %v665
    %1895 = vmatpush1.bf16.msra.mxu0 %v664
    %1896 = vmatprep.subr.bf16.mxu0 %v669
    %1897 = vmatpush1.bf16.msra.mxu0 %v668
    %1898 = vmatprep.subr.bf16.mxu0 %v673
    %1899 = vmatpush1.bf16.msra.mxu0 %v672
    %1900 = vmatprep.subr.bf16.mxu0 %v677
    %1901 = vmatpush1.bf16.msra.mxu0 %v676
    %1902 = vmatprep.subr.bf16.mxu0 %v681
    %1903 = vmatpush1.bf16.msra.mxu0 %v680
    %1904 = vmatprep.subr.bf16.mxu0 %v685
    %1905 = vmatpush1.bf16.msra.mxu0 %v684
    %1906 = vmatprep.subr.bf16.mxu0 0
    %1907 = vmatpush1.bf16.msra.mxu0 0
    %1908 = vmatprep.subr.bf16.mxu0 0
    %1909 = vmatpush1.bf16.msra.mxu0 0
    %1910 = vmatprep.subr.bf16.mxu0 0
    %1911 = vmatpush1.bf16.msra.mxu0 0
    %1912 = vmatprep.subr.bf16.mxu0 0
    %1913 = vmatpush1.bf16.msra.mxu0 0
    %1914 = vmatprep.subr.bf16.mxu0 0
    %1915 = vmatpush1.bf16.msra.mxu0 0
    %1916 = vmatprep.subr.bf16.mxu0 0
    %1917 = vmatpush1.bf16.msra.mxu0 0
    %1918 = vmatprep.subr.bf16.mxu0 0
    %1919 = vmatpush1.bf16.msra.mxu0 0
    %1920 = vmatprep.subr.bf16.mxu0 0
    %1921 = vmatpush1.bf16.msra.mxu0 0
    %1922 = vmatprep.mubr.bf16.mxu0 0
    %1923 = vmatmul.mubr.bf16.gmra.mrb[0].mxu0 %v1889
    %v1924 = vpop.f32.mrb[0].mxu0
    %v1925 = vadd.f32 0.0, %v1924
    %v1926 = vpop.f32.mrb[0].mxu0
    %v1927 = vadd.f32 0.0, %v1926
    %v1928 = vpop.f32.mrb[0].mxu0
    %v1929 = vpop.f32.mrb[0].mxu0
    %1930 = vdwg.mxu0
    %1931 = vmatprep.subr.bf16.mxu0 %v659
    %1932 = vmatpush1.bf16.msra.mxu0 %v658
    %1933 = vmatprep.subr.bf16.mxu0 %v663
    %1934 = vmatpush1.bf16.msra.mxu0 %v662
    %1935 = vmatprep.subr.bf16.mxu0 %v667
    %1936 = vmatpush1.bf16.msra.mxu0 %v666
    %1937 = vmatprep.subr.bf16.mxu0 %v671
    %1938 = vmatpush1.bf16.msra.mxu0 %v670
    %1939 = vmatprep.subr.bf16.mxu0 %v675
    %1940 = vmatpush1.bf16.msra.mxu0 %v674
    %1941 = vmatprep.subr.bf16.mxu0 %v679
    %1942 = vmatpush1.bf16.msra.mxu0 %v678
    %1943 = vmatprep.subr.bf16.mxu0 %v683
    %1944 = vmatpush1.bf16.msra.mxu0 %v682
    %1945 = vmatprep.subr.bf16.mxu0 %v687
    %1946 = vmatpush1.bf16.msra.mxu0 %v686
    %1947 = vmatprep.subr.bf16.mxu0 0
    %1948 = vmatpush1.bf16.msra.mxu0 0
    %1949 = vmatprep.subr.bf16.mxu0 0
    %1950 = vmatpush1.bf16.msra.mxu0 0
    %1951 = vmatprep.subr.bf16.mxu0 0
    %1952 = vmatpush1.bf16.msra.mxu0 0
    %1953 = vmatprep.subr.bf16.mxu0 0
    %1954 = vmatpush1.bf16.msra.mxu0 0
    %1955 = vmatprep.subr.bf16.mxu0 0
    %1956 = vmatpush1.bf16.msra.mxu0 0
    %1957 = vmatprep.subr.bf16.mxu0 0
    %1958 = vmatpush1.bf16.msra.mxu0 0
    %1959 = vmatprep.subr.bf16.mxu0 0
    %1960 = vmatpush1.bf16.msra.mxu0 0
    %1961 = vmatprep.subr.bf16.mxu0 0
    %1962 = vmatpush1.bf16.msra.mxu0 0
    %1963 = vmatprep.mubr.bf16.mxu0 0
    %1964 = vmatmul.mubr.bf16.gmra.mrb[0].mxu0 %v1889
    %v1965 = vpop.f32.mrb[0].mxu0
    %v1966 = vadd.f32 0.0, %v1965
    %v1967 = vpop.f32.mrb[0].mxu0
    %v1968 = vadd.f32 0.0, %v1967
    %v1969 = vpop.f32.mrb[0].mxu0
    %v1970 = vpop.f32.mrb[0].mxu0
    %1971 = vdwg.mxu0
    %v1972 = vadd.f32 %v1885, %v1925
    %v1973 = vadd.f32 %v1886, %v1927
    %v1974 = vadd.f32 %v1887, %v1966
    %v1975 = vadd.f32 %v1888, %v1968
    %v1976 = vxor.u32 %v1972, 2147483648
    %v1977 = vmul.f32 %v1976, 1.442695
    %v1978 = vpow.pop %v1977
    %v1979 = vadd.f32 %v1978, 1.0
    %v1980 = vrcp.pop %v1979
    %v1981 = vmul.f32 1.0, %v1980
    %v1982 = vxor.u32 %v1973, 2147483648
    %v1983 = vmul.f32 %v1982, 1.442695
    %v1984 = vpow.pop %v1983
    %v1985 = vadd.f32 %v1984, 1.0
    %v1986 = vrcp.pop %v1985
    %v1987 = vmul.f32 1.0, %v1986
    %v1988 = vtanh.pop %v1974
    %v1989 = vxor.u32 %v1975, 2147483648
    %v1990 = vmul.f32 %v1989, 1.442695
    %v1991 = vpow.pop %v1990
    %v1992 = vadd.f32 %v1991, 1.0
    %v1993 = vrcp.pop %v1992
    %v1994 = vmul.f32 1.0, %v1993
    %v1995 = vmul.f32 %v1987, %v1763
    %v1996 = vmul.f32 %v1981, %v1988
    %v1997 = vadd.f32 %v1995, %v1996
    %v1998 = vtanh.pop %v1997
    %v1999 = vmul.f32 %v1994, %v1998
    %v2000 = vmax.f32 %v1766, %v1883
    %v2001 = vmax.f32 %v1767, %v1999
    %s2002 = scalar_lea.vmem [#allocation9], 192
    %v2003 = vld [vmem:[%s2002] sm:$0xff]
    %v2004 = vld [vmem:[%s2002 + $0x8] sm:$0xff]
    %v2005 = vld [vmem:[%s2002 + $0x10] sm:$0xff]
    %v2006 = vld [vmem:[%s2002 + $0x18] sm:$0xff]
    %v2007 = vpack.c.bf16 %v1883, %v1883
    %2008 = vmatprep.subr.bf16.mxu0 %v381
    %2009 = vmatpush1.bf16.msra.mxu0 %v380
    %2010 = vmatprep.subr.bf16.mxu0 %v385
    %2011 = vmatpush1.bf16.msra.mxu0 %v384
    %2012 = vmatprep.subr.bf16.mxu0 %v389
    %2013 = vmatpush1.bf16.msra.mxu0 %v388
    %2014 = vmatprep.subr.bf16.mxu0 %v393
    %2015 = vmatpush1.bf16.msra.mxu0 %v392
    %2016 = vmatprep.subr.bf16.mxu0 %v397
    %2017 = vmatpush1.bf16.msra.mxu0 %v396
    %2018 = vmatprep.subr.bf16.mxu0 %v401
    %2019 = vmatpush1.bf16.msra.mxu0 %v400
    %2020 = vmatprep.subr.bf16.mxu0 %v405
    %2021 = vmatpush1.bf16.msra.mxu0 %v404
    %2022 = vmatprep.subr.bf16.mxu0 %v409
    %2023 = vmatpush1.bf16.msra.mxu0 %v408
    %2024 = vmatprep.subr.bf16.mxu0 0
    %2025 = vmatpush1.bf16.msra.mxu0 0
    %2026 = vmatprep.subr.bf16.mxu0 0
    %2027 = vmatpush1.bf16.msra.mxu0 0
    %2028 = vmatprep.subr.bf16.mxu0 0
    %2029 = vmatpush1.bf16.msra.mxu0 0
    %2030 = vmatprep.subr.bf16.mxu0 0
    %2031 = vmatpush1.bf16.msra.mxu0 0
    %2032 = vmatprep.subr.bf16.mxu0 0
    %2033 = vmatpush1.bf16.msra.mxu0 0
    %2034 = vmatprep.subr.bf16.mxu0 0
    %2035 = vmatpush1.bf16.msra.mxu0 0
    %2036 = vmatprep.subr.bf16.mxu0 0
    %2037 = vmatpush1.bf16.msra.mxu0 0
    %2038 = vmatprep.subr.bf16.mxu0 0
    %2039 = vmatpush1.bf16.msra.mxu0 0
    %2040 = vmatprep.mubr.bf16.mxu0 0
    %2041 = vmatmul.mubr.bf16.gmra.mrb[0].mxu0 %v2007
    %v2042 = vpop.f32.mrb[0].mxu0
    %v2043 = vadd.f32 0.0, %v2042
    %v2044 = vpop.f32.mrb[0].mxu0
    %v2045 = vadd.f32 0.0, %v2044
    %v2046 = vpop.f32.mrb[0].mxu0
    %v2047 = vpop.f32.mrb[0].mxu0
    %2048 = vdwg.mxu0
    %2049 = vmatprep.subr.bf16.mxu0 %v383
    %2050 = vmatpush1.bf16.msra.mxu0 %v382
    %2051 = vmatprep.subr.bf16.mxu0 %v387
    %2052 = vmatpush1.bf16.msra.mxu0 %v386
    %2053 = vmatprep.subr.bf16.mxu0 %v391
    %2054 = vmatpush1.bf16.msra.mxu0 %v390
    %2055 = vmatprep.subr.bf16.mxu0 %v395
    %2056 = vmatpush1.bf16.msra.mxu0 %v394
    %2057 = vmatprep.subr.bf16.mxu0 %v399
    %2058 = vmatpush1.bf16.msra.mxu0 %v398
    %2059 = vmatprep.subr.bf16.mxu0 %v403
    %2060 = vmatpush1.bf16.msra.mxu0 %v402
    %2061 = vmatprep.subr.bf16.mxu0 %v407
    %2062 = vmatpush1.bf16.msra.mxu0 %v406
    %2063 = vmatprep.subr.bf16.mxu0 %v411
    %2064 = vmatpush1.bf16.msra.mxu0 %v410
    %2065 = vmatprep.subr.bf16.mxu0 0
    %2066 = vmatpush1.bf16.msra.mxu0 0
    %2067 = vmatprep.subr.bf16.mxu0 0
    %2068 = vmatpush1.bf16.msra.mxu0 0
    %2069 = vmatprep.subr.bf16.mxu0 0
    %2070 = vmatpush1.bf16.msra.mxu0 0
    %2071 = vmatprep.subr.bf16.mxu0 0
    %2072 = vmatpush1.bf16.msra.mxu0 0
    %2073 = vmatprep.subr.bf16.mxu0 0
    %2074 = vmatpush1.bf16.msra.mxu0 0
    %2075 = vmatprep.subr.bf16.mxu0 0
    %2076 = vmatpush1.bf16.msra.mxu0 0
    %2077 = vmatprep.subr.bf16.mxu0 0
    %2078 = vmatpush1.bf16.msra.mxu0 0
    %2079 = vmatprep.subr.bf16.mxu0 0
    %2080 = vmatpush1.bf16.msra.mxu0 0
    %2081 = vmatprep.mubr.bf16.mxu0 0
    %2082 = vmatmul.mubr.bf16.gmra.mrb[0].mxu0 %v2007
    %v2083 = vpop.f32.mrb[0].mxu0
    %v2084 = vadd.f32 0.0, %v2083
    %v2085 = vpop.f32.mrb[0].mxu0
    %v2086 = vadd.f32 0.0, %v2085
    %v2087 = vpop.f32.mrb[0].mxu0
    %v2088 = vpop.f32.mrb[0].mxu0
    %2089 = vdwg.mxu0
    %v2090 = vadd.f32 %v2003, %v2043
    %v2091 = vadd.f32 %v2004, %v2045
    %v2092 = vadd.f32 %v2005, %v2084
    %v2093 = vadd.f32 %v2006, %v2086
    %v2094 = vxor.u32 %v2090, 2147483648
    %v2095 = vmul.f32 %v2094, 1.442695
    %v2096 = vpow.pop %v2095
    %v2097 = vadd.f32 %v2096, 1.0
    %v2098 = vrcp.pop %v2097
    %v2099 = vmul.f32 1.0, %v2098
    %v2100 = vxor.u32 %v2091, 2147483648
    %v2101 = vmul.f32 %v2100, 1.442695
    %v2102 = vpow.pop %v2101
    %v2103 = vadd.f32 %v2102, 1.0
    %v2104 = vrcp.pop %v2103
    %v2105 = vmul.f32 1.0, %v2104
    %v2106 = vtanh.pop %v2092
    %v2107 = vxor.u32 %v2093, 2147483648
    %v2108 = vmul.f32 %v2107, 1.442695
    %v2109 = vpow.pop %v2108
    %v2110 = vadd.f32 %v2109, 1.0
    %v2111 = vrcp.pop %v2110
    %v2112 = vmul.f32 1.0, %v2111
    %v2113 = vmul.f32 %v2105, %v1881
    %v2114 = vmul.f32 %v2099, %v2106
    %v2115 = vadd.f32 %v2113, %v2114
    %v2116 = vtanh.pop %v2115
    %v2117 = vmul.f32 %v2112, %v2116
    %s2118 = scalar_lea.vmem [#allocation10], 32
    %v2119 = vld [vmem:[%s2118] sm:$0xff]
    %v2120 = vld [vmem:[%s2118 + $0x8] sm:$0xff]
    %v2121 = vld [vmem:[%s2118 + $0x10] sm:$0xff]
    %v2122 = vld [vmem:[%s2118 + $0x18] sm:$0xff]
    %v2123 = vpack.c.bf16 %v1999, %v1999
    %2124 = vmatprep.subr.bf16.mxu0 %v657
    %2125 = vmatpush1.bf16.msra.mxu0 %v656
    %2126 = vmatprep.subr.bf16.mxu0 %v661
    %2127 = vmatpush1.bf16.msra.mxu0 %v660
    %2128 = vmatprep.subr.bf16.mxu0 %v665
    %2129 = vmatpush1.bf16.msra.mxu0 %v664
    %2130 = vmatprep.subr.bf16.mxu0 %v669
    %2131 = vmatpush1.bf16.msra.mxu0 %v668
    %2132 = vmatprep.subr.bf16.mxu0 %v673
    %2133 = vmatpush1.bf16.msra.mxu0 %v672
    %2134 = vmatprep.subr.bf16.mxu0 %v677
    %2135 = vmatpush1.bf16.msra.mxu0 %v676
    %2136 = vmatprep.subr.bf16.mxu0 %v681
    %2137 = vmatpush1.bf16.msra.mxu0 %v680
    %2138 = vmatprep.subr.bf16.mxu0 %v685
    %2139 = vmatpush1.bf16.msra.mxu0 %v684
    %2140 = vmatprep.subr.bf16.mxu0 0
    %2141 = vmatpush1.bf16.msra.mxu0 0
    %2142 = vmatprep.subr.bf16.mxu0 0
    %2143 = vmatpush1.bf16.msra.mxu0 0
    %2144 = vmatprep.subr.bf16.mxu0 0
    %2145 = vmatpush1.bf16.msra.mxu0 0
    %2146 = vmatprep.subr.bf16.mxu0 0
    %2147 = vmatpush1.bf16.msra.mxu0 0
    %2148 = vmatprep.subr.bf16.mxu0 0
    %2149 = vmatpush1.bf16.msra.mxu0 0
    %2150 = vmatprep.subr.bf16.mxu0 0
    %2151 = vmatpush1.bf16.msra.mxu0 0
    %2152 = vmatprep.subr.bf16.mxu0 0
    %2153 = vmatpush1.bf16.msra.mxu0 0
    %2154 = vmatprep.subr.bf16.mxu0 0
    %2155 = vmatpush1.bf16.msra.mxu0 0
    %2156 = vmatprep.mubr.bf16.mxu0 0
    %2157 = vmatmul.mubr.bf16.gmra.mrb[0].mxu0 %v2123
    %v2158 = vpop.f32.mrb[0].mxu0
    %v2159 = vadd.f32 0.0, %v2158
    %v2160 = vpop.f32.mrb[0].mxu0
    %v2161 = vadd.f32 0.0, %v2160
    %v2162 = vpop.f32.mrb[0].mxu0
    %v2163 = vpop.f32.mrb[0].mxu0
    %2164 = vdwg.mxu0
    %2165 = vmatprep.subr.bf16.mxu0 %v659
    %2166 = vmatpush1.bf16.msra.mxu0 %v658
    %2167 = vmatprep.subr.bf16.mxu0 %v663
    %2168 = vmatpush1.bf16.msra.mxu0 %v662
    %2169 = vmatprep.subr.bf16.mxu0 %v667
    %2170 = vmatpush1.bf16.msra.mxu0 %v666
    %2171 = vmatprep.subr.bf16.mxu0 %v671
    %2172 = vmatpush1.bf16.msra.mxu0 %v670
    %2173 = vmatprep.subr.bf16.mxu0 %v675
    %2174 = vmatpush1.bf16.msra.mxu0 %v674
    %2175 = vmatprep.subr.bf16.mxu0 %v679
    %2176 = vmatpush1.bf16.msra.mxu0 %v678
    %2177 = vmatprep.subr.bf16.mxu0 %v683
    %2178 = vmatpush1.bf16.msra.mxu0 %v682
    %2179 = vmatprep.subr.bf16.mxu0 %v687
    %2180 = vmatpush1.bf16.msra.mxu0 %v686
    %2181 = vmatprep.subr.bf16.mxu0 0
    %2182 = vmatpush1.bf16.msra.mxu0 0
    %2183 = vmatprep.subr.bf16.mxu0 0
    %2184 = vmatpush1.bf16.msra.mxu0 0
    %2185 = vmatprep.subr.bf16.mxu0 0
    %2186 = vmatpush1.bf16.msra.mxu0 0
    %2187 = vmatprep.subr.bf16.mxu0 0
    %2188 = vmatpush1.bf16.msra.mxu0 0
    %2189 = vmatprep.subr.bf16.mxu0 0
    %2190 = vmatpush1.bf16.msra.mxu0 0
    %2191 = vmatprep.subr.bf16.mxu0 0
    %2192 = vmatpush1.bf16.msra.mxu0 0
    %2193 = vmatprep.subr.bf16.mxu0 0
    %2194 = vmatpush1.bf16.msra.mxu0 0
    %2195 = vmatprep.subr.bf16.mxu0 0
    %2196 = vmatpush1.bf16.msra.mxu0 0
    %2197 = vmatprep.mubr.bf16.mxu0 0
    %2198 = vmatmul.mubr.bf16.gmra.mrb[0].mxu0 %v2123
    %v2199 = vpop.f32.mrb[0].mxu0
    %v2200 = vadd.f32 0.0, %v2199
    %v2201 = vpop.f32.mrb[0].mxu0
    %v2202 = vadd.f32 0.0, %v2201
    %v2203 = vpop.f32.mrb[0].mxu0
    %v2204 = vpop.f32.mrb[0].mxu0
    %2205 = vdwg.mxu0
    %v2206 = vadd.f32 %v2119, %v2159
    %v2207 = vadd.f32 %v2120, %v2161
    %v2208 = vadd.f32 %v2121, %v2200
    %v2209 = vadd.f32 %v2122, %v2202
    %v2210 = vxor.u32 %v2206, 2147483648
    %v2211 = vmul.f32 %v2210, 1.442695
    %v2212 = vpow.pop %v2211
    %v2213 = vadd.f32 %v2212, 1.0
    %v2214 = vrcp.pop %v2213
    %v2215 = vmul.f32 1.0, %v2214
    %v2216 = vxor.u32 %v2207, 2147483648
    %v2217 = vmul.f32 %v2216, 1.442695
    %v2218 = vpow.pop %v2217
    %v2219 = vadd.f32 %v2218, 1.0
    %v2220 = vrcp.pop %v2219
    %v2221 = vmul.f32 1.0, %v2220
    %v2222 = vtanh.pop %v2208
    %v2223 = vxor.u32 %v2209, 2147483648
    %v2224 = vmul.f32 %v2223, 1.442695
    %v2225 = vpow.pop %v2224
    %v2226 = vadd.f32 %v2225, 1.0
    %v2227 = vrcp.pop %v2226
    %v2228 = vmul.f32 1.0, %v2227
    %v2229 = vmul.f32 %v2221, %v1997
    %v2230 = vmul.f32 %v2215, %v2222
    %v2231 = vadd.f32 %v2229, %v2230
    %v2232 = vtanh.pop %v2231
    %v2233 = vmul.f32 %v2228, %v2232
    %v2234 = vmax.f32 %v2000, %v2117
    %v2235 = vmax.f32 %v2001, %v2233
    %s2236 = scalar_lea.vmem [#allocation9], 224
    %v2237 = vld [vmem:[%s2236] sm:$0xff]
    %v2238 = vld [vmem:[%s2236 + $0x8] sm:$0xff]
    %v2239 = vld [vmem:[%s2236 + $0x10] sm:$0xff]
    %v2240 = vld [vmem:[%s2236 + $0x18] sm:$0xff]
    %v2241 = vpack.c.bf16 %v2117, %v2117
    %2242 = vmatprep.subr.bf16.mxu0 %v381
    %2243 = vmatpush1.bf16.msra.mxu0 %v380
    %2244 = vmatprep.subr.bf16.mxu0 %v385
    %2245 = vmatpush1.bf16.msra.mxu0 %v384
    %2246 = vmatprep.subr.bf16.mxu0 %v389
    %2247 = vmatpush1.bf16.msra.mxu0 %v388
    %2248 = vmatprep.subr.bf16.mxu0 %v393
    %2249 = vmatpush1.bf16.msra.mxu0 %v392
    %2250 = vmatprep.subr.bf16.mxu0 %v397
    %2251 = vmatpush1.bf16.msra.mxu0 %v396
    %2252 = vmatprep.subr.bf16.mxu0 %v401
    %2253 = vmatpush1.bf16.msra.mxu0 %v400
    %2254 = vmatprep.subr.bf16.mxu0 %v405
    %2255 = vmatpush1.bf16.msra.mxu0 %v404
    %2256 = vmatprep.subr.bf16.mxu0 %v409
    %2257 = vmatpush1.bf16.msra.mxu0 %v408
    %2258 = vmatprep.subr.bf16.mxu0 0
    %2259 = vmatpush1.bf16.msra.mxu0 0
    %2260 = vmatprep.subr.bf16.mxu0 0
    %2261 = vmatpush1.bf16.msra.mxu0 0
    %2262 = vmatprep.subr.bf16.mxu0 0
    %2263 = vmatpush1.bf16.msra.mxu0 0
    %2264 = vmatprep.subr.bf16.mxu0 0
    %2265 = vmatpush1.bf16.msra.mxu0 0
    %2266 = vmatprep.subr.bf16.mxu0 0
    %2267 = vmatpush1.bf16.msra.mxu0 0
    %2268 = vmatprep.subr.bf16.mxu0 0
    %2269 = vmatpush1.bf16.msra.mxu0 0
    %2270 = vmatprep.subr.bf16.mxu0 0
    %2271 = vmatpush1.bf16.msra.mxu0 0
    %2272 = vmatprep.subr.bf16.mxu0 0
    %2273 = vmatpush1.bf16.msra.mxu0 0
    %2274 = vmatprep.mubr.bf16.mxu0 0
    %2275 = vmatmul.mubr.bf16.gmra.mrb[0].mxu0 %v2241
    %v2276 = vpop.f32.mrb[0].mxu0
    %v2277 = vadd.f32 0.0, %v2276
    %v2278 = vpop.f32.mrb[0].mxu0
    %v2279 = vadd.f32 0.0, %v2278
    %v2280 = vpop.f32.mrb[0].mxu0
    %v2281 = vpop.f32.mrb[0].mxu0
    %2282 = vdwg.mxu0
    %2283 = vmatprep.subr.bf16.mxu0 %v383
    %2284 = vmatpush1.bf16.msra.mxu0 %v382
    %2285 = vmatprep.subr.bf16.mxu0 %v387
    %2286 = vmatpush1.bf16.msra.mxu0 %v386
    %2287 = vmatprep.subr.bf16.mxu0 %v391
    %2288 = vmatpush1.bf16.msra.mxu0 %v390
    %2289 = vmatprep.subr.bf16.mxu0 %v395
    %2290 = vmatpush1.bf16.msra.mxu0 %v394
    %2291 = vmatprep.subr.bf16.mxu0 %v399
    %2292 = vmatpush1.bf16.msra.mxu0 %v398
    %2293 = vmatprep.subr.bf16.mxu0 %v403
    %2294 = vmatpush1.bf16.msra.mxu0 %v402
    %2295 = vmatprep.subr.bf16.mxu0 %v407
    %2296 = vmatpush1.bf16.msra.mxu0 %v406
    %2297 = vmatprep.subr.bf16.mxu0 %v411
    %2298 = vmatpush1.bf16.msra.mxu0 %v410
    %2299 = vmatprep.subr.bf16.mxu0 0
    %2300 = vmatpush1.bf16.msra.mxu0 0
    %2301 = vmatprep.subr.bf16.mxu0 0
    %2302 = vmatpush1.bf16.msra.mxu0 0
    %2303 = vmatprep.subr.bf16.mxu0 0
    %2304 = vmatpush1.bf16.msra.mxu0 0
    %2305 = vmatprep.subr.bf16.mxu0 0
    %2306 = vmatpush1.bf16.msra.mxu0 0
    %2307 = vmatprep.subr.bf16.mxu0 0
    %2308 = vmatpush1.bf16.msra.mxu0 0
    %2309 = vmatprep.subr.bf16.mxu0 0
    %2310 = vmatpush1.bf16.msra.mxu0 0
    %2311 = vmatprep.subr.bf16.mxu0 0
    %2312 = vmatpush1.bf16.msra.mxu0 0
    %2313 = vmatprep.subr.bf16.mxu0 0
    %2314 = vmatpush1.bf16.msra.mxu0 0
    %2315 = vmatprep.mubr.bf16.mxu0 0
    %2316 = vmatmul.mubr.bf16.gmra.mrb[0].mxu0 %v2241
    %v2317 = vpop.f32.mrb[0].mxu0
    %v2318 = vadd.f32 0.0, %v2317
    %v2319 = vpop.f32.mrb[0].mxu0
    %v2320 = vadd.f32 0.0, %v2319
    %v2321 = vpop.f32.mrb[0].mxu0
    %v2322 = vpop.f32.mrb[0].mxu0
    %2323 = vdwg.mxu0
    %v2324 = vadd.f32 %v2237, %v2277
    %v2325 = vadd.f32 %v2238, %v2279
    %v2326 = vadd.f32 %v2239, %v2318
    %v2327 = vadd.f32 %v2240, %v2320
    %v2328 = vxor.u32 %v2324, 2147483648
    %v2329 = vmul.f32 %v2328, 1.442695
    %v2330 = vpow.pop %v2329
    %v2331 = vadd.f32 %v2330, 1.0
    %v2332 = vrcp.pop %v2331
    %v2333 = vmul.f32 1.0, %v2332
    %v2334 = vxor.u32 %v2325, 2147483648
    %v2335 = vmul.f32 %v2334, 1.442695
    %v2336 = vpow.pop %v2335
    %v2337 = vadd.f32 %v2336, 1.0
    %v2338 = vrcp.pop %v2337
    %v2339 = vmul.f32 1.0, %v2338
    %v2340 = vtanh.pop %v2326
    %v2341 = vxor.u32 %v2327, 2147483648
    %v2342 = vmul.f32 %v2341, 1.442695
    %v2343 = vpow.pop %v2342
    %v2344 = vadd.f32 %v2343, 1.0
    %v2345 = vrcp.pop %v2344
    %v2346 = vmul.f32 1.0, %v2345
    %v2347 = vmul.f32 %v2339, %v2115
    %v2348 = vmul.f32 %v2333, %v2340
    %v2349 = vadd.f32 %v2347, %v2348
    %v2350 = vtanh.pop %v2349
    %v2351 = vmul.f32 %v2346, %v2350
    %v2352 = vld [vmem:[#allocation10] sm:$0xff]
    %v2353 = vld [vmem:[#allocation10 + $0x8] sm:$0xff]
    %v2354 = vld [vmem:[#allocation10 + $0x10] sm:$0xff]
    %v2355 = vld [vmem:[#allocation10 + $0x18] sm:$0xff]
    %v2356 = vpack.c.bf16 %v2233, %v2233
    %2357 = vmatprep.subr.bf16.mxu0 %v657
    %2358 = vmatpush1.bf16.msra.mxu0 %v656
    %2359 = vmatprep.subr.bf16.mxu0 %v661
    %2360 = vmatpush1.bf16.msra.mxu0 %v660
    %2361 = vmatprep.subr.bf16.mxu0 %v665
    %2362 = vmatpush1.bf16.msra.mxu0 %v664
    %2363 = vmatprep.subr.bf16.mxu0 %v669
    %2364 = vmatpush1.bf16.msra.mxu0 %v668
    %2365 = vmatprep.subr.bf16.mxu0 %v673
    %2366 = vmatpush1.bf16.msra.mxu0 %v672
    %2367 = vmatprep.subr.bf16.mxu0 %v677
    %2368 = vmatpush1.bf16.msra.mxu0 %v676
    %2369 = vmatprep.subr.bf16.mxu0 %v681
    %2370 = vmatpush1.bf16.msra.mxu0 %v680
    %2371 = vmatprep.subr.bf16.mxu0 %v685
    %2372 = vmatpush1.bf16.msra.mxu0 %v684
    %2373 = vmatprep.subr.bf16.mxu0 0
    %2374 = vmatpush1.bf16.msra.mxu0 0
    %2375 = vmatprep.subr.bf16.mxu0 0
    %2376 = vmatpush1.bf16.msra.mxu0 0
    %2377 = vmatprep.subr.bf16.mxu0 0
    %2378 = vmatpush1.bf16.msra.mxu0 0
    %2379 = vmatprep.subr.bf16.mxu0 0
    %2380 = vmatpush1.bf16.msra.mxu0 0
    %2381 = vmatprep.subr.bf16.mxu0 0
    %2382 = vmatpush1.bf16.msra.mxu0 0
    %2383 = vmatprep.subr.bf16.mxu0 0
    %2384 = vmatpush1.bf16.msra.mxu0 0
    %2385 = vmatprep.subr.bf16.mxu0 0
    %2386 = vmatpush1.bf16.msra.mxu0 0
    %2387 = vmatprep.subr.bf16.mxu0 0
    %2388 = vmatpush1.bf16.msra.mxu0 0
    %2389 = vmatprep.mubr.bf16.mxu0 0
    %2390 = vmatmul.mubr.bf16.gmra.mrb[0].mxu0 %v2356
    %v2391 = vpop.f32.mrb[0].mxu0
    %v2392 = vadd.f32 0.0, %v2391
    %v2393 = vpop.f32.mrb[0].mxu0
    %v2394 = vadd.f32 0.0, %v2393
    %v2395 = vpop.f32.mrb[0].mxu0
    %v2396 = vpop.f32.mrb[0].mxu0
    %2397 = vdwg.mxu0
    %2398 = vmatprep.subr.bf16.mxu0 %v659
    %2399 = vmatpush1.bf16.msra.mxu0 %v658
    %2400 = vmatprep.subr.bf16.mxu0 %v663
    %2401 = vmatpush1.bf16.msra.mxu0 %v662
    %2402 = vmatprep.subr.bf16.mxu0 %v667
    %2403 = vmatpush1.bf16.msra.mxu0 %v666
    %2404 = vmatprep.subr.bf16.mxu0 %v671
    %2405 = vmatpush1.bf16.msra.mxu0 %v670
    %2406 = vmatprep.subr.bf16.mxu0 %v675
    %2407 = vmatpush1.bf16.msra.mxu0 %v674
    %2408 = vmatprep.subr.bf16.mxu0 %v679
    %2409 = vmatpush1.bf16.msra.mxu0 %v678
    %2410 = vmatprep.subr.bf16.mxu0 %v683
    %2411 = vmatpush1.bf16.msra.mxu0 %v682
    %2412 = vmatprep.subr.bf16.mxu0 %v687
    %2413 = vmatpush1.bf16.msra.mxu0 %v686
    %2414 = vmatprep.subr.bf16.mxu0 0
    %2415 = vmatpush1.bf16.msra.mxu0 0
    %2416 = vmatprep.subr.bf16.mxu0 0
    %2417 = vmatpush1.bf16.msra.mxu0 0
    %2418 = vmatprep.subr.bf16.mxu0 0
    %2419 = vmatpush1.bf16.msra.mxu0 0
    %2420 = vmatprep.subr.bf16.mxu0 0
    %2421 = vmatpush1.bf16.msra.mxu0 0
    %2422 = vmatprep.subr.bf16.mxu0 0
    %2423 = vmatpush1.bf16.msra.mxu0 0
    %2424 = vmatprep.subr.bf16.mxu0 0
    %2425 = vmatpush1.bf16.msra.mxu0 0
    %2426 = vmatprep.subr.bf16.mxu0 0
    %2427 = vmatpush1.bf16.msra.mxu0 0
    %2428 = vmatprep.subr.bf16.mxu0 0
    %2429 = vmatpush1.bf16.msra.mxu0 0
    %2430 = vmatprep.mubr.bf16.mxu0 0
    %2431 = vmatmul.mubr.bf16.gmra.mrb[0].mxu0 %v2356
    %v2432 = vpop.f32.mrb[0].mxu0
    %v2433 = vadd.f32 0.0, %v2432
    %v2434 = vpop.f32.mrb[0].mxu0
    %v2435 = vadd.f32 0.0, %v2434
    %v2436 = vpop.f32.mrb[0].mxu0
    %v2437 = vpop.f32.mrb[0].mxu0
    %2438 = vdwg.mxu0
    %v2439 = vadd.f32 %v2352, %v2392
    %v2440 = vadd.f32 %v2353, %v2394
    %v2441 = vadd.f32 %v2354, %v2433
    %v2442 = vadd.f32 %v2355, %v2435
    %v2443 = vxor.u32 %v2439, 2147483648
    %v2444 = vmul.f32 %v2443, 1.442695
    %v2445 = vpow.pop %v2444
    %v2446 = vadd.f32 %v2445, 1.0
    %v2447 = vrcp.pop %v2446
    %v2448 = vmul.f32 1.0, %v2447
    %v2449 = vxor.u32 %v2440, 2147483648
    %v2450 = vmul.f32 %v2449, 1.442695
    %v2451 = vpow.pop %v2450
    %v2452 = vadd.f32 %v2451, 1.0
    %v2453 = vrcp.pop %v2452
    %v2454 = vmul.f32 1.0, %v2453
    %v2455 = vtanh.pop %v2441
    %v2456 = vxor.u32 %v2442, 2147483648
    %v2457 = vmul.f32 %v2456, 1.442695
    %v2458 = vpow.pop %v2457
    %v2459 = vadd.f32 %v2458, 1.0
    %v2460 = vrcp.pop %v2459
    %v2461 = vmul.f32 1.0, %v2460
    %v2462 = vmul.f32 %v2454, %v2231
    %v2463 = vmul.f32 %v2448, %v2455
    %v2464 = vadd.f32 %v2462, %v2463
    %v2465 = vtanh.pop %v2464
    %v2466 = vmul.f32 %v2461, %v2465
    %v2467 = vmax.f32 %v2234, %v2351
    %v2468 = vmax.f32 %v2235, %v2466
    %2469 = vst [vmem:[#allocation2] sm:$0xff] %v2351
    %2470 = vst [vmem:[#allocation3] sm:$0xff] %v2349
    %2471 = vst [vmem:[#allocation4] sm:$0xff] %v2466
    %2472 = vst [vmem:[#allocation5] sm:$0xff] %v2464
    %2473 = vst [vmem:[#allocation6] sm:$0xff] %v2467
    %2474 = vst [vmem:[#allocation7] sm:$0xff] %v2468
    // Predicated region
    $region80: #{lstm_forward.3} parent=1 // pred_check
      %p2475 = pneg %p199
    $region81: #{lstm_forward.3} parent=1 // pred_check_branch
      %2477 = sbr.rel (%p2475) target = $region83
    $region82: #{lstm_forward.3} parent=1 // pred_region
      %v2478 = vld [vmem:[%s4] sm:$0x1]
      %v2480 = vlaneseq
      %v2481 = vshrl.u32 %v2480, 7
      %v2482 = vsub.s32 0, %v2481
      %v2483 = vrot.slane %v2478, %v2482
      %v2485 = vmul.f32 %v2467, %v2483
      %2486 = vadd.xlane.f32.xlu0 %v2485
      %v2487 = vpop.xlane.xlu0 %2486
      %v2488 = vld [vmem:[%s5] sm:$0x1]
      %v2490 = vlaneseq
      %v2491 = vshrl.u32 %v2490, 7
      %v2492 = vsub.s32 0, %v2491
      %v2493 = vrot.slane %v2488, %v2492
      %v2495 = vmul.f32 %v2468, %v2493
      %2496 = vadd.xlane.f32.xlu0 %v2495
      %v2497 = vpop.xlane.xlu0 %2496
      %v2498 = vadd.f32 %v2487, %v2497
      %v2499 = vld [vmem:[#allocation8] sm:$0x1]
      %v2501 = vlaneseq
      %v2502 = vshrl.u32 %v2501, 7
      %v2503 = vsub.s32 0, %v2502
      %v2504 = vrot.slane %v2499, %v2503
      %v2506 = vadd.f32 %v2498, %v2504
      %vm2507 = vcmask 7168
      %2508 = vst.msk [vmem:[%s7] sm:$0xff] %vm2507, %v2506
    $region83: #{lstm_forward.3} parent=1 // pred_fallthru
      _
    // Predicated region
    $region84: #{lstm_forward.3} parent=1 // pred_check
      _
    $region85: #{lstm_forward.3} parent=1 // pred_check_branch
      %2510 = sbr.rel (0) target = $region87
    $region86: #{lstm_forward.3} parent=1 // pred_region
      _
    $region87: #{lstm_forward.3} parent=1 // pred_fallthru
      _
    // Predicated region
    $region88: #{lstm_forward.3} parent=1 // pred_check
      _
    $region89: #{lstm_forward.3} parent=1 // pred_check_branch
      %2512 = sbr.rel (0) target = $region91
    $region90: #{lstm_forward.3} parent=1 // pred_region
      _
    $region91: #{lstm_forward.3} parent=1 // pred_fallthru
      _

</llo_original>
